<compile_context>
chip_gen: v7x
topology: tpu7x:2x2x1
jax: 0.10.0
libtpu: 0.0.40
codegen_flags: <defaults>
</compile_context>

<pallas_src>
import functools

import jax
import jax.numpy as jnp
from jax import lax
from jax.experimental import pallas as pl
from jax.experimental.pallas import tpu as pltpu


def _lrc_kernel(x_ref, wq_ref, bq_ref, wk_ref, bk_ref, out_ref, k_scr, *,
                d_k, gh, tq):
    # x_ref  : (N, in_dim) bf16        full X (constant block index -> DMA'd once)
    # wq_ref : (1, in_dim, gh*d_k) bf16  Q weights for this head group (pre-scaled)
    # bq_ref : (1, 1, gh*d_k) f32       Q bias (pre-scaled by 1/sqrt(d_k))
    # wk_ref : (1, in_dim, gh*d_k) bf16  K weights for this head group
    # bk_ref : (1, 1, gh*d_k) f32       K bias
    # out_ref: (gh, tq, N)              attention rows [t*tq, (t+1)*tq) of the group
    # k_scr  : (gh, N, d_k) bf16        K for the whole group (set at t == 0)
    t = pl.program_id(1)

    # Project K once per head group.  The q-tile axis is the innermost,
    # sequentially-executed ("arbitrary") grid axis, so t == 0 runs first for
    # every head group (per core under megacore) and k_scr persists across the
    # remaining q-tiles of that group.  Do NOT reorder the grid or mark the
    # q-tile axis "parallel".
    @pl.when(t == 0)
    def _project_k():
        x = x_ref[...]                                            # (N, in_dim) bf16
        kp = jnp.dot(x, wk_ref[0], preferred_element_type=jnp.float32)
        kp = kp + bk_ref[0]                                       # (N, gh*d_k) f32
        for h in range(gh):                                       # static unroll (once per group)
            k_scr[h] = kp[:, h * d_k:(h + 1) * d_k].astype(jnp.bfloat16)

    # Q projection for this q-tile only (no persistent Q scratch): one fused,
    # lane-dense bf16 matmul for all gh heads of the group.
    row0 = pl.multiple_of(t * tq, tq)
    x_t = x_ref[pl.ds(row0, tq), :]                               # (tq, in_dim) bf16
    qp = jnp.dot(x_t, wq_ref[0], preferred_element_type=jnp.float32)
    qp = (qp + bq_ref[0]).astype(jnp.bfloat16)                    # scale folded into Wq/bq

    for h in range(gh):                                           # static unroll over heads
        q_h = qp[:, h * d_k:(h + 1) * d_k]                        # (tq, d_k) bf16
        # QK^T as a contraction over K's dim 1 -> no explicit transpose.
        s = lax.dot_general(
            q_h, k_scr[h],
            dimension_numbers=(((1,), (1,)), ((), ())),
            preferred_element_type=jnp.float32)                   # (tq, N) f32
        # Numerically-stable softmax (exact: softmax is per-row, so row tiling
        # needs no flash-style rescaling).  Exact reciprocal -> rows sum to 1.
        m = jnp.max(s, axis=-1, keepdims=True)
        e = jnp.exp(s - m)
        denom = jnp.sum(e, axis=-1, keepdims=True)
        out_ref[h] = (e * pl.reciprocal(denom, approx=False)).astype(out_ref.dtype)


def _vmem_capacity_bytes():
    """Physical VMEM per core (128 MiB v5e/v6e, 64 MiB v7x); conservative fallback."""
    try:
        info = pltpu.get_tpu_info()
        cap = getattr(info, "vmem_capacity_bytes", None)
        if cap:
            return int(cap)
    except Exception:
        pass
    return 64 * 1024 * 1024


def _vmem_bytes_estimate(N, in_dim, d_k, gh, tq, out_bytes):
    bf = 2  # bf16
    out_blk = 2 * gh * tq * N * out_bytes            # double-buffered output block
    x_blk = 2 * N * in_dim * bf                      # X block (constant index, still 2 bufs)
    w_blk = 2 * 2 * in_dim * gh * d_k * bf           # Wq + Wk group slabs, double-buffered
    b_blk = 2 * 2 * gh * d_k * 4                     # biases (f32)
    k_scr = gh * N * d_k * bf                        # persistent K scratch (bf16)
    tmp = 3 * tq * N * 4 + 2 * tq * gh * d_k * 4     # scores/exp + projection temporaries
    return out_blk + x_blk + w_blk + b_blk + k_scr + tmp


def _choose_tiles(N, in_dim, d_k, H, out_bytes, budget):
    """Pick (gh, tq): tq prefers big MXU-aligned tiles (512/256/128), gh prefers
    divisors of H with even G = H/gh (balances v7x's 2-core 'parallel' axis)."""
    divs = [d for d in range(H, 0, -1) if H % d == 0]
    gh_pref = ([d for d in divs if (H // d) % 2 == 0] +
               [d for d in divs if (H // d) % 2 != 0])
    tq_cands = [t for t in (512, 256, 128) if t < N and N % t == 0]
    if N <= 512:
        tq_cands = [N] + tq_cands
    if not tq_cands:
        tq_cands = [t for t in range(min(N, 512), 7, -8) if N % t == 0] or [N]
    for tq in tq_cands:
        for gh in gh_pref:
            if _vmem_bytes_estimate(N, in_dim, d_k, gh, tq, out_bytes) <= budget:
                return gh, tq
    return 1, tq_cands[-1]


def latent_relation_capturer(X, Wq, bq, Wk, bk, d_k, *, gh=None, tq=None,
                             out_dtype=jnp.float32):
    """X: [N, in_dim]; Wq/Wk: [H, in_dim, d_k]; bq/bk: [H, 1, d_k].
    Returns the stacked [H, N, N] attention tensor (dtype = out_dtype)."""
    N, in_dim = X.shape
    H = Wq.shape[0]
    out_bytes = jnp.dtype(out_dtype).itemsize

    cap = _vmem_capacity_bytes()
    budget = int(cap * 0.75)                          # ~48 MiB on v7x, ~96 MiB on v5e/v6e

    if gh is None or tq is None:
        auto_gh, auto_tq = _choose_tiles(N, in_dim, d_k, H, out_bytes, budget)
        gh = auto_gh if gh is None else gh
        tq = auto_tq if tq is None else tq
    assert H % gh == 0, "gh must divide num_heads"
    assert N % tq == 0 and (tq == N or tq % 8 == 0), "bad query tile size"
    G = H // gh

    # Fold 1/sqrt(d_k) into the Q projection (free), group gh heads into one
    # lane-dense weight slab per projection, and cast weights/X to bf16 for the MXU.
    inv_sqrt_dk = float(d_k) ** -0.5
    Wq_s = Wq.astype(jnp.float32) * inv_sqrt_dk
    bq_s = bq.astype(jnp.float32) * inv_sqrt_dk

    def group_w(W):  # [H, in_dim, d_k] -> [G, in_dim, gh*d_k]
        return (W.reshape(G, gh, in_dim, d_k)
                 .transpose(0, 2, 1, 3)
                 .reshape(G, in_dim, gh * d_k))

    def group_b(b):  # [H, 1, d_k] -> [G, 1, gh*d_k]
        return (b.reshape(G, gh, 1, d_k)
                 .transpose(0, 2, 1, 3)
                 .reshape(G, 1, gh * d_k))

    Wq_g = group_w(Wq_s).astype(jnp.bfloat16)
    Wk_g = group_w(Wk.astype(jnp.float32)).astype(jnp.bfloat16)
    bq_g = group_b(bq_s)                               # f32
    bk_g = group_b(bk.astype(jnp.float32))             # f32
    X_b = X.astype(jnp.bfloat16)

    # VMEM limit tied to the real buffer accounting, clamped to physical capacity.
    est = _vmem_bytes_estimate(N, in_dim, d_k, gh, tq, out_bytes)
    vmem_limit = int(min(cap, max(est + est // 4 + (8 << 20), 32 << 20)))

    kernel = functools.partial(_lrc_kernel, d_k=d_k, gh=gh, tq=tq)

    out = pl.pallas_call(
        kernel,
        out_shape=jax.ShapeDtypeStruct((H, N, N), out_dtype),
        grid_spec=pltpu.PrefetchScalarGridSpec(
            num_scalar_prefetch=0,
            grid=(G, N // tq),
            in_specs=[
                # X: constant block index -> DMA'd once, reused every step.
                pl.BlockSpec((N, in_dim), lambda g, t: (0, 0)),
                pl.BlockSpec((1, in_dim, gh * d_k), lambda g, t: (g, 0, 0)),
                pl.BlockSpec((1, 1, gh * d_k), lambda g, t: (g, 0, 0)),
                pl.BlockSpec((1, in_dim, gh * d_k), lambda g, t: (g, 0, 0)),
                pl.BlockSpec((1, 1, gh * d_k), lambda g, t: (g, 0, 0)),
            ],
            out_specs=pl.BlockSpec((gh, tq, N), lambda g, t: (g, t, 0)),
            scratch_shapes=[
                pltpu.VMEM((gh, N, d_k), jnp.bfloat16),   # persistent K (per group)
            ],
        ),
        compiler_params=pltpu.CompilerParams(
            # head-group axis parallel (megacore split on v7x); q-tile axis must
            # stay "arbitrary" because the K scratch persists across it.
            dimension_semantics=("parallel", "arbitrary"),
            vmem_limit_bytes=vmem_limit,
        ),
    )(X_b, Wq_g, bq_g, Wk_g, bk_g)

    return out


def _reference(X, Wq, bq, Wk, bk, d_k):
    outs = []
    for h in range(Wq.shape[0]):
        q = X @ Wq[h] + bq[h]
        k = X @ Wk[h] + bk[h]
        s = (q @ k.T) / (float(d_k) ** 0.5)
        outs.append(jax.nn.softmax(s, axis=-1))
    return outs


if __name__ == "__main__":
    # Module defaults d_k=64, num_heads=12; small seq / hidden.
    N, in_dim, d_k, num_heads = 256, 32, 64, 12

    key = jax.random.PRNGKey(0)
    kx, kwq, kbq, kwk, kbk = jax.random.split(key, 5)

    X = jax.random.normal(kx, (N, in_dim), dtype=jnp.float32)
    # Deterministic synthetic parameters (analogue of nn.Linear weights/biases).
    scale = 1.0 / (in_dim ** 0.5)
    Wq = jax.random.uniform(kwq, (num_heads, in_dim, d_k), jnp.float32, -scale, scale)
    bq = jax.random.uniform(kbq, (num_heads, 1, d_k), jnp.float32, -scale, scale)
    Wk = jax.random.uniform(kwk, (num_heads, in_dim, d_k), jnp.float32, -scale, scale)
    bk = jax.random.uniform(kbk, (num_heads, 1, d_k), jnp.float32, -scale, scale)

    # gh=6 -> G=2 head groups (even: balances v7x's 2-core parallel axis);
    # tq=128 query rows (MXU-aligned) -> grid (2, 2): exercises both the
    # parallel head-group axis and the sequential q-tile axis (K scratch
    # persistence across t > 0).
    A = latent_relation_capturer(X, Wq, bq, Wk, bk, d_k, gh=6, tq=128)
    A = jax.block_until_ready(A)

    # Sanity check against pure-JAX f32 reference.  Tolerance accounts for bf16
    # MXU inputs (f32 accumulation); softmax itself is exact f32.
    ref_list = _reference(X, Wq, bq, Wk, bk, d_k)
    assert A.shape == (num_heads, N, N)
    for h in range(num_heads):
        assert jnp.allclose(A[h], ref_list[h], atol=2e-3, rtol=2e-2), f"head {h} mismatch"
        assert jnp.allclose(jnp.sum(A[h], axis=-1), jnp.ones((N,)), atol=1e-3)

    print("KERNEL_OK")
</pallas_src>

<mosaic_0001>
module attributes {stable_mosaic.version = 11 : i64} {
  func.func @_lrc_kernel(%arg0: i32, %arg1: i32, %arg2: memref<256x32xbf16, #tpu.memory_space<vmem>>, %arg3: memref<1x32x384xbf16, #tpu.memory_space<vmem>>, %arg4: memref<1x1x384xf32, #tpu.memory_space<vmem>>, %arg5: memref<1x32x384xbf16, #tpu.memory_space<vmem>>, %arg6: memref<1x1x384xf32, #tpu.memory_space<vmem>>, %arg7: memref<6x128x256xf32, #tpu.memory_space<vmem>>, %arg8: memref<6x256x64xbf16, #tpu.memory_space<vmem>>) attributes {dimension_semantics = [#tpu.dimension_semantics<parallel>, #tpu.dimension_semantics<arbitrary>], iteration_bounds = array<i64: 2, 2>, scalar_prefetch = 0 : i64, scratch_operands = 1 : i64, tpu.core_type = #tpu.core_type<tc>, window_params = [{pipeline_mode = #tpu.pipeline_mode<synchronous>, transform_indices = @transform_0, window_bounds = array<i64: 256, 32>}, {transform_indices = @transform_1, window_bounds = array<i64: 1, 32, 384>}, {transform_indices = @transform_2, window_bounds = array<i64: 1, 1, 384>}, {transform_indices = @transform_3, window_bounds = array<i64: 1, 32, 384>}, {transform_indices = @transform_4, window_bounds = array<i64: 1, 1, 384>}, {transform_indices = @transform_5, window_bounds = array<i64: 6, 128, 256>}]} {
    %c0_i32 = arith.constant 0 : i32
    %0 = arith.cmpi eq, %arg1, %c0_i32 : i32
    %1 = arith.extui %0 : i1 to i32
    %c0_i32_0 = arith.constant 0 : i32
    %2 = arith.cmpi ne, %1, %c0_i32_0 : i32
    scf.if %2 {
      %c0_56 = arith.constant 0 : index
      %c0_57 = arith.constant 0 : index
      %117 = vector.load %arg2[%c0_56, %c0_57] : memref<256x32xbf16, #tpu.memory_space<vmem>>, vector<256x32xbf16>
      %c0_58 = arith.constant 0 : index
      %c0_59 = arith.constant 0 : index
      %c0_60 = arith.constant 0 : index
      %118 = vector.load %arg5[%c0_58, %c0_59, %c0_60] : memref<1x32x384xbf16, #tpu.memory_space<vmem>>, vector<1x32x384xbf16>
      %119 = vector.shape_cast %118 : vector<1x32x384xbf16> to vector<32x384xbf16>
      %cst_61 = arith.constant dense<0.000000e+00> : vector<256x384xf32>
      %120 = tpu.matmul %117, %119, %cst_61 {dimension_numbers = #tpu.dot_dimension_numbers<[1], [0], [0], [1], [0, 0, 1, 1], [], []>} : vector<256x32xbf16>, vector<32x384xbf16>, vector<256x384xf32> -> vector<256x384xf32>
      %c0_62 = arith.constant 0 : index
      %c0_63 = arith.constant 0 : index
      %c0_64 = arith.constant 0 : index
      %121 = vector.load %arg6[%c0_62, %c0_63, %c0_64] : memref<1x1x384xf32, #tpu.memory_space<vmem>>, vector<1x1x384xf32>
      %122 = vector.shape_cast %121 : vector<1x1x384xf32> to vector<1x384xf32>
      %123 = vector.broadcast %122 : vector<1x384xf32> to vector<256x384xf32>
      %124 = arith.addf %120, %123 : vector<256x384xf32>
      %125 = vector.extract_strided_slice %124 {offsets = [0, 0], sizes = [256, 64], strides = [1, 1]} : vector<256x384xf32> to vector<256x64xf32>
      %126 = arith.truncf %125 : vector<256x64xf32> to vector<256x64xbf16>
      %c0_65 = arith.constant 0 : index
      %c0_66 = arith.constant 0 : index
      %c0_67 = arith.constant 0 : index
      %127 = vector.load %arg8[%c0_65, %c0_66, %c0_67] : memref<6x256x64xbf16, #tpu.memory_space<vmem>>, vector<1x256x64xbf16>
      %128 = vector.shape_cast %127 : vector<1x256x64xbf16> to vector<256x64xbf16>
      %129 = vector.shape_cast %126 : vector<256x64xbf16> to vector<1x256x64xbf16>
      tpu.vector_store %arg8[%c0_65, %c0_66, %c0_67], %129 {strides = array<i32>} : memref<6x256x64xbf16, #tpu.memory_space<vmem>>, vector<1x256x64xbf16>,
      %130 = vector.extract_strided_slice %124 {offsets = [0, 64], sizes = [256, 64], strides = [1, 1]} : vector<256x384xf32> to vector<256x64xf32>
      %131 = arith.truncf %130 : vector<256x64xf32> to vector<256x64xbf16>
      %c1_68 = arith.constant 1 : index
      %c0_69 = arith.constant 0 : index
      %c0_70 = arith.constant 0 : index
      %132 = vector.load %arg8[%c1_68, %c0_69, %c0_70] : memref<6x256x64xbf16, #tpu.memory_space<vmem>>, vector<1x256x64xbf16>
      %133 = vector.shape_cast %132 : vector<1x256x64xbf16> to vector<256x64xbf16>
      %134 = vector.shape_cast %131 : vector<256x64xbf16> to vector<1x256x64xbf16>
      tpu.vector_store %arg8[%c1_68, %c0_69, %c0_70], %134 {strides = array<i32>} : memref<6x256x64xbf16, #tpu.memory_space<vmem>>, vector<1x256x64xbf16>,
      %135 = vector.extract_strided_slice %124 {offsets = [0, 128], sizes = [256, 64], strides = [1, 1]} : vector<256x384xf32> to vector<256x64xf32>
      %136 = arith.truncf %135 : vector<256x64xf32> to vector<256x64xbf16>
      %c2_71 = arith.constant 2 : index
      %c0_72 = arith.constant 0 : index
      %c0_73 = arith.constant 0 : index
      %137 = vector.load %arg8[%c2_71, %c0_72, %c0_73] : memref<6x256x64xbf16, #tpu.memory_space<vmem>>, vector<1x256x64xbf16>
      %138 = vector.shape_cast %137 : vector<1x256x64xbf16> to vector<256x64xbf16>
      %139 = vector.shape_cast %136 : vector<256x64xbf16> to vector<1x256x64xbf16>
      tpu.vector_store %arg8[%c2_71, %c0_72, %c0_73], %139 {strides = array<i32>} : memref<6x256x64xbf16, #tpu.memory_space<vmem>>, vector<1x256x64xbf16>,
      %140 = vector.extract_strided_slice %124 {offsets = [0, 192], sizes = [256, 64], strides = [1, 1]} : vector<256x384xf32> to vector<256x64xf32>
      %141 = arith.truncf %140 : vector<256x64xf32> to vector<256x64xbf16>
      %c3_74 = arith.constant 3 : index
      %c0_75 = arith.constant 0 : index
      %c0_76 = arith.constant 0 : index
      %142 = vector.load %arg8[%c3_74, %c0_75, %c0_76] : memref<6x256x64xbf16, #tpu.memory_space<vmem>>, vector<1x256x64xbf16>
      %143 = vector.shape_cast %142 : vector<1x256x64xbf16> to vector<256x64xbf16>
      %144 = vector.shape_cast %141 : vector<256x64xbf16> to vector<1x256x64xbf16>
      tpu.vector_store %arg8[%c3_74, %c0_75, %c0_76], %144 {strides = array<i32>} : memref<6x256x64xbf16, #tpu.memory_space<vmem>>, vector<1x256x64xbf16>,
      %145 = vector.extract_strided_slice %124 {offsets = [0, 256], sizes = [256, 64], strides = [1, 1]} : vector<256x384xf32> to vector<256x64xf32>
      %146 = arith.truncf %145 : vector<256x64xf32> to vector<256x64xbf16>
      %c4_77 = arith.constant 4 : index
      %c0_78 = arith.constant 0 : index
      %c0_79 = arith.constant 0 : index
      %147 = vector.load %arg8[%c4_77, %c0_78, %c0_79] : memref<6x256x64xbf16, #tpu.memory_space<vmem>>, vector<1x256x64xbf16>
      %148 = vector.shape_cast %147 : vector<1x256x64xbf16> to vector<256x64xbf16>
      %149 = vector.shape_cast %146 : vector<256x64xbf16> to vector<1x256x64xbf16>
      tpu.vector_store %arg8[%c4_77, %c0_78, %c0_79], %149 {strides = array<i32>} : memref<6x256x64xbf16, #tpu.memory_space<vmem>>, vector<1x256x64xbf16>,
      %150 = vector.extract_strided_slice %124 {offsets = [0, 320], sizes = [256, 64], strides = [1, 1]} : vector<256x384xf32> to vector<256x64xf32>
      %151 = arith.truncf %150 : vector<256x64xf32> to vector<256x64xbf16>
      %c5_80 = arith.constant 5 : index
      %c0_81 = arith.constant 0 : index
      %c0_82 = arith.constant 0 : index
      %152 = vector.load %arg8[%c5_80, %c0_81, %c0_82] : memref<6x256x64xbf16, #tpu.memory_space<vmem>>, vector<1x256x64xbf16>
      %153 = vector.shape_cast %152 : vector<1x256x64xbf16> to vector<256x64xbf16>
      %154 = vector.shape_cast %151 : vector<256x64xbf16> to vector<1x256x64xbf16>
      tpu.vector_store %arg8[%c5_80, %c0_81, %c0_82], %154 {strides = array<i32>} : memref<6x256x64xbf16, #tpu.memory_space<vmem>>, vector<1x256x64xbf16>,
    } else {
    }
    %c128_i32 = arith.constant 128 : i32
    %3 = arith.muli %arg1, %c128_i32 : i32
    %4 = tpu.assume_multiple %3, 128 : i32
    %5 = arith.index_cast %4 : i32 to index
    %c0 = arith.constant 0 : index
    %6 = vector.load %arg2[%5, %c0] : memref<256x32xbf16, #tpu.memory_space<vmem>>, vector<128x32xbf16>
    %c0_1 = arith.constant 0 : index
    %c0_2 = arith.constant 0 : index
    %c0_3 = arith.constant 0 : index
    %7 = vector.load %arg3[%c0_1, %c0_2, %c0_3] : memref<1x32x384xbf16, #tpu.memory_space<vmem>>, vector<1x32x384xbf16>
    %8 = vector.shape_cast %7 : vector<1x32x384xbf16> to vector<32x384xbf16>
    %cst = arith.constant dense<0.000000e+00> : vector<128x384xf32>
    %9 = tpu.matmul %6, %8, %cst {dimension_numbers = #tpu.dot_dimension_numbers<[1], [0], [0], [1], [0, 0, 1, 1], [], []>} : vector<128x32xbf16>, vector<32x384xbf16>, vector<128x384xf32> -> vector<128x384xf32>
    %c0_4 = arith.constant 0 : index
    %c0_5 = arith.constant 0 : index
    %c0_6 = arith.constant 0 : index
    %10 = vector.load %arg4[%c0_4, %c0_5, %c0_6] : memref<1x1x384xf32, #tpu.memory_space<vmem>>, vector<1x1x384xf32>
    %11 = vector.shape_cast %10 : vector<1x1x384xf32> to vector<1x384xf32>
    %12 = vector.broadcast %11 : vector<1x384xf32> to vector<128x384xf32>
    %13 = arith.addf %9, %12 : vector<128x384xf32>
    %14 = arith.truncf %13 : vector<128x384xf32> to vector<128x384xbf16>
    %15 = vector.extract_strided_slice %14 {offsets = [0, 0], sizes = [128, 64], strides = [1, 1]} : vector<128x384xbf16> to vector<128x64xbf16>
    %c0_7 = arith.constant 0 : index
    %c0_8 = arith.constant 0 : index
    %c0_9 = arith.constant 0 : index
    %16 = vector.load %arg8[%c0_7, %c0_8, %c0_9] : memref<6x256x64xbf16, #tpu.memory_space<vmem>>, vector<1x256x64xbf16>
    %17 = vector.shape_cast %16 : vector<1x256x64xbf16> to vector<256x64xbf16>
    %cst_10 = arith.constant dense<0.000000e+00> : vector<128x256xf32>
    %18 = tpu.matmul %15, %17, %cst_10 {dimension_numbers = #tpu.dot_dimension_numbers<[1], [1], [0], [0], [0, 0, 1, 0], [], []>} : vector<128x64xbf16>, vector<256x64xbf16>, vector<128x256xf32> -> vector<128x256xf32>
    %cst_11 = arith.constant dense<0xFF800000> : vector<128xf32>
    %19 = vector.multi_reduction <maximumf>, %18, %cst_11 [1] : vector<128x256xf32> to vector<128xf32>
    %20 = vector.shape_cast %19 : vector<128xf32> to vector<128x1xf32>
    %21 = vector.broadcast %20 : vector<128x1xf32> to vector<128x256xf32>
    %22 = arith.subf %18, %21 : vector<128x256xf32>
    %23 = math.exp %22 : vector<128x256xf32>
    %cst_12 = arith.constant dense<0.000000e+00> : vector<128xf32>
    %24 = vector.multi_reduction <add>, %23, %cst_12 [1] : vector<128x256xf32> to vector<128xf32>
    %25 = vector.shape_cast %24 : vector<128xf32> to vector<128x1xf32>
    %26 = tpu.reciprocal %25 : vector<128x1xf32> -> vector<128x1xf32>
    %27 = vector.broadcast %26 : vector<128x1xf32> to vector<128x256xf32>
    %28 = arith.mulf %23, %27 : vector<128x256xf32>
    %c0_13 = arith.constant 0 : index
    %c0_14 = arith.constant 0 : index
    %c0_15 = arith.constant 0 : index
    %29 = vector.load %arg7[%c0_13, %c0_14, %c0_15] : memref<6x128x256xf32, #tpu.memory_space<vmem>>, vector<1x128x256xf32>
    %30 = vector.shape_cast %29 : vector<1x128x256xf32> to vector<128x256xf32>
    %31 = vector.shape_cast %28 : vector<128x256xf32> to vector<1x128x256xf32>
    tpu.vector_store %arg7[%c0_13, %c0_14, %c0_15], %31 {strides = array<i32>} : memref<6x128x256xf32, #tpu.memory_space<vmem>>, vector<1x128x256xf32>,
    %32 = vector.extract_strided_slice %14 {offsets = [0, 64], sizes = [128, 64], strides = [1, 1]} : vector<128x384xbf16> to vector<128x64xbf16>
    %c1 = arith.constant 1 : index
    %c0_16 = arith.constant 0 : index
    %c0_17 = arith.constant 0 : index
    %33 = vector.load %arg8[%c1, %c0_16, %c0_17] : memref<6x256x64xbf16, #tpu.memory_space<vmem>>, vector<1x256x64xbf16>
    %34 = vector.shape_cast %33 : vector<1x256x64xbf16> to vector<256x64xbf16>
    %cst_18 = arith.constant dense<0.000000e+00> : vector<128x256xf32>
    %35 = tpu.matmul %32, %34, %cst_18 {dimension_numbers = #tpu.dot_dimension_numbers<[1], [1], [0], [0], [0, 0, 1, 0], [], []>} : vector<128x64xbf16>, vector<256x64xbf16>, vector<128x256xf32> -> vector<128x256xf32>
    %cst_19 = arith.constant dense<0xFF800000> : vector<128xf32>
    %36 = vector.multi_reduction <maximumf>, %35, %cst_19 [1] : vector<128x256xf32> to vector<128xf32>
    %37 = vector.shape_cast %36 : vector<128xf32> to vector<128x1xf32>
    %38 = vector.broadcast %37 : vector<128x1xf32> to vector<128x256xf32>
    %39 = arith.subf %35, %38 : vector<128x256xf32>
    %40 = math.exp %39 : vector<128x256xf32>
    %cst_20 = arith.constant dense<0.000000e+00> : vector<128xf32>
    %41 = vector.multi_reduction <add>, %40, %cst_20 [1] : vector<128x256xf32> to vector<128xf32>
    %42 = vector.shape_cast %41 : vector<128xf32> to vector<128x1xf32>
    %43 = tpu.reciprocal %42 : vector<128x1xf32> -> vector<128x1xf32>
    %44 = vector.broadcast %43 : vector<128x1xf32> to vector<128x256xf32>
    %45 = arith.mulf %40, %44 : vector<128x256xf32>
    %c1_21 = arith.constant 1 : index
    %c0_22 = arith.constant 0 : index
    %c0_23 = arith.constant 0 : index
    %46 = vector.load %arg7[%c1_21, %c0_22, %c0_23] : memref<6x128x256xf32, #tpu.memory_space<vmem>>, vector<1x128x256xf32>
    %47 = vector.shape_cast %46 : vector<1x128x256xf32> to vector<128x256xf32>
    %48 = vector.shape_cast %45 : vector<128x256xf32> to vector<1x128x256xf32>
    tpu.vector_store %arg7[%c1_21, %c0_22, %c0_23], %48 {strides = array<i32>} : memref<6x128x256xf32, #tpu.memory_space<vmem>>, vector<1x128x256xf32>,
    %49 = vector.extract_strided_slice %14 {offsets = [0, 128], sizes = [128, 64], strides = [1, 1]} : vector<128x384xbf16> to vector<128x64xbf16>
    %c2 = arith.constant 2 : index
    %c0_24 = arith.constant 0 : index
    %c0_25 = arith.constant 0 : index
    %50 = vector.load %arg8[%c2, %c0_24, %c0_25] : memref<6x256x64xbf16, #tpu.memory_space<vmem>>, vector<1x256x64xbf16>
    %51 = vector.shape_cast %50 : vector<1x256x64xbf16> to vector<256x64xbf16>
    %cst_26 = arith.constant dense<0.000000e+00> : vector<128x256xf32>
    %52 = tpu.matmul %49, %51, %cst_26 {dimension_numbers = #tpu.dot_dimension_numbers<[1], [1], [0], [0], [0, 0, 1, 0], [], []>} : vector<128x64xbf16>, vector<256x64xbf16>, vector<128x256xf32> -> vector<128x256xf32>
    %cst_27 = arith.constant dense<0xFF800000> : vector<128xf32>
    %53 = vector.multi_reduction <maximumf>, %52, %cst_27 [1] : vector<128x256xf32> to vector<128xf32>
    %54 = vector.shape_cast %53 : vector<128xf32> to vector<128x1xf32>
    %55 = vector.broadcast %54 : vector<128x1xf32> to vector<128x256xf32>
    %56 = arith.subf %52, %55 : vector<128x256xf32>
    %57 = math.exp %56 : vector<128x256xf32>
    %cst_28 = arith.constant dense<0.000000e+00> : vector<128xf32>
    %58 = vector.multi_reduction <add>, %57, %cst_28 [1] : vector<128x256xf32> to vector<128xf32>
    %59 = vector.shape_cast %58 : vector<128xf32> to vector<128x1xf32>
    %60 = tpu.reciprocal %59 : vector<128x1xf32> -> vector<128x1xf32>
    %61 = vector.broadcast %60 : vector<128x1xf32> to vector<128x256xf32>
    %62 = arith.mulf %57, %61 : vector<128x256xf32>
    %c2_29 = arith.constant 2 : index
    %c0_30 = arith.constant 0 : index
    %c0_31 = arith.constant 0 : index
    %63 = vector.load %arg7[%c2_29, %c0_30, %c0_31] : memref<6x128x256xf32, #tpu.memory_space<vmem>>, vector<1x128x256xf32>
    %64 = vector.shape_cast %63 : vector<1x128x256xf32> to vector<128x256xf32>
    %65 = vector.shape_cast %62 : vector<128x256xf32> to vector<1x128x256xf32>
    tpu.vector_store %arg7[%c2_29, %c0_30, %c0_31], %65 {strides = array<i32>} : memref<6x128x256xf32, #tpu.memory_space<vmem>>, vector<1x128x256xf32>,
    %66 = vector.extract_strided_slice %14 {offsets = [0, 192], sizes = [128, 64], strides = [1, 1]} : vector<128x384xbf16> to vector<128x64xbf16>
    %c3 = arith.constant 3 : index
    %c0_32 = arith.constant 0 : index
    %c0_33 = arith.constant 0 : index
    %67 = vector.load %arg8[%c3, %c0_32, %c0_33] : memref<6x256x64xbf16, #tpu.memory_space<vmem>>, vector<1x256x64xbf16>
    %68 = vector.shape_cast %67 : vector<1x256x64xbf16> to vector<256x64xbf16>
    %cst_34 = arith.constant dense<0.000000e+00> : vector<128x256xf32>
    %69 = tpu.matmul %66, %68, %cst_34 {dimension_numbers = #tpu.dot_dimension_numbers<[1], [1], [0], [0], [0, 0, 1, 0], [], []>} : vector<128x64xbf16>, vector<256x64xbf16>, vector<128x256xf32> -> vector<128x256xf32>
    %cst_35 = arith.constant dense<0xFF800000> : vector<128xf32>
    %70 = vector.multi_reduction <maximumf>, %69, %cst_35 [1] : vector<128x256xf32> to vector<128xf32>
    %71 = vector.shape_cast %70 : vector<128xf32> to vector<128x1xf32>
    %72 = vector.broadcast %71 : vector<128x1xf32> to vector<128x256xf32>
    %73 = arith.subf %69, %72 : vector<128x256xf32>
    %74 = math.exp %73 : vector<128x256xf32>
    %cst_36 = arith.constant dense<0.000000e+00> : vector<128xf32>
    %75 = vector.multi_reduction <add>, %74, %cst_36 [1] : vector<128x256xf32> to vector<128xf32>
    %76 = vector.shape_cast %75 : vector<128xf32> to vector<128x1xf32>
    %77 = tpu.reciprocal %76 : vector<128x1xf32> -> vector<128x1xf32>
    %78 = vector.broadcast %77 : vector<128x1xf32> to vector<128x256xf32>
    %79 = arith.mulf %74, %78 : vector<128x256xf32>
    %c3_37 = arith.constant 3 : index
    %c0_38 = arith.constant 0 : index
    %c0_39 = arith.constant 0 : index
    %80 = vector.load %arg7[%c3_37, %c0_38, %c0_39] : memref<6x128x256xf32, #tpu.memory_space<vmem>>, vector<1x128x256xf32>
    %81 = vector.shape_cast %80 : vector<1x128x256xf32> to vector<128x256xf32>
    %82 = vector.shape_cast %79 : vector<128x256xf32> to vector<1x128x256xf32>
    tpu.vector_store %arg7[%c3_37, %c0_38, %c0_39], %82 {strides = array<i32>} : memref<6x128x256xf32, #tpu.memory_space<vmem>>, vector<1x128x256xf32>,
    %83 = vector.extract_strided_slice %14 {offsets = [0, 256], sizes = [128, 64], strides = [1, 1]} : vector<128x384xbf16> to vector<128x64xbf16>
    %c4 = arith.constant 4 : index
    %c0_40 = arith.constant 0 : index
    %c0_41 = arith.constant 0 : index
    %84 = vector.load %arg8[%c4, %c0_40, %c0_41] : memref<6x256x64xbf16, #tpu.memory_space<vmem>>, vector<1x256x64xbf16>
    %85 = vector.shape_cast %84 : vector<1x256x64xbf16> to vector<256x64xbf16>
    %cst_42 = arith.constant dense<0.000000e+00> : vector<128x256xf32>
    %86 = tpu.matmul %83, %85, %cst_42 {dimension_numbers = #tpu.dot_dimension_numbers<[1], [1], [0], [0], [0, 0, 1, 0], [], []>} : vector<128x64xbf16>, vector<256x64xbf16>, vector<128x256xf32> -> vector<128x256xf32>
    %cst_43 = arith.constant dense<0xFF800000> : vector<128xf32>
    %87 = vector.multi_reduction <maximumf>, %86, %cst_43 [1] : vector<128x256xf32> to vector<128xf32>
    %88 = vector.shape_cast %87 : vector<128xf32> to vector<128x1xf32>
    %89 = vector.broadcast %88 : vector<128x1xf32> to vector<128x256xf32>
    %90 = arith.subf %86, %89 : vector<128x256xf32>
    %91 = math.exp %90 : vector<128x256xf32>
    %cst_44 = arith.constant dense<0.000000e+00> : vector<128xf32>
    %92 = vector.multi_reduction <add>, %91, %cst_44 [1] : vector<128x256xf32> to vector<128xf32>
    %93 = vector.shape_cast %92 : vector<128xf32> to vector<128x1xf32>
    %94 = tpu.reciprocal %93 : vector<128x1xf32> -> vector<128x1xf32>
    %95 = vector.broadcast %94 : vector<128x1xf32> to vector<128x256xf32>
    %96 = arith.mulf %91, %95 : vector<128x256xf32>
    %c4_45 = arith.constant 4 : index
    %c0_46 = arith.constant 0 : index
    %c0_47 = arith.constant 0 : index
    %97 = vector.load %arg7[%c4_45, %c0_46, %c0_47] : memref<6x128x256xf32, #tpu.memory_space<vmem>>, vector<1x128x256xf32>
    %98 = vector.shape_cast %97 : vector<1x128x256xf32> to vector<128x256xf32>
    %99 = vector.shape_cast %96 : vector<128x256xf32> to vector<1x128x256xf32>
    tpu.vector_store %arg7[%c4_45, %c0_46, %c0_47], %99 {strides = array<i32>} : memref<6x128x256xf32, #tpu.memory_space<vmem>>, vector<1x128x256xf32>,
    %100 = vector.extract_strided_slice %14 {offsets = [0, 320], sizes = [128, 64], strides = [1, 1]} : vector<128x384xbf16> to vector<128x64xbf16>
    %c5 = arith.constant 5 : index
    %c0_48 = arith.constant 0 : index
    %c0_49 = arith.constant 0 : index
    %101 = vector.load %arg8[%c5, %c0_48, %c0_49] : memref<6x256x64xbf16, #tpu.memory_space<vmem>>, vector<1x256x64xbf16>
    %102 = vector.shape_cast %101 : vector<1x256x64xbf16> to vector<256x64xbf16>
    %cst_50 = arith.constant dense<0.000000e+00> : vector<128x256xf32>
    %103 = tpu.matmul %100, %102, %cst_50 {dimension_numbers = #tpu.dot_dimension_numbers<[1], [1], [0], [0], [0, 0, 1, 0], [], []>} : vector<128x64xbf16>, vector<256x64xbf16>, vector<128x256xf32> -> vector<128x256xf32>
    %cst_51 = arith.constant dense<0xFF800000> : vector<128xf32>
    %104 = vector.multi_reduction <maximumf>, %103, %cst_51 [1] : vector<128x256xf32> to vector<128xf32>
    %105 = vector.shape_cast %104 : vector<128xf32> to vector<128x1xf32>
    %106 = vector.broadcast %105 : vector<128x1xf32> to vector<128x256xf32>
    %107 = arith.subf %103, %106 : vector<128x256xf32>
    %108 = math.exp %107 : vector<128x256xf32>
    %cst_52 = arith.constant dense<0.000000e+00> : vector<128xf32>
    %109 = vector.multi_reduction <add>, %108, %cst_52 [1] : vector<128x256xf32> to vector<128xf32>
    %110 = vector.shape_cast %109 : vector<128xf32> to vector<128x1xf32>
    %111 = tpu.reciprocal %110 : vector<128x1xf32> -> vector<128x1xf32>
    %112 = vector.broadcast %111 : vector<128x1xf32> to vector<128x256xf32>
    %113 = arith.mulf %108, %112 : vector<128x256xf32>
    %c5_53 = arith.constant 5 : index
    %c0_54 = arith.constant 0 : index
    %c0_55 = arith.constant 0 : index
    %114 = vector.load %arg7[%c5_53, %c0_54, %c0_55] : memref<6x128x256xf32, #tpu.memory_space<vmem>>, vector<1x128x256xf32>
    %115 = vector.shape_cast %114 : vector<1x128x256xf32> to vector<128x256xf32>
    %116 = vector.shape_cast %113 : vector<128x256xf32> to vector<1x128x256xf32>
    tpu.vector_store %arg7[%c5_53, %c0_54, %c0_55], %116 {strides = array<i32>} : memref<6x128x256xf32, #tpu.memory_space<vmem>>, vector<1x128x256xf32>,
    return
  }
  func.func @transform_0(%arg0: i32, %arg1: i32) -> (i32, i32) {
    %c0_i32 = arith.constant 0 : i32
    %c0_i32_0 = arith.constant 0 : i32
    %c0_i32_1 = arith.constant 0 : i32
    return %c0_i32, %c0_i32_0 : i32, i32
  }
  func.func @transform_1(%arg0: i32, %arg1: i32) -> (i32, i32, i32) {
    %c0_i32 = arith.constant 0 : i32
    %c0_i32_0 = arith.constant 0 : i32
    %c0_i32_1 = arith.constant 0 : i32
    return %arg0, %c0_i32, %c0_i32_0 : i32, i32, i32
  }
  func.func @transform_2(%arg0: i32, %arg1: i32) -> (i32, i32, i32) {
    %c0_i32 = arith.constant 0 : i32
    %c0_i32_0 = arith.constant 0 : i32
    %c0_i32_1 = arith.constant 0 : i32
    return %arg0, %c0_i32, %c0_i32_0 : i32, i32, i32
  }
  func.func @transform_3(%arg0: i32, %arg1: i32) -> (i32, i32, i32) {
    %c0_i32 = arith.constant 0 : i32
    %c0_i32_0 = arith.constant 0 : i32
    %c0_i32_1 = arith.constant 0 : i32
    return %arg0, %c0_i32, %c0_i32_0 : i32, i32, i32
  }
  func.func @transform_4(%arg0: i32, %arg1: i32) -> (i32, i32, i32) {
    %c0_i32 = arith.constant 0 : i32
    %c0_i32_0 = arith.constant 0 : i32
    %c0_i32_1 = arith.constant 0 : i32
    return %arg0, %c0_i32, %c0_i32_0 : i32, i32, i32
  }
  func.func @transform_5(%arg0: i32, %arg1: i32) -> (i32, i32, i32) {
    %c0_i32 = arith.constant 0 : i32
    %c0_i32_0 = arith.constant 0 : i32
    return %arg0, %arg1, %c0_i32 : i32, i32, i32
  }
}

</mosaic_0001>

<llo_original>
// kernel: tpu_custom_call.1
$region0: #{tpu_custom_call.1}
  #allocation0 [shape = 'u32[]', space=smem, size = 0x4, offset = 0x4, fixed_abs, tag = 'smem constant byte address 0x4 - core index']
  #allocation1 [shape = 'u32[144,128]{1,0:T(1,128)}', space=vmem, size = 0x12000, scoped, tag = 'internal scratch']
  #allocation2 [shape = 'bf16[6,256,64]{2,1,0:T(16,128)(2,1)}', space=vmem, size = 0x60000, scoped, tag = 'scratch operand']
  #allocation12 [shape = 's32[]', space=sflag, size = 0x4, offset = 0, fixed_abs, tag = 'sflag constant byte address 0x0 - dummy sync flag']
  %s0 = inlined_call_operand.vmem [shape: bf16[256,32], index: 0, kind: input, shape index: {}]
  %s1 = inlined_call_operand.hbm [shape: bf16[2,32,384], index: 1, kind: input, shape index: {}]
  %s2 = inlined_call_operand.hbm [shape: f32[2,1,384], index: 2, kind: input, shape index: {}]
  %s3 = inlined_call_operand.hbm [shape: bf16[2,32,384], index: 3, kind: input, shape index: {}]
  %s4 = inlined_call_operand.hbm [shape: f32[2,1,384], index: 4, kind: input, shape index: {}]
  %s5 = inlined_call_operand.hbm [shape: f32[12,256,256], index: 5, kind: output, shape index: {}]
  %s6 = sld [smem:[#allocation0]]
  $region73: #{tpu_custom_call.1} parent=0
    _
  %s8 = ssub.s32 1, %s6
  %s9 = scalar_select 0, %s8, %s6
  $region1: #{tpu_custom_call.1} parent=0
    #allocation3 [shape = 'u8[49152]{0}', space=vmem, size = 0xc000, scoped, tag = 'input window, operand 1']
    #allocation4 [shape = 's32[2]{0}', space=sflag, size = 0x8, scoped, tag = 'scoped memory for tpu_custom_call.1']
    #allocation5 [shape = 's32[2]{0}', space=sflag, size = 0x8, scoped, tag = 'scoped memory for tpu_custom_call.1']
    #allocation6 [shape = 'u8[3072]{0}', space=vmem, size = 0xc00, scoped, tag = 'input window, operand 2']
    #allocation7 [shape = 's32[2]{0}', space=sflag, size = 0x8, scoped, tag = 'scoped memory for tpu_custom_call.1']
    #allocation8 [shape = 'u8[49152]{0}', space=vmem, size = 0xc000, scoped, tag = 'input window, operand 3']
    #allocation9 [shape = 'u8[3072]{0}', space=vmem, size = 0xc00, scoped, tag = 'input window, operand 4']
    #allocation10 [shape = 's32[2]{0}', space=sflag, size = 0x8, scoped, tag = 'scoped memory for tpu_custom_call.1']
    #allocation11 [shape = 'u8[1572864]{0}', space=vmem, size = 0x180000, scoped, tag = 'output window, operand 0']
    %10 = vsyncpa [#allocation4], 0
    %s11 = scalar_lea.sflag [#allocation4], 1
    %12 = vsyncpa %s11, 0
    %13 = vsyncpa [#allocation7], 0
    %s14 = scalar_lea.sflag [#allocation7], 1
    %15 = vsyncpa %s14, 0
    %16 = vsyncpa [#allocation10], 0
    %s17 = scalar_lea.sflag [#allocation10], 1
    %18 = vsyncpa %s17, 0
    %19 = vsyncpa [#allocation5], 0
    %s20 = scalar_lea.sflag [#allocation5], 1
    %21 = vsyncpa %s20, 0
    loop: start=0, step=1, limit=6
    $region2: #{tpu_custom_call.1} parent=1 // loop_pre_header
      _
    $region3: #{tpu_custom_call.1} parent=1 // loop_header
      %s23 = sphi 0, %s27
      %p24 = scmp.ge.s32.totalorder %s23, 6
      %s30 = sphi 0, %s42
      %s31 = sphi 0, %s38
      %s32 = sphi 0, %s30
      %s33 = sphi 0, %s31
      %s34 = sphi 0, %s32
      %s35 = sphi 0, %s33
      %s43 = sphi 0, %s43
      %s45 = sphi 0, %s43
      %s46 = sphi 0, %s45
      %s60 = sphi 0, %s46
      %s66 = sphi 0, %s68
      %s69 = sphi 0, %s66
      %s70 = sphi 0, %s69
      %s86 = sphi 0, %s70
      %s92 = sphi 0, %s94
      %s95 = sphi 0, %s92
      %s96 = sphi 0, %s95
      %s112 = sphi 0, %s96
      %s118 = sphi 0, %s120
      %s121 = sphi 0, %s118
      %s122 = sphi 0, %s121
      %s138 = sphi 0, %s122
      %s144 = sphi 0, %s146
      %s147 = sphi 0, %s144
      %s148 = sphi 0, %s147
      %s164 = sphi 0, %s148
      %s172 = sphi 0, %s174
      %s175 = sphi 0, %s172
      %s176 = sphi 0, %s175
      %s192 = sphi 0, %s176
    $region4: #{tpu_custom_call.1} parent=1 // loop_header_branch
      %26 = sbr.rel (%p24) target = $region8
    $region5: #{tpu_custom_call.1} parent=1 // loop_body
      %s28 = ssub.s32 %s23, 1
      %s29 = ssub.s32 %s23, 2
      %s36 = sadd.s32 1, %s31
      %p37 = scmp.ge.s32.totalorder %s36, 2
      %s38 = scalar_select %p37, 0, %s36
      %s39 = sadd.s32 1, %s30
      %s40 = scalar_select %p37, %s39, %s30
      %p41 = scmp.ge.s32.totalorder %s40, 2
      %s42 = scalar_select %p41, 0, %s40
      %s44 = sadd.s32 %s43, 1
      %p47 = scmp.eq.s32.totalorder %s23, 3
      %p48 = scmp.ne.s32.totalorder %s43, %s45
      %p49 = scmp.eq.s32.totalorder %s23, 0
      %p50 = por %p48, %p49
      %p51 = scmp.ne.s32.totalorder %s43, %s45
      %p52 = scmp.eq.s32.totalorder %s28, 3
      %p53 = por %p51, %p52
      %p54 = scmp.ne.s32.totalorder %s45, %s46
      %p55 = scmp.eq.s32.totalorder %s28, 0
      %p56 = por %p54, %p55
      %p57 = scmp.ne.s32.totalorder %s45, %s46
      %p58 = scmp.eq.s32.totalorder %s29, 3
      %p59 = por %p57, %p58
      %p61 = scmp.ne.s32.totalorder %s46, %s60
      %p62 = scmp.eq.s32.totalorder %s29, 0
      %p63 = por %p61, %p62
      %s64 = ssub.s32 %s30, %s42
      %p65 = scmp.eq.s32.totalorder %s64, 0
      %s67 = sadd.s32 %s66, 1
      %s68 = scalar_select %p65, %s66, %s67
      %p71 = pneg %p65
      %p72 = scmp.eq.s32.totalorder %s23, 3
      %p73 = por %p71, %p72
      %p74 = scmp.ne.s32.totalorder %s66, %s69
      %p75 = scmp.eq.s32.totalorder %s23, 0
      %p76 = por %p74, %p75
      %p77 = scmp.ne.s32.totalorder %s66, %s69
      %p78 = scmp.eq.s32.totalorder %s28, 3
      %p79 = por %p77, %p78
      %p80 = scmp.ne.s32.totalorder %s69, %s70
      %p81 = scmp.eq.s32.totalorder %s28, 0
      %p82 = por %p80, %p81
      %p83 = scmp.ne.s32.totalorder %s69, %s70
      %p84 = scmp.eq.s32.totalorder %s29, 3
      %p85 = por %p83, %p84
      %p87 = scmp.ne.s32.totalorder %s70, %s86
      %p88 = scmp.eq.s32.totalorder %s29, 0
      %p89 = por %p87, %p88
      %s90 = ssub.s32 %s30, %s42
      %p91 = scmp.eq.s32.totalorder %s90, 0
      %s93 = sadd.s32 %s92, 1
      %s94 = scalar_select %p91, %s92, %s93
      %p97 = pneg %p91
      %p98 = scmp.eq.s32.totalorder %s23, 3
      %p99 = por %p97, %p98
      %p100 = scmp.ne.s32.totalorder %s92, %s95
      %p101 = scmp.eq.s32.totalorder %s23, 0
      %p102 = por %p100, %p101
      %p103 = scmp.ne.s32.totalorder %s92, %s95
      %p104 = scmp.eq.s32.totalorder %s28, 3
      %p105 = por %p103, %p104
      %p106 = scmp.ne.s32.totalorder %s95, %s96
      %p107 = scmp.eq.s32.totalorder %s28, 0
      %p108 = por %p106, %p107
      %p109 = scmp.ne.s32.totalorder %s95, %s96
      %p110 = scmp.eq.s32.totalorder %s29, 3
      %p111 = por %p109, %p110
      %p113 = scmp.ne.s32.totalorder %s96, %s112
      %p114 = scmp.eq.s32.totalorder %s29, 0
      %p115 = por %p113, %p114
      %s116 = ssub.s32 %s30, %s42
      %p117 = scmp.eq.s32.totalorder %s116, 0
      %s119 = sadd.s32 %s118, 1
      %s120 = scalar_select %p117, %s118, %s119
      %p123 = pneg %p117
      %p124 = scmp.eq.s32.totalorder %s23, 3
      %p125 = por %p123, %p124
      %p126 = scmp.ne.s32.totalorder %s118, %s121
      %p127 = scmp.eq.s32.totalorder %s23, 0
      %p128 = por %p126, %p127
      %p129 = scmp.ne.s32.totalorder %s118, %s121
      %p130 = scmp.eq.s32.totalorder %s28, 3
      %p131 = por %p129, %p130
      %p132 = scmp.ne.s32.totalorder %s121, %s122
      %p133 = scmp.eq.s32.totalorder %s28, 0
      %p134 = por %p132, %p133
      %p135 = scmp.ne.s32.totalorder %s121, %s122
      %p136 = scmp.eq.s32.totalorder %s29, 3
      %p137 = por %p135, %p136
      %p139 = scmp.ne.s32.totalorder %s122, %s138
      %p140 = scmp.eq.s32.totalorder %s29, 0
      %p141 = por %p139, %p140
      %s142 = ssub.s32 %s30, %s42
      %p143 = scmp.eq.s32.totalorder %s142, 0
      %s145 = sadd.s32 %s144, 1
      %s146 = scalar_select %p143, %s144, %s145
      %p149 = pneg %p143
      %p150 = scmp.eq.s32.totalorder %s23, 3
      %p151 = por %p149, %p150
      %p152 = scmp.ne.s32.totalorder %s144, %s147
      %p153 = scmp.eq.s32.totalorder %s23, 0
      %p154 = por %p152, %p153
      %p155 = scmp.ne.s32.totalorder %s144, %s147
      %p156 = scmp.eq.s32.totalorder %s28, 3
      %p157 = por %p155, %p156
      %p158 = scmp.ne.s32.totalorder %s147, %s148
      %p159 = scmp.eq.s32.totalorder %s28, 0
      %p160 = por %p158, %p159
      %p161 = scmp.ne.s32.totalorder %s147, %s148
      %p162 = scmp.eq.s32.totalorder %s29, 3
      %p163 = por %p161, %p162
      %p165 = scmp.ne.s32.totalorder %s148, %s164
      %p166 = scmp.eq.s32.totalorder %s29, 0
      %p167 = por %p165, %p166
      %s168 = ssub.s32 %s30, %s42
      %s169 = ssub.s32 %s31, %s38
      %s170 = sor.u32 %s168, %s169
      %p171 = scmp.eq.s32.totalorder %s170, 0
      %s173 = sadd.s32 %s172, 1
      %s174 = scalar_select %p171, %s172, %s173
      %p177 = pneg %p171
      %p178 = scmp.eq.s32.totalorder %s23, 3
      %p179 = por %p177, %p178
      %p180 = scmp.ne.s32.totalorder %s172, %s175
      %p181 = scmp.eq.s32.totalorder %s23, 0
      %p182 = por %p180, %p181
      %p183 = scmp.ne.s32.totalorder %s172, %s175
      %p184 = scmp.eq.s32.totalorder %s28, 3
      %p185 = por %p183, %p184
      %p186 = scmp.ne.s32.totalorder %s175, %s176
      %p187 = scmp.eq.s32.totalorder %s28, 0
      %p188 = por %p186, %p187
      %p189 = scmp.ne.s32.totalorder %s175, %s176
      %p190 = scmp.eq.s32.totalorder %s29, 3
      %p191 = por %p189, %p190
      %p193 = scmp.ne.s32.totalorder %s176, %s192
      %p194 = scmp.eq.s32.totalorder %s29, 0
      %p195 = por %p193, %p194
      %p196 = scmp.le.s32.totalorder 1, %s23
      %p197 = scmp.lt.s32.totalorder %s23, 5
      %p198 = pnand %p196, %p197
      %p199 = pneg %p198
      // Predicated region
      $region9: #{tpu_custom_call.1} parent=5 // pred_check
        _
      $region10: #{tpu_custom_call.1} parent=5 // pred_check_branch
        %201 = sbr.rel (%p198) target = $region12
      $region11: #{tpu_custom_call.1} parent=5 // pred_region
        %s202 = ssub.s32 %s23, 1
        // Predicated region
        $region13: #{tpu_custom_call.1} parent=11 // pred_check
          %p203 = pneg %p56
        $region14: #{tpu_custom_call.1} parent=11 // pred_check_branch
          %205 = sbr.rel (%p203) target = $region16
        $region15: #{tpu_custom_call.1} parent=11 // pred_region
          _
        $region16: #{tpu_custom_call.1} parent=11 // pred_fallthru
          _
      $region12: #{tpu_custom_call.1} parent=5 // pred_fallthru
        _
      %p206 = scmp.lt.s32.totalorder %s23, 4
      // Predicated region
      $region17: #{tpu_custom_call.1} parent=5 // pred_check
        %p207 = pneg %p206
      $region18: #{tpu_custom_call.1} parent=5 // pred_check_branch
        %209 = sbr.rel (%p207) target = $region20
      $region19: #{tpu_custom_call.1} parent=5 // pred_region
        // Predicated region
        $region21: #{tpu_custom_call.1} parent=19 // pred_check
          %p210 = pneg %p76
        $region22: #{tpu_custom_call.1} parent=19 // pred_check_branch
          %212 = sbr.rel (%p210) target = $region24
        $region23: #{tpu_custom_call.1} parent=19 // pred_region
          %s213 = sand.u32 %s66, 1
          %s214 = scalar_lea.sflag [#allocation4], %s213
          %s215 = sand.u32 %s66, 1
          %s216 = smul.addr %s215, 48
          %s217 = scalar_lea.vmem [#allocation3], %s216
          %s219 = ssub.s32 768, 768
          %220 = vsyncadd %s214, %s219
          %s221 = smul.addr %s30, 12
          %s222 = smul.addr %s221, 64
          %s223 = scalar_lea.hbm %s1, %s222
          %s224 = sshll.u32 %s217, 4
          %s225 = int_to_ptr.vmem [resolvable:$true] %s224
          %230 = dma.hbm_to_vmem [thread:$0]  %s223, 768, %s225, %s214, 192, 192, 12
        $region24: #{tpu_custom_call.1} parent=19 // pred_fallthru
          _
        // Predicated region
        $region25: #{tpu_custom_call.1} parent=19 // pred_check
          %p231 = pneg %p102
        $region26: #{tpu_custom_call.1} parent=19 // pred_check_branch
          %233 = sbr.rel (%p231) target = $region28
        $region27: #{tpu_custom_call.1} parent=19 // pred_region
          %s234 = sand.u32 %s23, 1
          %s235 = scalar_lea.sflag [#allocation7], %s234
          %s236 = sand.u32 %s92, 1
          %s237 = smul.addr %s236, 3
          %s238 = scalar_lea.vmem [#allocation6], %s237
          %s240 = ssub.s32 48, 48
          %241 = vsyncadd %s235, %s240
          %s242 = smul.addr %s30, 3
          %s243 = smul.addr %s242, 16
          %s244 = scalar_lea.hbm %s2, %s243
          %s246 = sshll.u32 %s238, 4
          %s247 = int_to_ptr.vmem [resolvable:$true] %s246
          %249 = dma.hbm_to_vmem [thread:$0]  %s244, 48, %s247, %s235
        $region28: #{tpu_custom_call.1} parent=19 // pred_fallthru
          _
        // Predicated region
        $region29: #{tpu_custom_call.1} parent=19 // pred_check
          %p250 = pneg %p128
        $region30: #{tpu_custom_call.1} parent=19 // pred_check_branch
          %252 = sbr.rel (%p250) target = $region32
        $region31: #{tpu_custom_call.1} parent=19 // pred_region
          %s253 = sand.u32 %s23, 1
          %s254 = scalar_lea.sflag [#allocation7], %s253
          %s255 = sand.u32 %s118, 1
          %s256 = smul.addr %s255, 48
          %s257 = scalar_lea.vmem [#allocation8], %s256
          %s259 = ssub.s32 768, 768
          %260 = vsyncadd %s254, %s259
          %s261 = smul.addr %s30, 12
          %s262 = smul.addr %s261, 64
          %s263 = scalar_lea.hbm %s3, %s262
          %s264 = sshll.u32 %s257, 4
          %s265 = int_to_ptr.vmem [resolvable:$true] %s264
          %270 = dma.hbm_to_vmem [thread:$0]  %s263, 768, %s265, %s254, 192, 192, 12
        $region32: #{tpu_custom_call.1} parent=19 // pred_fallthru
          _
        // Predicated region
        $region33: #{tpu_custom_call.1} parent=19 // pred_check
          %p271 = pneg %p154
        $region34: #{tpu_custom_call.1} parent=19 // pred_check_branch
          %273 = sbr.rel (%p271) target = $region36
        $region35: #{tpu_custom_call.1} parent=19 // pred_region
          %s274 = sand.u32 %s144, 1
          %s275 = scalar_lea.sflag [#allocation10], %s274
          %s276 = sand.u32 %s144, 1
          %s277 = smul.addr %s276, 3
          %s278 = scalar_lea.vmem [#allocation9], %s277
          %s280 = ssub.s32 48, 48
          %281 = vsyncadd %s275, %s280
          %s282 = smul.addr %s30, 3
          %s283 = smul.addr %s282, 16
          %s284 = scalar_lea.hbm %s4, %s283
          %s286 = sshll.u32 %s278, 4
          %s287 = int_to_ptr.vmem [resolvable:$true] %s286
          %289 = dma.hbm_to_vmem [thread:$0]  %s284, 48, %s287, %s275
        $region36: #{tpu_custom_call.1} parent=19 // pred_fallthru
          _
      $region20: #{tpu_custom_call.1} parent=5 // pred_fallthru
        _
      %p290 = scmp.le.s32.totalorder 1, %s23
      %p291 = scmp.lt.s32.totalorder %s23, 5
      %p292 = pnand %p290, %p291
      %p293 = pneg %p292
      // Predicated region
      $region37: #{tpu_custom_call.1} parent=5 // pred_check
        _
      $region38: #{tpu_custom_call.1} parent=5 // pred_check_branch
        %295 = sbr.rel (%p292) target = $region40
      $region39: #{tpu_custom_call.1} parent=5 // pred_region
        %s296 = ssub.s32 %s23, 1
        %s297 = sand.u32 %s69, 1
        %s298 = scalar_lea.sflag [#allocation4], %s297
        %s299 = sand.u32 %s69, 1
        %s300 = smul.addr %s299, 48
        %s301 = scalar_lea.vmem [#allocation3], %s300
        // Predicated region
        $region41: #{tpu_custom_call.1} parent=39 // pred_check
          %p302 = pneg %p82
        $region42: #{tpu_custom_call.1} parent=39 // pred_check_branch
          %304 = sbr.rel (%p302) target = $region44
        $region43: #{tpu_custom_call.1} parent=39 // pred_region
          %305 = dma.done %s298, 768
        $region44: #{tpu_custom_call.1} parent=39 // pred_fallthru
          _
        %s306 = sand.u32 %s28, 1
        %s307 = scalar_lea.sflag [#allocation7], %s306
        %s308 = sand.u32 %s95, 1
        %s309 = smul.addr %s308, 3
        %s310 = scalar_lea.vmem [#allocation6], %s309
        // Predicated region
        $region45: #{tpu_custom_call.1} parent=39 // pred_check
          %p311 = pneg %p108
        $region46: #{tpu_custom_call.1} parent=39 // pred_check_branch
          %313 = sbr.rel (%p311) target = $region48
        $region47: #{tpu_custom_call.1} parent=39 // pred_region
          %314 = dma.done %s307, 48
        $region48: #{tpu_custom_call.1} parent=39 // pred_fallthru
          _
        %s315 = sand.u32 %s28, 1
        %s316 = scalar_lea.sflag [#allocation7], %s315
        %s317 = sand.u32 %s121, 1
        %s318 = smul.addr %s317, 48
        %s319 = scalar_lea.vmem [#allocation8], %s318
        // Predicated region
        $region49: #{tpu_custom_call.1} parent=39 // pred_check
          %p320 = pneg %p134
        $region50: #{tpu_custom_call.1} parent=39 // pred_check_branch
          %322 = sbr.rel (%p320) target = $region52
        $region51: #{tpu_custom_call.1} parent=39 // pred_region
          %323 = dma.done %s316, 768
        $region52: #{tpu_custom_call.1} parent=39 // pred_fallthru
          _
        %s324 = sand.u32 %s147, 1
        %s325 = scalar_lea.sflag [#allocation10], %s324
        %s326 = sand.u32 %s147, 1
        %s327 = smul.addr %s326, 3
        %s328 = scalar_lea.vmem [#allocation9], %s327
        // Predicated region
        $region53: #{tpu_custom_call.1} parent=39 // pred_check
          %p329 = pneg %p160
        $region54: #{tpu_custom_call.1} parent=39 // pred_check_branch
          %331 = sbr.rel (%p329) target = $region56
        $region55: #{tpu_custom_call.1} parent=39 // pred_region
          %332 = dma.done %s325, 48
        $region56: #{tpu_custom_call.1} parent=39 // pred_fallthru
          _
        %p333 = pneg %p56
        %p334 = pneg %p53
        %s335 = sand.u32 %s69, 1
        %s336 = scalar_lea.sflag [#allocation4], %s335
        %s337 = sand.u32 %s69, 1
        %s338 = smul.addr %s337, 48
        %s339 = scalar_lea.vmem [#allocation3], %s338
        %p340 = pneg %p82
        %p341 = pneg %p79
        %s342 = sand.u32 %s28, 1
        %s343 = scalar_lea.sflag [#allocation7], %s342
        %s344 = sand.u32 %s95, 1
        %s345 = smul.addr %s344, 3
        %s346 = scalar_lea.vmem [#allocation6], %s345
        %p347 = pneg %p108
        %p348 = pneg %p105
        %s349 = sand.u32 %s28, 1
        %s350 = scalar_lea.sflag [#allocation7], %s349
        %s351 = sand.u32 %s121, 1
        %s352 = smul.addr %s351, 48
        %s353 = scalar_lea.vmem [#allocation8], %s352
        %p354 = pneg %p134
        %p355 = pneg %p131
        %s356 = sand.u32 %s147, 1
        %s357 = scalar_lea.sflag [#allocation10], %s356
        %s358 = sand.u32 %s147, 1
        %s359 = smul.addr %s358, 3
        %s360 = scalar_lea.vmem [#allocation9], %s359
        %p361 = pneg %p160
        %p362 = pneg %p157
        %p363 = pneg %p188
        %p364 = pneg %p185
        %s365 = sand.u32 %s175, 1
        %s366 = scalar_lea.sflag [#allocation5], %s365
        %s367 = sand.u32 %s175, 1
        %s368 = smul.addr %s367, 1536
        %s369 = scalar_lea.vmem [#allocation11], %s368
        %s370 = smul.u32 6, %s32
        %s371 = smul.u32 16, %s33
        %p373 = scmp.eq.s32.totalorder %s33, 0
        // Predicated region
        $region57: #{tpu_custom_call.1} parent=39 // pred_check
          %p374 = pneg %p373
        $region58: #{tpu_custom_call.1} parent=39 // pred_check_branch
          %376 = sbr.rel (%p374) target = $region60
        $region59: #{tpu_custom_call.1} parent=39 // pred_region
          %v377 = vld [vmem:[%s0] sm:$0xf]
          %v378 = vld [vmem:[%s0 + $0x4] sm:$0xf]
          %v379 = vld [vmem:[%s0 + $0x8] sm:$0xf]
          %v380 = vld [vmem:[%s0 + $0xc] sm:$0xf]
          %v381 = vld [vmem:[%s0 + $0x10] sm:$0xf]
          %v382 = vld [vmem:[%s0 + $0x14] sm:$0xf]
          %v383 = vld [vmem:[%s0 + $0x18] sm:$0xf]
          %v384 = vld [vmem:[%s0 + $0x1c] sm:$0xf]
          %v385 = vld [vmem:[%s0 + $0x20] sm:$0xf]
          %v386 = vld [vmem:[%s0 + $0x24] sm:$0xf]
          %v387 = vld [vmem:[%s0 + $0x28] sm:$0xf]
          %v388 = vld [vmem:[%s0 + $0x2c] sm:$0xf]
          %v389 = vld [vmem:[%s0 + $0x30] sm:$0xf]
          %v390 = vld [vmem:[%s0 + $0x34] sm:$0xf]
          %v391 = vld [vmem:[%s0 + $0x38] sm:$0xf]
          %v392 = vld [vmem:[%s0 + $0x3c] sm:$0xf]
          %v393 = vld [vmem:[%s0 + $0x40] sm:$0xf]
          %v394 = vld [vmem:[%s0 + $0x44] sm:$0xf]
          %v395 = vld [vmem:[%s0 + $0x48] sm:$0xf]
          %v396 = vld [vmem:[%s0 + $0x4c] sm:$0xf]
          %v397 = vld [vmem:[%s0 + $0x50] sm:$0xf]
          %v398 = vld [vmem:[%s0 + $0x54] sm:$0xf]
          %v399 = vld [vmem:[%s0 + $0x58] sm:$0xf]
          %v400 = vld [vmem:[%s0 + $0x5c] sm:$0xf]
          %v401 = vld [vmem:[%s0 + $0x60] sm:$0xf]
          %v402 = vld [vmem:[%s0 + $0x64] sm:$0xf]
          %v403 = vld [vmem:[%s0 + $0x68] sm:$0xf]
          %v404 = vld [vmem:[%s0 + $0x6c] sm:$0xf]
          %v405 = vld [vmem:[%s0 + $0x70] sm:$0xf]
          %v406 = vld [vmem:[%s0 + $0x74] sm:$0xf]
          %v407 = vld [vmem:[%s0 + $0x78] sm:$0xf]
          %v408 = vld [vmem:[%s0 + $0x7c] sm:$0xf]
          %v409 = vld [vmem:[%s319] sm:$0xff]
          %v410 = vld [vmem:[%s319 + $0x8] sm:$0xf]
          %v411 = vld [vmem:[%s319 + $0xc] sm:$0xff]
          %v412 = vld [vmem:[%s319 + $0x14] sm:$0xf]
          %v413 = vld [vmem:[%s319 + $0x18] sm:$0xff]
          %v414 = vld [vmem:[%s319 + $0x20] sm:$0xf]
          %v415 = vld [vmem:[%s319 + $0x24] sm:$0xff]
          %v416 = vld [vmem:[%s319 + $0x2c] sm:$0xf]
          %v417 = vld [vmem:[%s328] sm:$0x7]
          %v419 = vlaneseq
          %v420 = vshrl.u32 %v419, 7
          %v421 = vsub.s32 0, %v420
          %v422 = vrot.slane %v417, %v421
          %v423 = vlaneseq
          %v424 = vshrl.u32 %v423, 7
          %v425 = vsub.s32 1, %v424
          %v426 = vrot.slane %v417, %v425
          %v427 = vlaneseq
          %v428 = vshrl.u32 %v427, 7
          %v429 = vsub.s32 2, %v428
          %v430 = vrot.slane %v417, %v429
          %v466 = vunpack.c.l.b16 %v377
          %v467 = vunpack.c.l.b16 %v378
          %v468 = vunpack.c.l.b16 %v379
          %v469 = vunpack.c.l.b16 %v380
          %v470 = vunpack.c.l.b16 %v381
          %v471 = vunpack.c.l.b16 %v382
          %v472 = vunpack.c.l.b16 %v383
          %v473 = vunpack.c.l.b16 %v384
          %v474 = vunpack.c.l.b16 %v385
          %v475 = vunpack.c.l.b16 %v386
          %v476 = vunpack.c.l.b16 %v387
          %v477 = vunpack.c.l.b16 %v388
          %v478 = vunpack.c.l.b16 %v389
          %v479 = vunpack.c.l.b16 %v390
          %v480 = vunpack.c.l.b16 %v391
          %v481 = vunpack.c.l.b16 %v392
          %v482 = vunpack.c.l.b16 %v393
          %v483 = vunpack.c.l.b16 %v394
          %v484 = vunpack.c.l.b16 %v395
          %v485 = vunpack.c.l.b16 %v396
          %v486 = vunpack.c.l.b16 %v397
          %v487 = vunpack.c.l.b16 %v398
          %v488 = vunpack.c.l.b16 %v399
          %v489 = vunpack.c.l.b16 %v400
          %v490 = vunpack.c.l.b16 %v401
          %v491 = vunpack.c.l.b16 %v402
          %v492 = vunpack.c.l.b16 %v403
          %v493 = vunpack.c.l.b16 %v404
          %v494 = vunpack.c.l.b16 %v405
          %v495 = vunpack.c.l.b16 %v406
          %v496 = vunpack.c.l.b16 %v407
          %v497 = vunpack.c.l.b16 %v408
          %v498 = vpack.c.b16 %v467, %v466
          %v499 = vpack.c.b16 %v469, %v468
          %v500 = vpack.c.b16 %v471, %v470
          %v501 = vpack.c.b16 %v473, %v472
          %v502 = vpack.c.b16 %v475, %v474
          %v503 = vpack.c.b16 %v477, %v476
          %v504 = vpack.c.b16 %v479, %v478
          %v505 = vpack.c.b16 %v481, %v480
          %v506 = vpack.c.b16 %v483, %v482
          %v507 = vpack.c.b16 %v485, %v484
          %v508 = vpack.c.b16 %v487, %v486
          %v509 = vpack.c.b16 %v489, %v488
          %v510 = vpack.c.b16 %v491, %v490
          %v511 = vpack.c.b16 %v493, %v492
          %v512 = vpack.c.b16 %v495, %v494
          %v513 = vpack.c.b16 %v497, %v496
          %v522 = vunpack.c.l.b16 %v409
          %v523 = vunpack.c.h.b16 %v409
          %v524 = vunpack.c.l.b16 %v410
          %v525 = vunpack.c.l.b16 %v411
          %v526 = vunpack.c.h.b16 %v411
          %v527 = vunpack.c.l.b16 %v412
          %v528 = vunpack.c.l.b16 %v413
          %v529 = vunpack.c.h.b16 %v413
          %v530 = vunpack.c.l.b16 %v414
          %v531 = vunpack.c.l.b16 %v415
          %v532 = vunpack.c.h.b16 %v415
          %v533 = vunpack.c.l.b16 %v416
          %v534 = vpack.c.b16 %v525, %v522
          %v535 = vpack.c.b16 %v526, %v523
          %v536 = vpack.c.b16 %v527, %v524
          %v537 = vpack.c.b16 %v531, %v528
          %v538 = vpack.c.b16 %v532, %v529
          %v539 = vpack.c.b16 %v533, %v530
          %vm546 = vcmask 261120
          %v548 = vsel %vm546, %v498, 0
          %v551 = vsel %vm546, %v499, 0
          %v554 = vsel %vm546, %v500, 0
          %v557 = vsel %vm546, %v501, 0
          %v560 = vsel %vm546, %v502, 0
          %v563 = vsel %vm546, %v503, 0
          %v566 = vsel %vm546, %v504, 0
          %v569 = vsel %vm546, %v505, 0
          %v572 = vsel %vm546, %v506, 0
          %v575 = vsel %vm546, %v507, 0
          %v578 = vsel %vm546, %v508, 0
          %v581 = vsel %vm546, %v509, 0
          %v584 = vsel %vm546, %v510, 0
          %v587 = vsel %vm546, %v511, 0
          %v590 = vsel %vm546, %v512, 0
          %v593 = vsel %vm546, %v513, 0
          %595 = vmatprep.subr.bf16.mxu0 %v535
          %596 = vmatpush1.bf16.msra.mxu0 %v534
          %597 = vmatprep.subr.bf16.mxu0 %v538
          %598 = vmatpush1.bf16.msra.mxu0 %v537
          %599 = vmatprep.subr.bf16.mxu0 0
          %600 = vmatpush1.bf16.msra.mxu0 0
          %601 = vmatprep.subr.bf16.mxu0 0
          %602 = vmatpush1.bf16.msra.mxu0 0
          %603 = vmatprep.subr.bf16.mxu0 0
          %604 = vmatpush1.bf16.msra.mxu0 0
          %605 = vmatprep.subr.bf16.mxu0 0
          %606 = vmatpush1.bf16.msra.mxu0 0
          %607 = vmatprep.subr.bf16.mxu0 0
          %608 = vmatpush1.bf16.msra.mxu0 0
          %609 = vmatprep.subr.bf16.mxu0 0
          %610 = vmatpush1.bf16.msra.mxu0 0
          %611 = vmatprep.subr.bf16.mxu0 0
          %612 = vmatpush1.bf16.msra.mxu0 0
          %613 = vmatprep.subr.bf16.mxu0 0
          %614 = vmatpush1.bf16.msra.mxu0 0
          %615 = vmatprep.subr.bf16.mxu0 0
          %616 = vmatpush1.bf16.msra.mxu0 0
          %617 = vmatprep.subr.bf16.mxu0 0
          %618 = vmatpush1.bf16.msra.mxu0 0
          %619 = vmatprep.subr.bf16.mxu0 0
          %620 = vmatpush1.bf16.msra.mxu0 0
          %621 = vmatprep.subr.bf16.mxu0 0
          %622 = vmatpush1.bf16.msra.mxu0 0
          %623 = vmatprep.subr.bf16.mxu0 0
          %624 = vmatpush1.bf16.msra.mxu0 0
          %625 = vmatprep.subr.bf16.mxu0 0
          %626 = vmatpush1.bf16.msra.mxu0 0
          %627 = vmatprep.mubr.bf16.mxu0 0
          %628 = vmatmul.mubr.bf16.gmra.mrb[0].mxu0 %v548
          %v629 = vpop.f32.mrb[0].mxu0
          %v630 = vadd.f32 %v422, %v629
          %v631 = vpop.f32.mrb[0].mxu0
          %v632 = vadd.f32 %v426, %v631
          %v633 = vpop.f32.mrb[0].mxu0
          %v634 = vadd.f32 %v422, %v633
          %v635 = vpop.f32.mrb[0].mxu0
          %v636 = vadd.f32 %v426, %v635
          %637 = vmatprep.mubr.bf16.mxu0 0
          %638 = vmatmul.mubr.bf16.gmra.mrb[0].mxu0 %v551
          %v639 = vpop.f32.mrb[0].mxu0
          %v640 = vadd.f32 %v422, %v639
          %v641 = vpop.f32.mrb[0].mxu0
          %v642 = vadd.f32 %v426, %v641
          %v643 = vpop.f32.mrb[0].mxu0
          %v644 = vadd.f32 %v422, %v643
          %v645 = vpop.f32.mrb[0].mxu0
          %v646 = vadd.f32 %v426, %v645
          %647 = vmatprep.mubr.bf16.mxu0 0
          %648 = vmatmul.mubr.bf16.gmra.mrb[0].mxu0 %v554
          %v649 = vpop.f32.mrb[0].mxu0
          %v650 = vadd.f32 %v422, %v649
          %v651 = vpop.f32.mrb[0].mxu0
          %v652 = vadd.f32 %v426, %v651
          %v653 = vpop.f32.mrb[0].mxu0
          %v654 = vadd.f32 %v422, %v653
          %v655 = vpop.f32.mrb[0].mxu0
          %v656 = vadd.f32 %v426, %v655
          %657 = vmatprep.mubr.bf16.mxu0 0
          %658 = vmatmul.mubr.bf16.gmra.mrb[0].mxu0 %v557
          %v659 = vpop.f32.mrb[0].mxu0
          %v660 = vadd.f32 %v422, %v659
          %v661 = vpop.f32.mrb[0].mxu0
          %v662 = vadd.f32 %v426, %v661
          %v663 = vpop.f32.mrb[0].mxu0
          %v664 = vadd.f32 %v422, %v663
          %v665 = vpop.f32.mrb[0].mxu0
          %v666 = vadd.f32 %v426, %v665
          %667 = vmatprep.mubr.bf16.mxu0 0
          %668 = vmatmul.mubr.bf16.gmra.mrb[0].mxu0 %v560
          %v669 = vpop.f32.mrb[0].mxu0
          %v670 = vadd.f32 %v422, %v669
          %v671 = vpop.f32.mrb[0].mxu0
          %v672 = vadd.f32 %v426, %v671
          %v673 = vpop.f32.mrb[0].mxu0
          %v674 = vadd.f32 %v422, %v673
          %v675 = vpop.f32.mrb[0].mxu0
          %v676 = vadd.f32 %v426, %v675
          %677 = vmatprep.mubr.bf16.mxu0 0
          %678 = vmatmul.mubr.bf16.gmra.mrb[0].mxu0 %v563
          %v679 = vpop.f32.mrb[0].mxu0
          %v680 = vadd.f32 %v422, %v679
          %v681 = vpop.f32.mrb[0].mxu0
          %v682 = vadd.f32 %v426, %v681
          %v683 = vpop.f32.mrb[0].mxu0
          %v684 = vadd.f32 %v422, %v683
          %v685 = vpop.f32.mrb[0].mxu0
          %v686 = vadd.f32 %v426, %v685
          %687 = vmatprep.mubr.bf16.mxu0 0
          %688 = vmatmul.mubr.bf16.gmra.mrb[0].mxu0 %v566
          %v689 = vpop.f32.mrb[0].mxu0
          %v690 = vadd.f32 %v422, %v689
          %v691 = vpop.f32.mrb[0].mxu0
          %v692 = vadd.f32 %v426, %v691
          %v693 = vpop.f32.mrb[0].mxu0
          %v694 = vadd.f32 %v422, %v693
          %v695 = vpop.f32.mrb[0].mxu0
          %v696 = vadd.f32 %v426, %v695
          %697 = vmatprep.mubr.bf16.mxu0 0
          %698 = vmatmul.mubr.bf16.gmra.mrb[0].mxu0 %v569
          %v699 = vpop.f32.mrb[0].mxu0
          %v700 = vadd.f32 %v422, %v699
          %v701 = vpop.f32.mrb[0].mxu0
          %v702 = vadd.f32 %v426, %v701
          %v703 = vpop.f32.mrb[0].mxu0
          %v704 = vadd.f32 %v422, %v703
          %v705 = vpop.f32.mrb[0].mxu0
          %v706 = vadd.f32 %v426, %v705
          %707 = vmatprep.mubr.bf16.mxu0 0
          %708 = vmatmul.mubr.bf16.gmra.mrb[0].mxu0 %v572
          %v709 = vpop.f32.mrb[0].mxu0
          %v710 = vadd.f32 %v422, %v709
          %v711 = vpop.f32.mrb[0].mxu0
          %v712 = vadd.f32 %v426, %v711
          %v713 = vpop.f32.mrb[0].mxu0
          %v714 = vadd.f32 %v422, %v713
          %v715 = vpop.f32.mrb[0].mxu0
          %v716 = vadd.f32 %v426, %v715
          %717 = vmatprep.mubr.bf16.mxu0 0
          %718 = vmatmul.mubr.bf16.gmra.mrb[0].mxu0 %v575
          %v719 = vpop.f32.mrb[0].mxu0
          %v720 = vadd.f32 %v422, %v719
          %v721 = vpop.f32.mrb[0].mxu0
          %v722 = vadd.f32 %v426, %v721
          %v723 = vpop.f32.mrb[0].mxu0
          %v724 = vadd.f32 %v422, %v723
          %v725 = vpop.f32.mrb[0].mxu0
          %v726 = vadd.f32 %v426, %v725
          %727 = vmatprep.mubr.bf16.mxu0 0
          %728 = vmatmul.mubr.bf16.gmra.mrb[0].mxu0 %v578
          %v729 = vpop.f32.mrb[0].mxu0
          %v730 = vadd.f32 %v422, %v729
          %v731 = vpop.f32.mrb[0].mxu0
          %v732 = vadd.f32 %v426, %v731
          %v733 = vpop.f32.mrb[0].mxu0
          %v734 = vadd.f32 %v422, %v733
          %v735 = vpop.f32.mrb[0].mxu0
          %v736 = vadd.f32 %v426, %v735
          %737 = vmatprep.mubr.bf16.mxu0 0
          %738 = vmatmul.mubr.bf16.gmra.mrb[0].mxu0 %v581
          %v739 = vpop.f32.mrb[0].mxu0
          %v740 = vadd.f32 %v422, %v739
          %v741 = vpop.f32.mrb[0].mxu0
          %v742 = vadd.f32 %v426, %v741
          %v743 = vpop.f32.mrb[0].mxu0
          %v744 = vadd.f32 %v422, %v743
          %v745 = vpop.f32.mrb[0].mxu0
          %v746 = vadd.f32 %v426, %v745
          %747 = vmatprep.mubr.bf16.mxu0 0
          %748 = vmatmul.mubr.bf16.gmra.mrb[0].mxu0 %v584
          %v749 = vpop.f32.mrb[0].mxu0
          %v750 = vadd.f32 %v422, %v749
          %v751 = vpop.f32.mrb[0].mxu0
          %v752 = vadd.f32 %v426, %v751
          %v753 = vpop.f32.mrb[0].mxu0
          %v754 = vadd.f32 %v422, %v753
          %v755 = vpop.f32.mrb[0].mxu0
          %v756 = vadd.f32 %v426, %v755
          %757 = vmatprep.mubr.bf16.mxu0 0
          %758 = vmatmul.mubr.bf16.gmra.mrb[0].mxu0 %v587
          %v759 = vpop.f32.mrb[0].mxu0
          %v760 = vadd.f32 %v422, %v759
          %v761 = vpop.f32.mrb[0].mxu0
          %v762 = vadd.f32 %v426, %v761
          %v763 = vpop.f32.mrb[0].mxu0
          %v764 = vadd.f32 %v422, %v763
          %v765 = vpop.f32.mrb[0].mxu0
          %v766 = vadd.f32 %v426, %v765
          %767 = vmatprep.mubr.bf16.mxu0 0
          %768 = vmatmul.mubr.bf16.gmra.mrb[0].mxu0 %v590
          %v769 = vpop.f32.mrb[0].mxu0
          %v770 = vadd.f32 %v422, %v769
          %v771 = vpop.f32.mrb[0].mxu0
          %v772 = vadd.f32 %v426, %v771
          %v773 = vpop.f32.mrb[0].mxu0
          %v774 = vadd.f32 %v422, %v773
          %v775 = vpop.f32.mrb[0].mxu0
          %v776 = vadd.f32 %v426, %v775
          %777 = vmatprep.mubr.bf16.mxu0 0
          %778 = vmatmul.mubr.bf16.gmra.mrb[0].mxu0 %v593
          %v779 = vpop.f32.mrb[0].mxu0
          %v780 = vadd.f32 %v422, %v779
          %v781 = vpop.f32.mrb[0].mxu0
          %v782 = vadd.f32 %v426, %v781
          %v783 = vpop.f32.mrb[0].mxu0
          %v784 = vadd.f32 %v422, %v783
          %v785 = vpop.f32.mrb[0].mxu0
          %v786 = vadd.f32 %v426, %v785
          %787 = vdwg.mxu0
          %788 = vmatprep.subr.bf16.mxu0 0
          %789 = vmatpush1.bf16.msra.mxu0 %v536
          %790 = vmatprep.subr.bf16.mxu0 0
          %791 = vmatpush1.bf16.msra.mxu0 %v539
          %792 = vmatprep.subr.bf16.mxu0 0
          %793 = vmatpush1.bf16.msra.mxu0 0
          %794 = vmatprep.subr.bf16.mxu0 0
          %795 = vmatpush1.bf16.msra.mxu0 0
          %796 = vmatprep.subr.bf16.mxu0 0
          %797 = vmatpush1.bf16.msra.mxu0 0
          %798 = vmatprep.subr.bf16.mxu0 0
          %799 = vmatpush1.bf16.msra.mxu0 0
          %800 = vmatprep.subr.bf16.mxu0 0
          %801 = vmatpush1.bf16.msra.mxu0 0
          %802 = vmatprep.subr.bf16.mxu0 0
          %803 = vmatpush1.bf16.msra.mxu0 0
          %804 = vmatprep.subr.bf16.mxu0 0
          %805 = vmatpush1.bf16.msra.mxu0 0
          %806 = vmatprep.subr.bf16.mxu0 0
          %807 = vmatpush1.bf16.msra.mxu0 0
          %808 = vmatprep.subr.bf16.mxu0 0
          %809 = vmatpush1.bf16.msra.mxu0 0
          %810 = vmatprep.subr.bf16.mxu0 0
          %811 = vmatpush1.bf16.msra.mxu0 0
          %812 = vmatprep.subr.bf16.mxu0 0
          %813 = vmatpush1.bf16.msra.mxu0 0
          %814 = vmatprep.subr.bf16.mxu0 0
          %815 = vmatpush1.bf16.msra.mxu0 0
          %816 = vmatprep.subr.bf16.mxu0 0
          %817 = vmatpush1.bf16.msra.mxu0 0
          %818 = vmatprep.subr.bf16.mxu0 0
          %819 = vmatpush1.bf16.msra.mxu0 0
          %820 = vmatprep.mubr.bf16.mxu0 0
          %821 = vmatmul.mubr.bf16.gmra.mrb[0].mxu0 %v548
          %v822 = vpop.f32.mrb[0].mxu0
          %v823 = vadd.f32 %v430, %v822
          %v824 = vpop.f32.mrb[0].mxu0
          %v825 = vpop.f32.mrb[0].mxu0
          %v826 = vadd.f32 %v430, %v825
          %v827 = vpop.f32.mrb[0].mxu0
          %828 = vmatprep.mubr.bf16.mxu0 0
          %829 = vmatmul.mubr.bf16.gmra.mrb[0].mxu0 %v551
          %v830 = vpop.f32.mrb[0].mxu0
          %v831 = vadd.f32 %v430, %v830
          %v832 = vpop.f32.mrb[0].mxu0
          %v833 = vpop.f32.mrb[0].mxu0
          %v834 = vadd.f32 %v430, %v833
          %v835 = vpop.f32.mrb[0].mxu0
          %836 = vmatprep.mubr.bf16.mxu0 0
          %837 = vmatmul.mubr.bf16.gmra.mrb[0].mxu0 %v554
          %v838 = vpop.f32.mrb[0].mxu0
          %v839 = vadd.f32 %v430, %v838
          %v840 = vpop.f32.mrb[0].mxu0
          %v841 = vpop.f32.mrb[0].mxu0
          %v842 = vadd.f32 %v430, %v841
          %v843 = vpop.f32.mrb[0].mxu0
          %844 = vmatprep.mubr.bf16.mxu0 0
          %845 = vmatmul.mubr.bf16.gmra.mrb[0].mxu0 %v557
          %v846 = vpop.f32.mrb[0].mxu0
          %v847 = vadd.f32 %v430, %v846
          %v848 = vpop.f32.mrb[0].mxu0
          %v849 = vpop.f32.mrb[0].mxu0
          %v850 = vadd.f32 %v430, %v849
          %v851 = vpop.f32.mrb[0].mxu0
          %852 = vmatprep.mubr.bf16.mxu0 0
          %853 = vmatmul.mubr.bf16.gmra.mrb[0].mxu0 %v560
          %v854 = vpop.f32.mrb[0].mxu0
          %v855 = vadd.f32 %v430, %v854
          %v856 = vpop.f32.mrb[0].mxu0
          %v857 = vpop.f32.mrb[0].mxu0
          %v858 = vadd.f32 %v430, %v857
          %v859 = vpop.f32.mrb[0].mxu0
          %860 = vmatprep.mubr.bf16.mxu0 0
          %861 = vmatmul.mubr.bf16.gmra.mrb[0].mxu0 %v563
          %v862 = vpop.f32.mrb[0].mxu0
          %v863 = vadd.f32 %v430, %v862
          %v864 = vpop.f32.mrb[0].mxu0
          %v865 = vpop.f32.mrb[0].mxu0
          %v866 = vadd.f32 %v430, %v865
          %v867 = vpop.f32.mrb[0].mxu0
          %868 = vmatprep.mubr.bf16.mxu0 0
          %869 = vmatmul.mubr.bf16.gmra.mrb[0].mxu0 %v566
          %v870 = vpop.f32.mrb[0].mxu0
          %v871 = vadd.f32 %v430, %v870
          %v872 = vpop.f32.mrb[0].mxu0
          %v873 = vpop.f32.mrb[0].mxu0
          %v874 = vadd.f32 %v430, %v873
          %v875 = vpop.f32.mrb[0].mxu0
          %876 = vmatprep.mubr.bf16.mxu0 0
          %877 = vmatmul.mubr.bf16.gmra.mrb[0].mxu0 %v569
          %v878 = vpop.f32.mrb[0].mxu0
          %v879 = vadd.f32 %v430, %v878
          %v880 = vpop.f32.mrb[0].mxu0
          %v881 = vpop.f32.mrb[0].mxu0
          %v882 = vadd.f32 %v430, %v881
          %v883 = vpop.f32.mrb[0].mxu0
          %884 = vmatprep.mubr.bf16.mxu0 0
          %885 = vmatmul.mubr.bf16.gmra.mrb[0].mxu0 %v572
          %v886 = vpop.f32.mrb[0].mxu0
          %v887 = vadd.f32 %v430, %v886
          %v888 = vpop.f32.mrb[0].mxu0
          %v889 = vpop.f32.mrb[0].mxu0
          %v890 = vadd.f32 %v430, %v889
          %v891 = vpop.f32.mrb[0].mxu0
          %892 = vmatprep.mubr.bf16.mxu0 0
          %893 = vmatmul.mubr.bf16.gmra.mrb[0].mxu0 %v575
          %v894 = vpop.f32.mrb[0].mxu0
          %v895 = vadd.f32 %v430, %v894
          %v896 = vpop.f32.mrb[0].mxu0
          %v897 = vpop.f32.mrb[0].mxu0
          %v898 = vadd.f32 %v430, %v897
          %v899 = vpop.f32.mrb[0].mxu0
          %900 = vmatprep.mubr.bf16.mxu0 0
          %901 = vmatmul.mubr.bf16.gmra.mrb[0].mxu0 %v578
          %v902 = vpop.f32.mrb[0].mxu0
          %v903 = vadd.f32 %v430, %v902
          %v904 = vpop.f32.mrb[0].mxu0
          %v905 = vpop.f32.mrb[0].mxu0
          %v906 = vadd.f32 %v430, %v905
          %v907 = vpop.f32.mrb[0].mxu0
          %908 = vmatprep.mubr.bf16.mxu0 0
          %909 = vmatmul.mubr.bf16.gmra.mrb[0].mxu0 %v581
          %v910 = vpop.f32.mrb[0].mxu0
          %v911 = vadd.f32 %v430, %v910
          %v912 = vpop.f32.mrb[0].mxu0
          %v913 = vpop.f32.mrb[0].mxu0
          %v914 = vadd.f32 %v430, %v913
          %v915 = vpop.f32.mrb[0].mxu0
          %916 = vmatprep.mubr.bf16.mxu0 0
          %917 = vmatmul.mubr.bf16.gmra.mrb[0].mxu0 %v584
          %v918 = vpop.f32.mrb[0].mxu0
          %v919 = vadd.f32 %v430, %v918
          %v920 = vpop.f32.mrb[0].mxu0
          %v921 = vpop.f32.mrb[0].mxu0
          %v922 = vadd.f32 %v430, %v921
          %v923 = vpop.f32.mrb[0].mxu0
          %924 = vmatprep.mubr.bf16.mxu0 0
          %925 = vmatmul.mubr.bf16.gmra.mrb[0].mxu0 %v587
          %v926 = vpop.f32.mrb[0].mxu0
          %v927 = vadd.f32 %v430, %v926
          %v928 = vpop.f32.mrb[0].mxu0
          %v929 = vpop.f32.mrb[0].mxu0
          %v930 = vadd.f32 %v430, %v929
          %v931 = vpop.f32.mrb[0].mxu0
          %932 = vmatprep.mubr.bf16.mxu0 0
          %933 = vmatmul.mubr.bf16.gmra.mrb[0].mxu0 %v590
          %v934 = vpop.f32.mrb[0].mxu0
          %v935 = vadd.f32 %v430, %v934
          %v936 = vpop.f32.mrb[0].mxu0
          %v937 = vpop.f32.mrb[0].mxu0
          %v938 = vadd.f32 %v430, %v937
          %v939 = vpop.f32.mrb[0].mxu0
          %940 = vmatprep.mubr.bf16.mxu0 0
          %941 = vmatmul.mubr.bf16.gmra.mrb[0].mxu0 %v593
          %v942 = vpop.f32.mrb[0].mxu0
          %v943 = vadd.f32 %v430, %v942
          %v944 = vpop.f32.mrb[0].mxu0
          %v945 = vpop.f32.mrb[0].mxu0
          %v946 = vadd.f32 %v430, %v945
          %v947 = vpop.f32.mrb[0].mxu0
          %948 = vdwg.mxu0
          %v949 = vpack.c.bf16 %v634, %v630
          %v950 = vpack.c.bf16 %v644, %v640
          %v951 = vpack.c.bf16 %v654, %v650
          %v952 = vpack.c.bf16 %v664, %v660
          %v953 = vpack.c.bf16 %v674, %v670
          %v954 = vpack.c.bf16 %v684, %v680
          %v955 = vpack.c.bf16 %v694, %v690
          %v956 = vpack.c.bf16 %v704, %v700
          %v957 = vpack.c.bf16 %v714, %v710
          %v958 = vpack.c.bf16 %v724, %v720
          %v959 = vpack.c.bf16 %v734, %v730
          %v960 = vpack.c.bf16 %v744, %v740
          %v961 = vpack.c.bf16 %v754, %v750
          %v962 = vpack.c.bf16 %v764, %v760
          %v963 = vpack.c.bf16 %v774, %v770
          %v964 = vpack.c.bf16 %v784, %v780
          %vm965 = vcmask 523264
          %966 = vst.msk [vmem:[#allocation2] sm:$0xff] %vm965, %v949
          %967 = vst.msk [vmem:[#allocation2 + $0x8] sm:$0xff] %vm965, %v950
          %968 = vst.msk [vmem:[#allocation2 + $0x10] sm:$0xff] %vm965, %v951
          %969 = vst.msk [vmem:[#allocation2 + $0x18] sm:$0xff] %vm965, %v952
          %970 = vst.msk [vmem:[#allocation2 + $0x20] sm:$0xff] %vm965, %v953
          %971 = vst.msk [vmem:[#allocation2 + $0x28] sm:$0xff] %vm965, %v954
          %972 = vst.msk [vmem:[#allocation2 + $0x30] sm:$0xff] %vm965, %v955
          %973 = vst.msk [vmem:[#allocation2 + $0x38] sm:$0xff] %vm965, %v956
          %974 = vst.msk [vmem:[#allocation2 + $0x40] sm:$0xff] %vm965, %v957
          %975 = vst.msk [vmem:[#allocation2 + $0x48] sm:$0xff] %vm965, %v958
          %976 = vst.msk [vmem:[#allocation2 + $0x50] sm:$0xff] %vm965, %v959
          %977 = vst.msk [vmem:[#allocation2 + $0x58] sm:$0xff] %vm965, %v960
          %978 = vst.msk [vmem:[#allocation2 + $0x60] sm:$0xff] %vm965, %v961
          %979 = vst.msk [vmem:[#allocation2 + $0x68] sm:$0xff] %vm965, %v962
          %980 = vst.msk [vmem:[#allocation2 + $0x70] sm:$0xff] %vm965, %v963
          %981 = vst.msk [vmem:[#allocation2 + $0x78] sm:$0xff] %vm965, %v964
          %998 = vrot.lane.b32.xlu0 %v949, 64
          %v999 = vpop.permute.xlu0 %998
          %1000 = vrot.lane.b32.xlu0 %v950, 64
          %v1001 = vpop.permute.xlu0 %1000
          %1002 = vrot.lane.b32.xlu0 %v951, 64
          %v1003 = vpop.permute.xlu0 %1002
          %1004 = vrot.lane.b32.xlu0 %v952, 64
          %v1005 = vpop.permute.xlu0 %1004
          %1006 = vrot.lane.b32.xlu0 %v953, 64
          %v1007 = vpop.permute.xlu0 %1006
          %1008 = vrot.lane.b32.xlu0 %v954, 64
          %v1009 = vpop.permute.xlu0 %1008
          %1010 = vrot.lane.b32.xlu0 %v955, 64
          %v1011 = vpop.permute.xlu0 %1010
          %1012 = vrot.lane.b32.xlu0 %v956, 64
          %v1013 = vpop.permute.xlu0 %1012
          %1014 = vrot.lane.b32.xlu0 %v957, 64
          %v1015 = vpop.permute.xlu0 %1014
          %1016 = vrot.lane.b32.xlu0 %v958, 64
          %v1017 = vpop.permute.xlu0 %1016
          %1018 = vrot.lane.b32.xlu0 %v959, 64
          %v1019 = vpop.permute.xlu0 %1018
          %1020 = vrot.lane.b32.xlu0 %v960, 64
          %v1021 = vpop.permute.xlu0 %1020
          %1022 = vrot.lane.b32.xlu0 %v961, 64
          %v1023 = vpop.permute.xlu0 %1022
          %1024 = vrot.lane.b32.xlu0 %v962, 64
          %v1025 = vpop.permute.xlu0 %1024
          %1026 = vrot.lane.b32.xlu0 %v963, 64
          %v1027 = vpop.permute.xlu0 %1026
          %1028 = vrot.lane.b32.xlu0 %v964, 64
          %v1029 = vpop.permute.xlu0 %1028
          %s1046 = scalar_lea.vmem [#allocation2], 128
          %1047 = vst.msk [vmem:[%s1046] sm:$0xff] %vm965, %v999
          %1048 = vst.msk [vmem:[%s1046 + $0x8] sm:$0xff] %vm965, %v1001
          %1049 = vst.msk [vmem:[%s1046 + $0x10] sm:$0xff] %vm965, %v1003
          %1050 = vst.msk [vmem:[%s1046 + $0x18] sm:$0xff] %vm965, %v1005
          %1051 = vst.msk [vmem:[%s1046 + $0x20] sm:$0xff] %vm965, %v1007
          %1052 = vst.msk [vmem:[%s1046 + $0x28] sm:$0xff] %vm965, %v1009
          %1053 = vst.msk [vmem:[%s1046 + $0x30] sm:$0xff] %vm965, %v1011
          %1054 = vst.msk [vmem:[%s1046 + $0x38] sm:$0xff] %vm965, %v1013
          %1055 = vst.msk [vmem:[%s1046 + $0x40] sm:$0xff] %vm965, %v1015
          %1056 = vst.msk [vmem:[%s1046 + $0x48] sm:$0xff] %vm965, %v1017
          %1057 = vst.msk [vmem:[%s1046 + $0x50] sm:$0xff] %vm965, %v1019
          %1058 = vst.msk [vmem:[%s1046 + $0x58] sm:$0xff] %vm965, %v1021
          %1059 = vst.msk [vmem:[%s1046 + $0x60] sm:$0xff] %vm965, %v1023
          %1060 = vst.msk [vmem:[%s1046 + $0x68] sm:$0xff] %vm965, %v1025
          %1061 = vst.msk [vmem:[%s1046 + $0x70] sm:$0xff] %vm965, %v1027
          %1062 = vst.msk [vmem:[%s1046 + $0x78] sm:$0xff] %vm965, %v1029
          %v1063 = vpack.c.bf16 %v636, %v632
          %v1064 = vpack.c.bf16 %v646, %v642
          %v1065 = vpack.c.bf16 %v656, %v652
          %v1066 = vpack.c.bf16 %v666, %v662
          %v1067 = vpack.c.bf16 %v676, %v672
          %v1068 = vpack.c.bf16 %v686, %v682
          %v1069 = vpack.c.bf16 %v696, %v692
          %v1070 = vpack.c.bf16 %v706, %v702
          %v1071 = vpack.c.bf16 %v716, %v712
          %v1072 = vpack.c.bf16 %v726, %v722
          %v1073 = vpack.c.bf16 %v736, %v732
          %v1074 = vpack.c.bf16 %v746, %v742
          %v1075 = vpack.c.bf16 %v756, %v752
          %v1076 = vpack.c.bf16 %v766, %v762
          %v1077 = vpack.c.bf16 %v776, %v772
          %v1078 = vpack.c.bf16 %v786, %v782
          %s1079 = scalar_lea.vmem [#allocation2], 256
          %1080 = vst.msk [vmem:[%s1079] sm:$0xff] %vm965, %v1063
          %1081 = vst.msk [vmem:[%s1079 + $0x8] sm:$0xff] %vm965, %v1064
          %1082 = vst.msk [vmem:[%s1079 + $0x10] sm:$0xff] %vm965, %v1065
          %1083 = vst.msk [vmem:[%s1079 + $0x18] sm:$0xff] %vm965, %v1066
          %1084 = vst.msk [vmem:[%s1079 + $0x20] sm:$0xff] %vm965, %v1067
          %1085 = vst.msk [vmem:[%s1079 + $0x28] sm:$0xff] %vm965, %v1068
          %1086 = vst.msk [vmem:[%s1079 + $0x30] sm:$0xff] %vm965, %v1069
          %1087 = vst.msk [vmem:[%s1079 + $0x38] sm:$0xff] %vm965, %v1070
          %1088 = vst.msk [vmem:[%s1079 + $0x40] sm:$0xff] %vm965, %v1071
          %1089 = vst.msk [vmem:[%s1079 + $0x48] sm:$0xff] %vm965, %v1072
          %1090 = vst.msk [vmem:[%s1079 + $0x50] sm:$0xff] %vm965, %v1073
          %1091 = vst.msk [vmem:[%s1079 + $0x58] sm:$0xff] %vm965, %v1074
          %1092 = vst.msk [vmem:[%s1079 + $0x60] sm:$0xff] %vm965, %v1075
          %1093 = vst.msk [vmem:[%s1079 + $0x68] sm:$0xff] %vm965, %v1076
          %1094 = vst.msk [vmem:[%s1079 + $0x70] sm:$0xff] %vm965, %v1077
          %1095 = vst.msk [vmem:[%s1079 + $0x78] sm:$0xff] %vm965, %v1078
          %1112 = vrot.lane.b32.xlu0 %v1063, 64
          %v1113 = vpop.permute.xlu0 %1112
          %1114 = vrot.lane.b32.xlu0 %v1064, 64
          %v1115 = vpop.permute.xlu0 %1114
          %1116 = vrot.lane.b32.xlu0 %v1065, 64
          %v1117 = vpop.permute.xlu0 %1116
          %1118 = vrot.lane.b32.xlu0 %v1066, 64
          %v1119 = vpop.permute.xlu0 %1118
          %1120 = vrot.lane.b32.xlu0 %v1067, 64
          %v1121 = vpop.permute.xlu0 %1120
          %1122 = vrot.lane.b32.xlu0 %v1068, 64
          %v1123 = vpop.permute.xlu0 %1122
          %1124 = vrot.lane.b32.xlu0 %v1069, 64
          %v1125 = vpop.permute.xlu0 %1124
          %1126 = vrot.lane.b32.xlu0 %v1070, 64
          %v1127 = vpop.permute.xlu0 %1126
          %1128 = vrot.lane.b32.xlu0 %v1071, 64
          %v1129 = vpop.permute.xlu0 %1128
          %1130 = vrot.lane.b32.xlu0 %v1072, 64
          %v1131 = vpop.permute.xlu0 %1130
          %1132 = vrot.lane.b32.xlu0 %v1073, 64
          %v1133 = vpop.permute.xlu0 %1132
          %1134 = vrot.lane.b32.xlu0 %v1074, 64
          %v1135 = vpop.permute.xlu0 %1134
          %1136 = vrot.lane.b32.xlu0 %v1075, 64
          %v1137 = vpop.permute.xlu0 %1136
          %1138 = vrot.lane.b32.xlu0 %v1076, 64
          %v1139 = vpop.permute.xlu0 %1138
          %1140 = vrot.lane.b32.xlu0 %v1077, 64
          %v1141 = vpop.permute.xlu0 %1140
          %1142 = vrot.lane.b32.xlu0 %v1078, 64
          %v1143 = vpop.permute.xlu0 %1142
          %s1160 = scalar_lea.vmem [#allocation2], 384
          %1161 = vst.msk [vmem:[%s1160] sm:$0xff] %vm965, %v1113
          %1162 = vst.msk [vmem:[%s1160 + $0x8] sm:$0xff] %vm965, %v1115
          %1163 = vst.msk [vmem:[%s1160 + $0x10] sm:$0xff] %vm965, %v1117
          %1164 = vst.msk [vmem:[%s1160 + $0x18] sm:$0xff] %vm965, %v1119
          %1165 = vst.msk [vmem:[%s1160 + $0x20] sm:$0xff] %vm965, %v1121
          %1166 = vst.msk [vmem:[%s1160 + $0x28] sm:$0xff] %vm965, %v1123
          %1167 = vst.msk [vmem:[%s1160 + $0x30] sm:$0xff] %vm965, %v1125
          %1168 = vst.msk [vmem:[%s1160 + $0x38] sm:$0xff] %vm965, %v1127
          %1169 = vst.msk [vmem:[%s1160 + $0x40] sm:$0xff] %vm965, %v1129
          %1170 = vst.msk [vmem:[%s1160 + $0x48] sm:$0xff] %vm965, %v1131
          %1171 = vst.msk [vmem:[%s1160 + $0x50] sm:$0xff] %vm965, %v1133
          %1172 = vst.msk [vmem:[%s1160 + $0x58] sm:$0xff] %vm965, %v1135
          %1173 = vst.msk [vmem:[%s1160 + $0x60] sm:$0xff] %vm965, %v1137
          %1174 = vst.msk [vmem:[%s1160 + $0x68] sm:$0xff] %vm965, %v1139
          %1175 = vst.msk [vmem:[%s1160 + $0x70] sm:$0xff] %vm965, %v1141
          %1176 = vst.msk [vmem:[%s1160 + $0x78] sm:$0xff] %vm965, %v1143
          %v1177 = vpack.c.bf16 %v826, %v823
          %v1178 = vpack.c.bf16 %v834, %v831
          %v1179 = vpack.c.bf16 %v842, %v839
          %v1180 = vpack.c.bf16 %v850, %v847
          %v1181 = vpack.c.bf16 %v858, %v855
          %v1182 = vpack.c.bf16 %v866, %v863
          %v1183 = vpack.c.bf16 %v874, %v871
          %v1184 = vpack.c.bf16 %v882, %v879
          %v1185 = vpack.c.bf16 %v890, %v887
          %v1186 = vpack.c.bf16 %v898, %v895
          %v1187 = vpack.c.bf16 %v906, %v903
          %v1188 = vpack.c.bf16 %v914, %v911
          %v1189 = vpack.c.bf16 %v922, %v919
          %v1190 = vpack.c.bf16 %v930, %v927
          %v1191 = vpack.c.bf16 %v938, %v935
          %v1192 = vpack.c.bf16 %v946, %v943
          %s1193 = scalar_lea.vmem [#allocation2], 512
          %1194 = vst.msk [vmem:[%s1193] sm:$0xff] %vm965, %v1177
          %1195 = vst.msk [vmem:[%s1193 + $0x8] sm:$0xff] %vm965, %v1178
          %1196 = vst.msk [vmem:[%s1193 + $0x10] sm:$0xff] %vm965, %v1179
          %1197 = vst.msk [vmem:[%s1193 + $0x18] sm:$0xff] %vm965, %v1180
          %1198 = vst.msk [vmem:[%s1193 + $0x20] sm:$0xff] %vm965, %v1181
          %1199 = vst.msk [vmem:[%s1193 + $0x28] sm:$0xff] %vm965, %v1182
          %1200 = vst.msk [vmem:[%s1193 + $0x30] sm:$0xff] %vm965, %v1183
          %1201 = vst.msk [vmem:[%s1193 + $0x38] sm:$0xff] %vm965, %v1184
          %1202 = vst.msk [vmem:[%s1193 + $0x40] sm:$0xff] %vm965, %v1185
          %1203 = vst.msk [vmem:[%s1193 + $0x48] sm:$0xff] %vm965, %v1186
          %1204 = vst.msk [vmem:[%s1193 + $0x50] sm:$0xff] %vm965, %v1187
          %1205 = vst.msk [vmem:[%s1193 + $0x58] sm:$0xff] %vm965, %v1188
          %1206 = vst.msk [vmem:[%s1193 + $0x60] sm:$0xff] %vm965, %v1189
          %1207 = vst.msk [vmem:[%s1193 + $0x68] sm:$0xff] %vm965, %v1190
          %1208 = vst.msk [vmem:[%s1193 + $0x70] sm:$0xff] %vm965, %v1191
          %1209 = vst.msk [vmem:[%s1193 + $0x78] sm:$0xff] %vm965, %v1192
          %1226 = vrot.lane.b32.xlu0 %v1177, 64
          %v1227 = vpop.permute.xlu0 %1226
          %1228 = vrot.lane.b32.xlu0 %v1178, 64
          %v1229 = vpop.permute.xlu0 %1228
          %1230 = vrot.lane.b32.xlu0 %v1179, 64
          %v1231 = vpop.permute.xlu0 %1230
          %1232 = vrot.lane.b32.xlu0 %v1180, 64
          %v1233 = vpop.permute.xlu0 %1232
          %1234 = vrot.lane.b32.xlu0 %v1181, 64
          %v1235 = vpop.permute.xlu0 %1234
          %1236 = vrot.lane.b32.xlu0 %v1182, 64
          %v1237 = vpop.permute.xlu0 %1236
          %1238 = vrot.lane.b32.xlu0 %v1183, 64
          %v1239 = vpop.permute.xlu0 %1238
          %1240 = vrot.lane.b32.xlu0 %v1184, 64
          %v1241 = vpop.permute.xlu0 %1240
          %1242 = vrot.lane.b32.xlu0 %v1185, 64
          %v1243 = vpop.permute.xlu0 %1242
          %1244 = vrot.lane.b32.xlu0 %v1186, 64
          %v1245 = vpop.permute.xlu0 %1244
          %1246 = vrot.lane.b32.xlu0 %v1187, 64
          %v1247 = vpop.permute.xlu0 %1246
          %1248 = vrot.lane.b32.xlu0 %v1188, 64
          %v1249 = vpop.permute.xlu0 %1248
          %1250 = vrot.lane.b32.xlu0 %v1189, 64
          %v1251 = vpop.permute.xlu0 %1250
          %1252 = vrot.lane.b32.xlu0 %v1190, 64
          %v1253 = vpop.permute.xlu0 %1252
          %1254 = vrot.lane.b32.xlu0 %v1191, 64
          %v1255 = vpop.permute.xlu0 %1254
          %1256 = vrot.lane.b32.xlu0 %v1192, 64
          %v1257 = vpop.permute.xlu0 %1256
          %s1274 = scalar_lea.vmem [#allocation2], 640
          %1275 = vst.msk [vmem:[%s1274] sm:$0xff] %vm965, %v1227
          %1276 = vst.msk [vmem:[%s1274 + $0x8] sm:$0xff] %vm965, %v1229
          %1277 = vst.msk [vmem:[%s1274 + $0x10] sm:$0xff] %vm965, %v1231
          %1278 = vst.msk [vmem:[%s1274 + $0x18] sm:$0xff] %vm965, %v1233
          %1279 = vst.msk [vmem:[%s1274 + $0x20] sm:$0xff] %vm965, %v1235
          %1280 = vst.msk [vmem:[%s1274 + $0x28] sm:$0xff] %vm965, %v1237
          %1281 = vst.msk [vmem:[%s1274 + $0x30] sm:$0xff] %vm965, %v1239
          %1282 = vst.msk [vmem:[%s1274 + $0x38] sm:$0xff] %vm965, %v1241
          %1283 = vst.msk [vmem:[%s1274 + $0x40] sm:$0xff] %vm965, %v1243
          %1284 = vst.msk [vmem:[%s1274 + $0x48] sm:$0xff] %vm965, %v1245
          %1285 = vst.msk [vmem:[%s1274 + $0x50] sm:$0xff] %vm965, %v1247
          %1286 = vst.msk [vmem:[%s1274 + $0x58] sm:$0xff] %vm965, %v1249
          %1287 = vst.msk [vmem:[%s1274 + $0x60] sm:$0xff] %vm965, %v1251
          %1288 = vst.msk [vmem:[%s1274 + $0x68] sm:$0xff] %vm965, %v1253
          %1289 = vst.msk [vmem:[%s1274 + $0x70] sm:$0xff] %vm965, %v1255
          %1290 = vst.msk [vmem:[%s1274 + $0x78] sm:$0xff] %vm965, %v1257
        $region60: #{tpu_custom_call.1} parent=39 // pred_fallthru
          _
        %s1291 = smul.u32 %s33, 128
        %s1292 = sshra.s32 %s1291, 3
        %s1293 = sand.u32 %s1291, 7
        %s1294 = smul.addr %s1292, 4
        %s1295 = scalar_lea.vmem %s0, %s1294
        %v1296 = vld [vmem:[%s1295] sm:$0xf]
        %v1297 = vld [vmem:[%s1295 + $0x4] sm:$0xf]
        %v1298 = vld [vmem:[%s1295 + $0x8] sm:$0xf]
        %v1299 = vld [vmem:[%s1295 + $0xc] sm:$0xf]
        %v1300 = vld [vmem:[%s1295 + $0x10] sm:$0xf]
        %v1301 = vld [vmem:[%s1295 + $0x14] sm:$0xf]
        %v1302 = vld [vmem:[%s1295 + $0x18] sm:$0xf]
        %v1303 = vld [vmem:[%s1295 + $0x1c] sm:$0xf]
        %v1304 = vld [vmem:[%s1295 + $0x20] sm:$0xf]
        %v1305 = vld [vmem:[%s1295 + $0x24] sm:$0xf]
        %v1306 = vld [vmem:[%s1295 + $0x28] sm:$0xf]
        %v1307 = vld [vmem:[%s1295 + $0x2c] sm:$0xf]
        %v1308 = vld [vmem:[%s1295 + $0x30] sm:$0xf]
        %v1309 = vld [vmem:[%s1295 + $0x34] sm:$0xf]
        %v1310 = vld [vmem:[%s1295 + $0x38] sm:$0xf]
        %v1311 = vld [vmem:[%s1295 + $0x3c] sm:$0xf]
        %v1312 = vld [vmem:[%s301] sm:$0xff]
        %v1313 = vld [vmem:[%s301 + $0x8] sm:$0xf]
        %v1314 = vld [vmem:[%s301 + $0xc] sm:$0xff]
        %v1315 = vld [vmem:[%s301 + $0x14] sm:$0xf]
        %v1316 = vld [vmem:[%s301 + $0x18] sm:$0xff]
        %v1317 = vld [vmem:[%s301 + $0x20] sm:$0xf]
        %v1318 = vld [vmem:[%s301 + $0x24] sm:$0xff]
        %v1319 = vld [vmem:[%s301 + $0x2c] sm:$0xf]
        %v1320 = vld [vmem:[%s310] sm:$0x7]
        %v1322 = vlaneseq
        %v1323 = vshrl.u32 %v1322, 7
        %v1324 = vsub.s32 0, %v1323
        %v1325 = vrot.slane %v1320, %v1324
        %v1326 = vlaneseq
        %v1327 = vshrl.u32 %v1326, 7
        %v1328 = vsub.s32 1, %v1327
        %v1329 = vrot.slane %v1320, %v1328
        %v1330 = vlaneseq
        %v1331 = vshrl.u32 %v1330, 7
        %v1332 = vsub.s32 2, %v1331
        %v1333 = vrot.slane %v1320, %v1332
        %v1353 = vunpack.c.l.b16 %v1296
        %v1354 = vunpack.c.l.b16 %v1297
        %v1355 = vunpack.c.l.b16 %v1298
        %v1356 = vunpack.c.l.b16 %v1299
        %v1357 = vunpack.c.l.b16 %v1300
        %v1358 = vunpack.c.l.b16 %v1301
        %v1359 = vunpack.c.l.b16 %v1302
        %v1360 = vunpack.c.l.b16 %v1303
        %v1361 = vunpack.c.l.b16 %v1304
        %v1362 = vunpack.c.l.b16 %v1305
        %v1363 = vunpack.c.l.b16 %v1306
        %v1364 = vunpack.c.l.b16 %v1307
        %v1365 = vunpack.c.l.b16 %v1308
        %v1366 = vunpack.c.l.b16 %v1309
        %v1367 = vunpack.c.l.b16 %v1310
        %v1368 = vunpack.c.l.b16 %v1311
        %v1369 = vpack.c.b16 %v1354, %v1353
        %v1370 = vpack.c.b16 %v1356, %v1355
        %v1371 = vpack.c.b16 %v1358, %v1357
        %v1372 = vpack.c.b16 %v1360, %v1359
        %v1373 = vpack.c.b16 %v1362, %v1361
        %v1374 = vpack.c.b16 %v1364, %v1363
        %v1375 = vpack.c.b16 %v1366, %v1365
        %v1376 = vpack.c.b16 %v1368, %v1367
        %v1385 = vunpack.c.l.b16 %v1312
        %v1386 = vunpack.c.h.b16 %v1312
        %v1387 = vunpack.c.l.b16 %v1313
        %v1388 = vunpack.c.l.b16 %v1314
        %v1389 = vunpack.c.h.b16 %v1314
        %v1390 = vunpack.c.l.b16 %v1315
        %v1391 = vunpack.c.l.b16 %v1316
        %v1392 = vunpack.c.h.b16 %v1316
        %v1393 = vunpack.c.l.b16 %v1317
        %v1394 = vunpack.c.l.b16 %v1318
        %v1395 = vunpack.c.h.b16 %v1318
        %v1396 = vunpack.c.l.b16 %v1319
        %v1397 = vpack.c.b16 %v1388, %v1385
        %v1398 = vpack.c.b16 %v1389, %v1386
        %v1399 = vpack.c.b16 %v1390, %v1387
        %v1400 = vpack.c.b16 %v1394, %v1391
        %v1401 = vpack.c.b16 %v1395, %v1392
        %v1402 = vpack.c.b16 %v1396, %v1393
        %vm1409 = vcmask 261120
        %v1411 = vsel %vm1409, %v1369, 0
        %v1414 = vsel %vm1409, %v1370, 0
        %v1417 = vsel %vm1409, %v1371, 0
        %v1420 = vsel %vm1409, %v1372, 0
        %v1423 = vsel %vm1409, %v1373, 0
        %v1426 = vsel %vm1409, %v1374, 0
        %v1429 = vsel %vm1409, %v1375, 0
        %v1432 = vsel %vm1409, %v1376, 0
        %1434 = vmatprep.subr.bf16.mxu0 %v1398
        %1435 = vmatpush1.bf16.msra.mxu0 %v1397
        %1436 = vmatprep.subr.bf16.mxu0 %v1401
        %1437 = vmatpush1.bf16.msra.mxu0 %v1400
        %1438 = vmatprep.subr.bf16.mxu0 0
        %1439 = vmatpush1.bf16.msra.mxu0 0
        %1440 = vmatprep.subr.bf16.mxu0 0
        %1441 = vmatpush1.bf16.msra.mxu0 0
        %1442 = vmatprep.subr.bf16.mxu0 0
        %1443 = vmatpush1.bf16.msra.mxu0 0
        %1444 = vmatprep.subr.bf16.mxu0 0
        %1445 = vmatpush1.bf16.msra.mxu0 0
        %1446 = vmatprep.subr.bf16.mxu0 0
        %1447 = vmatpush1.bf16.msra.mxu0 0
        %1448 = vmatprep.subr.bf16.mxu0 0
        %1449 = vmatpush1.bf16.msra.mxu0 0
        %1450 = vmatprep.subr.bf16.mxu0 0
        %1451 = vmatpush1.bf16.msra.mxu0 0
        %1452 = vmatprep.subr.bf16.mxu0 0
        %1453 = vmatpush1.bf16.msra.mxu0 0
        %1454 = vmatprep.subr.bf16.mxu0 0
        %1455 = vmatpush1.bf16.msra.mxu0 0
        %1456 = vmatprep.subr.bf16.mxu0 0
        %1457 = vmatpush1.bf16.msra.mxu0 0
        %1458 = vmatprep.subr.bf16.mxu0 0
        %1459 = vmatpush1.bf16.msra.mxu0 0
        %1460 = vmatprep.subr.bf16.mxu0 0
        %1461 = vmatpush1.bf16.msra.mxu0 0
        %1462 = vmatprep.subr.bf16.mxu0 0
        %1463 = vmatpush1.bf16.msra.mxu0 0
        %1464 = vmatprep.subr.bf16.mxu0 0
        %1465 = vmatpush1.bf16.msra.mxu0 0
        %1466 = vmatprep.mubr.bf16.mxu0 0
        %1467 = vmatmul.mubr.bf16.gmra.mrb[0].mxu0 %v1411
        %v1468 = vpop.f32.mrb[0].mxu0
        %v1469 = vadd.f32 %v1325, %v1468
        %v1470 = vpop.f32.mrb[0].mxu0
        %v1471 = vadd.f32 %v1329, %v1470
        %v1472 = vpop.f32.mrb[0].mxu0
        %v1473 = vadd.f32 %v1325, %v1472
        %v1474 = vpop.f32.mrb[0].mxu0
        %v1475 = vadd.f32 %v1329, %v1474
        %1476 = vmatprep.mubr.bf16.mxu0 0
        %1477 = vmatmul.mubr.bf16.gmra.mrb[0].mxu0 %v1414
        %v1478 = vpop.f32.mrb[0].mxu0
        %v1479 = vadd.f32 %v1325, %v1478
        %v1480 = vpop.f32.mrb[0].mxu0
        %v1481 = vadd.f32 %v1329, %v1480
        %v1482 = vpop.f32.mrb[0].mxu0
        %v1483 = vadd.f32 %v1325, %v1482
        %v1484 = vpop.f32.mrb[0].mxu0
        %v1485 = vadd.f32 %v1329, %v1484
        %1486 = vmatprep.mubr.bf16.mxu0 0
        %1487 = vmatmul.mubr.bf16.gmra.mrb[0].mxu0 %v1417
        %v1488 = vpop.f32.mrb[0].mxu0
        %v1489 = vadd.f32 %v1325, %v1488
        %v1490 = vpop.f32.mrb[0].mxu0
        %v1491 = vadd.f32 %v1329, %v1490
        %v1492 = vpop.f32.mrb[0].mxu0
        %v1493 = vadd.f32 %v1325, %v1492
        %v1494 = vpop.f32.mrb[0].mxu0
        %v1495 = vadd.f32 %v1329, %v1494
        %1496 = vmatprep.mubr.bf16.mxu0 0
        %1497 = vmatmul.mubr.bf16.gmra.mrb[0].mxu0 %v1420
        %v1498 = vpop.f32.mrb[0].mxu0
        %v1499 = vadd.f32 %v1325, %v1498
        %v1500 = vpop.f32.mrb[0].mxu0
        %v1501 = vadd.f32 %v1329, %v1500
        %v1502 = vpop.f32.mrb[0].mxu0
        %v1503 = vadd.f32 %v1325, %v1502
        %v1504 = vpop.f32.mrb[0].mxu0
        %v1505 = vadd.f32 %v1329, %v1504
        %1506 = vmatprep.mubr.bf16.mxu0 0
        %1507 = vmatmul.mubr.bf16.gmra.mrb[0].mxu0 %v1423
        %v1508 = vpop.f32.mrb[0].mxu0
        %v1509 = vadd.f32 %v1325, %v1508
        %v1510 = vpop.f32.mrb[0].mxu0
        %v1511 = vadd.f32 %v1329, %v1510
        %v1512 = vpop.f32.mrb[0].mxu0
        %v1513 = vadd.f32 %v1325, %v1512
        %v1514 = vpop.f32.mrb[0].mxu0
        %v1515 = vadd.f32 %v1329, %v1514
        %1516 = vmatprep.mubr.bf16.mxu0 0
        %1517 = vmatmul.mubr.bf16.gmra.mrb[0].mxu0 %v1426
        %v1518 = vpop.f32.mrb[0].mxu0
        %v1519 = vadd.f32 %v1325, %v1518
        %v1520 = vpop.f32.mrb[0].mxu0
        %v1521 = vadd.f32 %v1329, %v1520
        %v1522 = vpop.f32.mrb[0].mxu0
        %v1523 = vadd.f32 %v1325, %v1522
        %v1524 = vpop.f32.mrb[0].mxu0
        %v1525 = vadd.f32 %v1329, %v1524
        %1526 = vmatprep.mubr.bf16.mxu0 0
        %1527 = vmatmul.mubr.bf16.gmra.mrb[0].mxu0 %v1429
        %v1528 = vpop.f32.mrb[0].mxu0
        %v1529 = vadd.f32 %v1325, %v1528
        %v1530 = vpop.f32.mrb[0].mxu0
        %v1531 = vadd.f32 %v1329, %v1530
        %v1532 = vpop.f32.mrb[0].mxu0
        %v1533 = vadd.f32 %v1325, %v1532
        %v1534 = vpop.f32.mrb[0].mxu0
        %v1535 = vadd.f32 %v1329, %v1534
        %1536 = vmatprep.mubr.bf16.mxu0 0
        %1537 = vmatmul.mubr.bf16.gmra.mrb[0].mxu0 %v1432
        %v1538 = vpop.f32.mrb[0].mxu0
        %v1539 = vadd.f32 %v1325, %v1538
        %v1540 = vpop.f32.mrb[0].mxu0
        %v1541 = vadd.f32 %v1329, %v1540
        %v1542 = vpop.f32.mrb[0].mxu0
        %v1543 = vadd.f32 %v1325, %v1542
        %v1544 = vpop.f32.mrb[0].mxu0
        %v1545 = vadd.f32 %v1329, %v1544
        %1546 = vdwg.mxu0
        %1547 = vmatprep.subr.bf16.mxu0 0
        %1548 = vmatpush1.bf16.msra.mxu0 %v1399
        %1549 = vmatprep.subr.bf16.mxu0 0
        %1550 = vmatpush1.bf16.msra.mxu0 %v1402
        %1551 = vmatprep.subr.bf16.mxu0 0
        %1552 = vmatpush1.bf16.msra.mxu0 0
        %1553 = vmatprep.subr.bf16.mxu0 0
        %1554 = vmatpush1.bf16.msra.mxu0 0
        %1555 = vmatprep.subr.bf16.mxu0 0
        %1556 = vmatpush1.bf16.msra.mxu0 0
        %1557 = vmatprep.subr.bf16.mxu0 0
        %1558 = vmatpush1.bf16.msra.mxu0 0
        %1559 = vmatprep.subr.bf16.mxu0 0
        %1560 = vmatpush1.bf16.msra.mxu0 0
        %1561 = vmatprep.subr.bf16.mxu0 0
        %1562 = vmatpush1.bf16.msra.mxu0 0
        %1563 = vmatprep.subr.bf16.mxu0 0
        %1564 = vmatpush1.bf16.msra.mxu0 0
        %1565 = vmatprep.subr.bf16.mxu0 0
        %1566 = vmatpush1.bf16.msra.mxu0 0
        %1567 = vmatprep.subr.bf16.mxu0 0
        %1568 = vmatpush1.bf16.msra.mxu0 0
        %1569 = vmatprep.subr.bf16.mxu0 0
        %1570 = vmatpush1.bf16.msra.mxu0 0
        %1571 = vmatprep.subr.bf16.mxu0 0
        %1572 = vmatpush1.bf16.msra.mxu0 0
        %1573 = vmatprep.subr.bf16.mxu0 0
        %1574 = vmatpush1.bf16.msra.mxu0 0
        %1575 = vmatprep.subr.bf16.mxu0 0
        %1576 = vmatpush1.bf16.msra.mxu0 0
        %1577 = vmatprep.subr.bf16.mxu0 0
        %1578 = vmatpush1.bf16.msra.mxu0 0
        %1579 = vmatprep.mubr.bf16.mxu0 0
        %1580 = vmatmul.mubr.bf16.gmra.mrb[0].mxu0 %v1411
        %v1581 = vpop.f32.mrb[0].mxu0
        %v1582 = vadd.f32 %v1333, %v1581
        %v1583 = vpop.f32.mrb[0].mxu0
        %v1584 = vpop.f32.mrb[0].mxu0
        %v1585 = vadd.f32 %v1333, %v1584
        %v1586 = vpop.f32.mrb[0].mxu0
        %1587 = vmatprep.mubr.bf16.mxu0 0
        %1588 = vmatmul.mubr.bf16.gmra.mrb[0].mxu0 %v1414
        %v1589 = vpop.f32.mrb[0].mxu0
        %v1590 = vadd.f32 %v1333, %v1589
        %v1591 = vpop.f32.mrb[0].mxu0
        %v1592 = vpop.f32.mrb[0].mxu0
        %v1593 = vadd.f32 %v1333, %v1592
        %v1594 = vpop.f32.mrb[0].mxu0
        %1595 = vmatprep.mubr.bf16.mxu0 0
        %1596 = vmatmul.mubr.bf16.gmra.mrb[0].mxu0 %v1417
        %v1597 = vpop.f32.mrb[0].mxu0
        %v1598 = vadd.f32 %v1333, %v1597
        %v1599 = vpop.f32.mrb[0].mxu0
        %v1600 = vpop.f32.mrb[0].mxu0
        %v1601 = vadd.f32 %v1333, %v1600
        %v1602 = vpop.f32.mrb[0].mxu0
        %1603 = vmatprep.mubr.bf16.mxu0 0
        %1604 = vmatmul.mubr.bf16.gmra.mrb[0].mxu0 %v1420
        %v1605 = vpop.f32.mrb[0].mxu0
        %v1606 = vadd.f32 %v1333, %v1605
        %v1607 = vpop.f32.mrb[0].mxu0
        %v1608 = vpop.f32.mrb[0].mxu0
        %v1609 = vadd.f32 %v1333, %v1608
        %v1610 = vpop.f32.mrb[0].mxu0
        %1611 = vmatprep.mubr.bf16.mxu0 0
        %1612 = vmatmul.mubr.bf16.gmra.mrb[0].mxu0 %v1423
        %v1613 = vpop.f32.mrb[0].mxu0
        %v1614 = vadd.f32 %v1333, %v1613
        %v1615 = vpop.f32.mrb[0].mxu0
        %v1616 = vpop.f32.mrb[0].mxu0
        %v1617 = vadd.f32 %v1333, %v1616
        %v1618 = vpop.f32.mrb[0].mxu0
        %1619 = vmatprep.mubr.bf16.mxu0 0
        %1620 = vmatmul.mubr.bf16.gmra.mrb[0].mxu0 %v1426
        %v1621 = vpop.f32.mrb[0].mxu0
        %v1622 = vadd.f32 %v1333, %v1621
        %v1623 = vpop.f32.mrb[0].mxu0
        %v1624 = vpop.f32.mrb[0].mxu0
        %v1625 = vadd.f32 %v1333, %v1624
        %v1626 = vpop.f32.mrb[0].mxu0
        %1627 = vmatprep.mubr.bf16.mxu0 0
        %1628 = vmatmul.mubr.bf16.gmra.mrb[0].mxu0 %v1429
        %v1629 = vpop.f32.mrb[0].mxu0
        %v1630 = vadd.f32 %v1333, %v1629
        %v1631 = vpop.f32.mrb[0].mxu0
        %v1632 = vpop.f32.mrb[0].mxu0
        %v1633 = vadd.f32 %v1333, %v1632
        %v1634 = vpop.f32.mrb[0].mxu0
        %1635 = vmatprep.mubr.bf16.mxu0 0
        %1636 = vmatmul.mubr.bf16.gmra.mrb[0].mxu0 %v1432
        %v1637 = vpop.f32.mrb[0].mxu0
        %v1638 = vadd.f32 %v1333, %v1637
        %v1639 = vpop.f32.mrb[0].mxu0
        %v1640 = vpop.f32.mrb[0].mxu0
        %v1641 = vadd.f32 %v1333, %v1640
        %v1642 = vpop.f32.mrb[0].mxu0
        %1643 = vdwg.mxu0
        %v1644 = vpack.c.bf16 %v1473, %v1469
        %v1645 = vpack.c.bf16 %v1475, %v1471
        %v1646 = vpack.c.bf16 %v1585, %v1582
        %v1647 = vpack.c.bf16 %v1483, %v1479
        %v1648 = vpack.c.bf16 %v1485, %v1481
        %v1649 = vpack.c.bf16 %v1593, %v1590
        %v1650 = vpack.c.bf16 %v1493, %v1489
        %v1651 = vpack.c.bf16 %v1495, %v1491
        %v1652 = vpack.c.bf16 %v1601, %v1598
        %v1653 = vpack.c.bf16 %v1503, %v1499
        %v1654 = vpack.c.bf16 %v1505, %v1501
        %v1655 = vpack.c.bf16 %v1609, %v1606
        %v1656 = vpack.c.bf16 %v1513, %v1509
        %v1657 = vpack.c.bf16 %v1515, %v1511
        %v1658 = vpack.c.bf16 %v1617, %v1614
        %v1659 = vpack.c.bf16 %v1523, %v1519
        %v1660 = vpack.c.bf16 %v1525, %v1521
        %v1661 = vpack.c.bf16 %v1625, %v1622
        %v1662 = vpack.c.bf16 %v1533, %v1529
        %v1663 = vpack.c.bf16 %v1535, %v1531
        %v1664 = vpack.c.bf16 %v1633, %v1630
        %v1665 = vpack.c.bf16 %v1543, %v1539
        %v1666 = vpack.c.bf16 %v1545, %v1541
        %v1667 = vpack.c.bf16 %v1641, %v1638
        %v1668 = vld [vmem:[#allocation2] sm:$0xff]
        %v1669 = vld [vmem:[#allocation2 + $0x8] sm:$0xff]
        %v1670 = vld [vmem:[#allocation2 + $0x10] sm:$0xff]
        %v1671 = vld [vmem:[#allocation2 + $0x18] sm:$0xff]
        %v1672 = vld [vmem:[#allocation2 + $0x20] sm:$0xff]
        %v1673 = vld [vmem:[#allocation2 + $0x28] sm:$0xff]
        %v1674 = vld [vmem:[#allocation2 + $0x30] sm:$0xff]
        %v1675 = vld [vmem:[#allocation2 + $0x38] sm:$0xff]
        %v1676 = vld [vmem:[#allocation2 + $0x40] sm:$0xff]
        %v1677 = vld [vmem:[#allocation2 + $0x48] sm:$0xff]
        %v1678 = vld [vmem:[#allocation2 + $0x50] sm:$0xff]
        %v1679 = vld [vmem:[#allocation2 + $0x58] sm:$0xff]
        %v1680 = vld [vmem:[#allocation2 + $0x60] sm:$0xff]
        %v1681 = vld [vmem:[#allocation2 + $0x68] sm:$0xff]
        %v1682 = vld [vmem:[#allocation2 + $0x70] sm:$0xff]
        %v1683 = vld [vmem:[#allocation2 + $0x78] sm:$0xff]
        %vm1684 = vcmask 523264
        %v1686 = vsel %vm1684, %v1644, 0
        %v1689 = vsel %vm1684, %v1647, 0
        %v1692 = vsel %vm1684, %v1650, 0
        %v1695 = vsel %vm1684, %v1653, 0
        %v1698 = vsel %vm1684, %v1656, 0
        %v1701 = vsel %vm1684, %v1659, 0
        %v1704 = vsel %vm1684, %v1662, 0
        %v1707 = vsel %vm1684, %v1665, 0
        %v1710 = vsel %vm1684, %v1668, 0
        %v1713 = vsel %vm1684, %v1669, 0
        %v1716 = vsel %vm1684, %v1670, 0
        %v1719 = vsel %vm1684, %v1671, 0
        %v1722 = vsel %vm1684, %v1672, 0
        %v1725 = vsel %vm1684, %v1673, 0
        %v1728 = vsel %vm1684, %v1674, 0
        %v1731 = vsel %vm1684, %v1675, 0
        %v1734 = vsel %vm1684, %v1676, 0
        %v1737 = vsel %vm1684, %v1677, 0
        %v1740 = vsel %vm1684, %v1678, 0
        %v1743 = vsel %vm1684, %v1679, 0
        %v1746 = vsel %vm1684, %v1680, 0
        %v1749 = vsel %vm1684, %v1681, 0
        %v1752 = vsel %vm1684, %v1682, 0
        %v1755 = vsel %vm1684, %v1683, 0
        %1757 = vmatprep.subr.bf16.mxu0 0
        %1758 = vmatpush1.bf16.xpose.msra.mxu0 %v1710
        %1759 = vmatprep.subr.bf16.mxu0 0
        %1760 = vmatpush1.bf16.xpose.msra.mxu0 %v1713
        %1761 = vmatprep.subr.bf16.mxu0 0
        %1762 = vmatpush1.bf16.xpose.msra.mxu0 %v1716
        %1763 = vmatprep.subr.bf16.mxu0 0
        %1764 = vmatpush1.bf16.xpose.msra.mxu0 %v1719
        %1765 = vmatprep.subr.bf16.mxu0 0
        %1766 = vmatpush1.bf16.xpose.msra.mxu0 %v1722
        %1767 = vmatprep.subr.bf16.mxu0 0
        %1768 = vmatpush1.bf16.xpose.msra.mxu0 %v1725
        %1769 = vmatprep.subr.bf16.mxu0 0
        %1770 = vmatpush1.bf16.xpose.msra.mxu0 %v1728
        %1771 = vmatprep.subr.bf16.mxu0 0
        %1772 = vmatpush1.bf16.xpose.msra.mxu0 %v1731
        %1773 = vmatprep.subr.bf16.mxu0 0
        %1774 = vmatpush1.bf16.xpose.msra.mxu0 %v1734
        %1775 = vmatprep.subr.bf16.mxu0 0
        %1776 = vmatpush1.bf16.xpose.msra.mxu0 %v1737
        %1777 = vmatprep.subr.bf16.mxu0 0
        %1778 = vmatpush1.bf16.xpose.msra.mxu0 %v1740
        %1779 = vmatprep.subr.bf16.mxu0 0
        %1780 = vmatpush1.bf16.xpose.msra.mxu0 %v1743
        %1781 = vmatprep.subr.bf16.mxu0 0
        %1782 = vmatpush1.bf16.xpose.msra.mxu0 %v1746
        %1783 = vmatprep.subr.bf16.mxu0 0
        %1784 = vmatpush1.bf16.xpose.msra.mxu0 %v1749
        %1785 = vmatprep.subr.bf16.mxu0 0
        %1786 = vmatpush1.bf16.xpose.msra.mxu0 %v1752
        %1787 = vmatprep.subr.bf16.mxu0 0
        %1788 = vmatpush1.bf16.xpose.msra.mxu0 %v1755
        %1789 = vmatprep.mubr.bf16.mxu0 0
        %1790 = vmatmul.mubr.bf16.gmra.mrb[0].mxu0 %v1686
        %v1791 = vpop.f32.mrb[0].mxu0
        %v1792 = vadd.f32 0.0, %v1791
        %v1793 = vpop.f32.mrb[0].mxu0
        %v1794 = vadd.f32 0.0, %v1793
        %v1795 = vpop.f32.mrb[0].mxu0
        %v1796 = vadd.f32 0.0, %v1795
        %v1797 = vpop.f32.mrb[0].mxu0
        %v1798 = vadd.f32 0.0, %v1797
        %1799 = vmatprep.mubr.bf16.mxu0 0
        %1800 = vmatmul.mubr.bf16.gmra.mrb[0].mxu0 %v1689
        %v1801 = vpop.f32.mrb[0].mxu0
        %v1802 = vadd.f32 0.0, %v1801
        %v1803 = vpop.f32.mrb[0].mxu0
        %v1804 = vadd.f32 0.0, %v1803
        %v1805 = vpop.f32.mrb[0].mxu0
        %v1806 = vadd.f32 0.0, %v1805
        %v1807 = vpop.f32.mrb[0].mxu0
        %v1808 = vadd.f32 0.0, %v1807
        %1809 = vmatprep.mubr.bf16.mxu0 0
        %1810 = vmatmul.mubr.bf16.gmra.mrb[0].mxu0 %v1692
        %v1811 = vpop.f32.mrb[0].mxu0
        %v1812 = vadd.f32 0.0, %v1811
        %v1813 = vpop.f32.mrb[0].mxu0
        %v1814 = vadd.f32 0.0, %v1813
        %v1815 = vpop.f32.mrb[0].mxu0
        %v1816 = vadd.f32 0.0, %v1815
        %v1817 = vpop.f32.mrb[0].mxu0
        %v1818 = vadd.f32 0.0, %v1817
        %1819 = vmatprep.mubr.bf16.mxu0 0
        %1820 = vmatmul.mubr.bf16.gmra.mrb[0].mxu0 %v1695
        %v1821 = vpop.f32.mrb[0].mxu0
        %v1822 = vadd.f32 0.0, %v1821
        %v1823 = vpop.f32.mrb[0].mxu0
        %v1824 = vadd.f32 0.0, %v1823
        %v1825 = vpop.f32.mrb[0].mxu0
        %v1826 = vadd.f32 0.0, %v1825
        %v1827 = vpop.f32.mrb[0].mxu0
        %v1828 = vadd.f32 0.0, %v1827
        %1829 = vmatprep.mubr.bf16.mxu0 0
        %1830 = vmatmul.mubr.bf16.gmra.mrb[0].mxu0 %v1698
        %v1831 = vpop.f32.mrb[0].mxu0
        %v1832 = vadd.f32 0.0, %v1831
        %v1833 = vpop.f32.mrb[0].mxu0
        %v1834 = vadd.f32 0.0, %v1833
        %v1835 = vpop.f32.mrb[0].mxu0
        %v1836 = vadd.f32 0.0, %v1835
        %v1837 = vpop.f32.mrb[0].mxu0
        %v1838 = vadd.f32 0.0, %v1837
        %1839 = vmatprep.mubr.bf16.mxu0 0
        %1840 = vmatmul.mubr.bf16.gmra.mrb[0].mxu0 %v1701
        %v1841 = vpop.f32.mrb[0].mxu0
        %v1842 = vadd.f32 0.0, %v1841
        %v1843 = vpop.f32.mrb[0].mxu0
        %v1844 = vadd.f32 0.0, %v1843
        %v1845 = vpop.f32.mrb[0].mxu0
        %v1846 = vadd.f32 0.0, %v1845
        %v1847 = vpop.f32.mrb[0].mxu0
        %v1848 = vadd.f32 0.0, %v1847
        %1849 = vmatprep.mubr.bf16.mxu0 0
        %1850 = vmatmul.mubr.bf16.gmra.mrb[0].mxu0 %v1704
        %v1851 = vpop.f32.mrb[0].mxu0
        %v1852 = vadd.f32 0.0, %v1851
        %v1853 = vpop.f32.mrb[0].mxu0
        %v1854 = vadd.f32 0.0, %v1853
        %v1855 = vpop.f32.mrb[0].mxu0
        %v1856 = vadd.f32 0.0, %v1855
        %v1857 = vpop.f32.mrb[0].mxu0
        %v1858 = vadd.f32 0.0, %v1857
        %1859 = vmatprep.mubr.bf16.mxu0 0
        %1860 = vmatmul.mubr.bf16.gmra.mrb[0].mxu0 %v1707
        %v1861 = vpop.f32.mrb[0].mxu0
        %v1862 = vadd.f32 0.0, %v1861
        %v1863 = vpop.f32.mrb[0].mxu0
        %v1864 = vadd.f32 0.0, %v1863
        %v1865 = vpop.f32.mrb[0].mxu0
        %v1866 = vadd.f32 0.0, %v1865
        %v1867 = vpop.f32.mrb[0].mxu0
        %v1868 = vadd.f32 0.0, %v1867
        %1869 = vdwg.mxu0
        %v1870 = vmax.f32 %v1792, %v1794
        %1871 = vmax.xlane.f32.xlu0 %v1870
        %v1872 = vpop.xlane.xlu0 %1871
        %v1873 = vmax.f32 %v1796, %v1798
        %1874 = vmax.xlane.f32.xlu0 %v1873
        %v1875 = vpop.xlane.xlu0 %1874
        %v1876 = vmax.f32 %v1802, %v1804
        %1877 = vmax.xlane.f32.xlu0 %v1876
        %v1878 = vpop.xlane.xlu0 %1877
        %v1879 = vmax.f32 %v1806, %v1808
        %1880 = vmax.xlane.f32.xlu0 %v1879
        %v1881 = vpop.xlane.xlu0 %1880
        %v1882 = vmax.f32 %v1812, %v1814
        %1883 = vmax.xlane.f32.xlu0 %v1882
        %v1884 = vpop.xlane.xlu0 %1883
        %v1885 = vmax.f32 %v1816, %v1818
        %1886 = vmax.xlane.f32.xlu0 %v1885
        %v1887 = vpop.xlane.xlu0 %1886
        %v1888 = vmax.f32 %v1822, %v1824
        %1889 = vmax.xlane.f32.xlu0 %v1888
        %v1890 = vpop.xlane.xlu0 %1889
        %v1891 = vmax.f32 %v1826, %v1828
        %1892 = vmax.xlane.f32.xlu0 %v1891
        %v1893 = vpop.xlane.xlu0 %1892
        %v1894 = vmax.f32 %v1832, %v1834
        %1895 = vmax.xlane.f32.xlu0 %v1894
        %v1896 = vpop.xlane.xlu0 %1895
        %v1897 = vmax.f32 %v1836, %v1838
        %1898 = vmax.xlane.f32.xlu0 %v1897
        %v1899 = vpop.xlane.xlu0 %1898
        %v1900 = vmax.f32 %v1842, %v1844
        %1901 = vmax.xlane.f32.xlu0 %v1900
        %v1902 = vpop.xlane.xlu0 %1901
        %v1903 = vmax.f32 %v1846, %v1848
        %1904 = vmax.xlane.f32.xlu0 %v1903
        %v1905 = vpop.xlane.xlu0 %1904
        %v1906 = vmax.f32 %v1852, %v1854
        %1907 = vmax.xlane.f32.xlu0 %v1906
        %v1908 = vpop.xlane.xlu0 %1907
        %v1909 = vmax.f32 %v1856, %v1858
        %1910 = vmax.xlane.f32.xlu0 %v1909
        %v1911 = vpop.xlane.xlu0 %1910
        %v1912 = vmax.f32 %v1862, %v1864
        %1913 = vmax.xlane.f32.xlu0 %v1912
        %v1914 = vpop.xlane.xlu0 %1913
        %v1915 = vmax.f32 %v1866, %v1868
        %1916 = vmax.xlane.f32.xlu0 %v1915
        %v1917 = vpop.xlane.xlu0 %1916
        %v1918 = vsub.f32 %v1792, %v1872
        %v1919 = vsub.f32 %v1794, %v1872
        %v1920 = vsub.f32 %v1796, %v1875
        %v1921 = vsub.f32 %v1798, %v1875
        %v1922 = vsub.f32 %v1802, %v1878
        %v1923 = vsub.f32 %v1804, %v1878
        %v1924 = vsub.f32 %v1806, %v1881
        %v1925 = vsub.f32 %v1808, %v1881
        %v1926 = vsub.f32 %v1812, %v1884
        %v1927 = vsub.f32 %v1814, %v1884
        %v1928 = vsub.f32 %v1816, %v1887
        %v1929 = vsub.f32 %v1818, %v1887
        %v1930 = vsub.f32 %v1822, %v1890
        %v1931 = vsub.f32 %v1824, %v1890
        %v1932 = vsub.f32 %v1826, %v1893
        %v1933 = vsub.f32 %v1828, %v1893
        %v1934 = vsub.f32 %v1832, %v1896
        %v1935 = vsub.f32 %v1834, %v1896
        %v1936 = vsub.f32 %v1836, %v1899
        %v1937 = vsub.f32 %v1838, %v1899
        %v1938 = vsub.f32 %v1842, %v1902
        %v1939 = vsub.f32 %v1844, %v1902
        %v1940 = vsub.f32 %v1846, %v1905
        %v1941 = vsub.f32 %v1848, %v1905
        %v1942 = vsub.f32 %v1852, %v1908
        %v1943 = vsub.f32 %v1854, %v1908
        %v1944 = vsub.f32 %v1856, %v1911
        %v1945 = vsub.f32 %v1858, %v1911
        %v1946 = vsub.f32 %v1862, %v1914
        %v1947 = vsub.f32 %v1864, %v1914
        %v1948 = vsub.f32 %v1866, %v1917
        %v1949 = vsub.f32 %v1868, %v1917
        %v1950 = vmul.f32 %v1918, 1.442695
        %v1951 = vpow.pop %v1950
        %v1952 = vmul.f32 %v1919, 1.442695
        %v1953 = vpow.pop %v1952
        %v1954 = vmul.f32 %v1920, 1.442695
        %v1955 = vpow.pop %v1954
        %v1956 = vmul.f32 %v1921, 1.442695
        %v1957 = vpow.pop %v1956
        %v1958 = vmul.f32 %v1922, 1.442695
        %v1959 = vpow.pop %v1958
        %v1960 = vmul.f32 %v1923, 1.442695
        %v1961 = vpow.pop %v1960
        %v1962 = vmul.f32 %v1924, 1.442695
        %v1963 = vpow.pop %v1962
        %v1964 = vmul.f32 %v1925, 1.442695
        %v1965 = vpow.pop %v1964
        %v1966 = vmul.f32 %v1926, 1.442695
        %v1967 = vpow.pop %v1966
        %v1968 = vmul.f32 %v1927, 1.442695
        %v1969 = vpow.pop %v1968
        %v1970 = vmul.f32 %v1928, 1.442695
        %v1971 = vpow.pop %v1970
        %v1972 = vmul.f32 %v1929, 1.442695
        %v1973 = vpow.pop %v1972
        %v1974 = vmul.f32 %v1930, 1.442695
        %v1975 = vpow.pop %v1974
        %v1976 = vmul.f32 %v1931, 1.442695
        %v1977 = vpow.pop %v1976
        %v1978 = vmul.f32 %v1932, 1.442695
        %v1979 = vpow.pop %v1978
        %v1980 = vmul.f32 %v1933, 1.442695
        %v1981 = vpow.pop %v1980
        %v1982 = vmul.f32 %v1934, 1.442695
        %v1983 = vpow.pop %v1982
        %v1984 = vmul.f32 %v1935, 1.442695
        %v1985 = vpow.pop %v1984
        %v1986 = vmul.f32 %v1936, 1.442695
        %v1987 = vpow.pop %v1986
        %v1988 = vmul.f32 %v1937, 1.442695
        %v1989 = vpow.pop %v1988
        %v1990 = vmul.f32 %v1938, 1.442695
        %v1991 = vpow.pop %v1990
        %v1992 = vmul.f32 %v1939, 1.442695
        %v1993 = vpow.pop %v1992
        %v1994 = vmul.f32 %v1940, 1.442695
        %v1995 = vpow.pop %v1994
        %v1996 = vmul.f32 %v1941, 1.442695
        %v1997 = vpow.pop %v1996
        %v1998 = vmul.f32 %v1942, 1.442695
        %v1999 = vpow.pop %v1998
        %v2000 = vmul.f32 %v1943, 1.442695
        %v2001 = vpow.pop %v2000
        %v2002 = vmul.f32 %v1944, 1.442695
        %v2003 = vpow.pop %v2002
        %v2004 = vmul.f32 %v1945, 1.442695
        %v2005 = vpow.pop %v2004
        %v2006 = vmul.f32 %v1946, 1.442695
        %v2007 = vpow.pop %v2006
        %v2008 = vmul.f32 %v1947, 1.442695
        %v2009 = vpow.pop %v2008
        %v2010 = vmul.f32 %v1948, 1.442695
        %v2011 = vpow.pop %v2010
        %v2012 = vmul.f32 %v1949, 1.442695
        %v2013 = vpow.pop %v2012
        %v2014 = vadd.f32 %v1951, %v1953
        %2015 = vadd.xlane.f32.xlu0 %v2014
        %v2016 = vpop.xlane.xlu0 %2015
        %v2017 = vadd.f32 %v1955, %v1957
        %2018 = vadd.xlane.f32.xlu0 %v2017
        %v2019 = vpop.xlane.xlu0 %2018
        %v2020 = vadd.f32 %v1959, %v1961
        %2021 = vadd.xlane.f32.xlu0 %v2020
        %v2022 = vpop.xlane.xlu0 %2021
        %v2023 = vadd.f32 %v1963, %v1965
        %2024 = vadd.xlane.f32.xlu0 %v2023
        %v2025 = vpop.xlane.xlu0 %2024
        %v2026 = vadd.f32 %v1967, %v1969
        %2027 = vadd.xlane.f32.xlu0 %v2026
        %v2028 = vpop.xlane.xlu0 %2027
        %v2029 = vadd.f32 %v1971, %v1973
        %2030 = vadd.xlane.f32.xlu0 %v2029
        %v2031 = vpop.xlane.xlu0 %2030
        %v2032 = vadd.f32 %v1975, %v1977
        %2033 = vadd.xlane.f32.xlu0 %v2032
        %v2034 = vpop.xlane.xlu0 %2033
        %v2035 = vadd.f32 %v1979, %v1981
        %2036 = vadd.xlane.f32.xlu0 %v2035
        %v2037 = vpop.xlane.xlu0 %2036
        %v2038 = vadd.f32 %v1983, %v1985
        %2039 = vadd.xlane.f32.xlu0 %v2038
        %v2040 = vpop.xlane.xlu0 %2039
        %v2041 = vadd.f32 %v1987, %v1989
        %2042 = vadd.xlane.f32.xlu0 %v2041
        %v2043 = vpop.xlane.xlu0 %2042
        %v2044 = vadd.f32 %v1991, %v1993
        %2045 = vadd.xlane.f32.xlu0 %v2044
        %v2046 = vpop.xlane.xlu0 %2045
        %v2047 = vadd.f32 %v1995, %v1997
        %2048 = vadd.xlane.f32.xlu0 %v2047
        %v2049 = vpop.xlane.xlu0 %2048
        %v2050 = vadd.f32 %v1999, %v2001
        %2051 = vadd.xlane.f32.xlu0 %v2050
        %v2052 = vpop.xlane.xlu0 %2051
        %v2053 = vadd.f32 %v2003, %v2005
        %2054 = vadd.xlane.f32.xlu0 %v2053
        %v2055 = vpop.xlane.xlu0 %2054
        %v2056 = vadd.f32 %v2007, %v2009
        %2057 = vadd.xlane.f32.xlu0 %v2056
        %v2058 = vpop.xlane.xlu0 %2057
        %v2059 = vadd.f32 %v2011, %v2013
        %2060 = vadd.xlane.f32.xlu0 %v2059
        %v2061 = vpop.xlane.xlu0 %2060
        %v2062 = vrcp.pop %v2016
        %v2063 = vrcp.pop %v2019
        %v2064 = vrcp.pop %v2022
        %v2065 = vrcp.pop %v2025
        %v2066 = vrcp.pop %v2028
        %v2067 = vrcp.pop %v2031
        %v2068 = vrcp.pop %v2034
        %v2069 = vrcp.pop %v2037
        %v2070 = vrcp.pop %v2040
        %v2071 = vrcp.pop %v2043
        %v2072 = vrcp.pop %v2046
        %v2073 = vrcp.pop %v2049
        %v2074 = vrcp.pop %v2052
        %v2075 = vrcp.pop %v2055
        %v2076 = vrcp.pop %v2058
        %v2077 = vrcp.pop %v2061
        %v2078 = vmul.f32 %v1951, %v2062
        %v2079 = vmul.f32 %v1953, %v2062
        %v2080 = vmul.f32 %v1955, %v2063
        %v2081 = vmul.f32 %v1957, %v2063
        %v2082 = vmul.f32 %v1959, %v2064
        %v2083 = vmul.f32 %v1961, %v2064
        %v2084 = vmul.f32 %v1963, %v2065
        %v2085 = vmul.f32 %v1965, %v2065
        %v2086 = vmul.f32 %v1967, %v2066
        %v2087 = vmul.f32 %v1969, %v2066
        %v2088 = vmul.f32 %v1971, %v2067
        %v2089 = vmul.f32 %v1973, %v2067
        %v2090 = vmul.f32 %v1975, %v2068
        %v2091 = vmul.f32 %v1977, %v2068
        %v2092 = vmul.f32 %v1979, %v2069
        %v2093 = vmul.f32 %v1981, %v2069
        %v2094 = vmul.f32 %v1983, %v2070
        %v2095 = vmul.f32 %v1985, %v2070
        %v2096 = vmul.f32 %v1987, %v2071
        %v2097 = vmul.f32 %v1989, %v2071
        %v2098 = vmul.f32 %v1991, %v2072
        %v2099 = vmul.f32 %v1993, %v2072
        %v2100 = vmul.f32 %v1995, %v2073
        %v2101 = vmul.f32 %v1997, %v2073
        %v2102 = vmul.f32 %v1999, %v2074
        %v2103 = vmul.f32 %v2001, %v2074
        %v2104 = vmul.f32 %v2003, %v2075
        %v2105 = vmul.f32 %v2005, %v2075
        %v2106 = vmul.f32 %v2007, %v2076
        %v2107 = vmul.f32 %v2009, %v2076
        %v2108 = vmul.f32 %v2011, %v2077
        %v2109 = vmul.f32 %v2013, %v2077
        %2110 = vst [vmem:[%s369] sm:$0xff] %v2078
        %2111 = vst [vmem:[%s369 + $0x8] sm:$0xff] %v2079
        %2112 = vst [vmem:[%s369 + $0x10] sm:$0xff] %v2080
        %2113 = vst [vmem:[%s369 + $0x18] sm:$0xff] %v2081
        %2114 = vst [vmem:[%s369 + $0x20] sm:$0xff] %v2082
        %2115 = vst [vmem:[%s369 + $0x28] sm:$0xff] %v2083
        %2116 = vst [vmem:[%s369 + $0x30] sm:$0xff] %v2084
        %2117 = vst [vmem:[%s369 + $0x38] sm:$0xff] %v2085
        %2118 = vst [vmem:[%s369 + $0x40] sm:$0xff] %v2086
        %2119 = vst [vmem:[%s369 + $0x48] sm:$0xff] %v2087
        %2120 = vst [vmem:[%s369 + $0x50] sm:$0xff] %v2088
        %2121 = vst [vmem:[%s369 + $0x58] sm:$0xff] %v2089
        %2122 = vst [vmem:[%s369 + $0x60] sm:$0xff] %v2090
        %2123 = vst [vmem:[%s369 + $0x68] sm:$0xff] %v2091
        %2124 = vst [vmem:[%s369 + $0x70] sm:$0xff] %v2092
        %2125 = vst [vmem:[%s369 + $0x78] sm:$0xff] %v2093
        %2126 = vst [vmem:[%s369 + $0x80] sm:$0xff] %v2094
        %2127 = vst [vmem:[%s369 + $0x88] sm:$0xff] %v2095
        %2128 = vst [vmem:[%s369 + $0x90] sm:$0xff] %v2096
        %2129 = vst [vmem:[%s369 + $0x98] sm:$0xff] %v2097
        %2130 = vst [vmem:[%s369 + $0xa0] sm:$0xff] %v2098
        %2131 = vst [vmem:[%s369 + $0xa8] sm:$0xff] %v2099
        %2132 = vst [vmem:[%s369 + $0xb0] sm:$0xff] %v2100
        %2133 = vst [vmem:[%s369 + $0xb8] sm:$0xff] %v2101
        %2134 = vst [vmem:[%s369 + $0xc0] sm:$0xff] %v2102
        %2135 = vst [vmem:[%s369 + $0xc8] sm:$0xff] %v2103
        %2136 = vst [vmem:[%s369 + $0xd0] sm:$0xff] %v2104
        %2137 = vst [vmem:[%s369 + $0xd8] sm:$0xff] %v2105
        %2138 = vst [vmem:[%s369 + $0xe0] sm:$0xff] %v2106
        %2139 = vst [vmem:[%s369 + $0xe8] sm:$0xff] %v2107
        %2140 = vst [vmem:[%s369 + $0xf0] sm:$0xff] %v2108
        %2141 = vst [vmem:[%s369 + $0xf8] sm:$0xff] %v2109
        %s2142 = scalar_lea.vmem [#allocation2], 128
        %v2143 = vld [vmem:[%s2142] sm:$0xff]
        %v2144 = vld [vmem:[%s2142 + $0x8] sm:$0xff]
        %v2145 = vld [vmem:[%s2142 + $0x10] sm:$0xff]
        %v2146 = vld [vmem:[%s2142 + $0x18] sm:$0xff]
        %v2147 = vld [vmem:[%s2142 + $0x20] sm:$0xff]
        %v2148 = vld [vmem:[%s2142 + $0x28] sm:$0xff]
        %v2149 = vld [vmem:[%s2142 + $0x30] sm:$0xff]
        %v2150 = vld [vmem:[%s2142 + $0x38] sm:$0xff]
        %v2151 = vld [vmem:[%s2142 + $0x40] sm:$0xff]
        %v2152 = vld [vmem:[%s2142 + $0x48] sm:$0xff]
        %v2153 = vld [vmem:[%s2142 + $0x50] sm:$0xff]
        %v2154 = vld [vmem:[%s2142 + $0x58] sm:$0xff]
        %v2155 = vld [vmem:[%s2142 + $0x60] sm:$0xff]
        %v2156 = vld [vmem:[%s2142 + $0x68] sm:$0xff]
        %v2157 = vld [vmem:[%s2142 + $0x70] sm:$0xff]
        %v2158 = vld [vmem:[%s2142 + $0x78] sm:$0xff]
        %2167 = vrot.lane.b32.xlu0 %v1644, 64
        %v2168 = vpop.permute.xlu0 %2167
        %2169 = vrot.lane.b32.xlu0 %v1647, 64
        %v2170 = vpop.permute.xlu0 %2169
        %2171 = vrot.lane.b32.xlu0 %v1650, 64
        %v2172 = vpop.permute.xlu0 %2171
        %2173 = vrot.lane.b32.xlu0 %v1653, 64
        %v2174 = vpop.permute.xlu0 %2173
        %2175 = vrot.lane.b32.xlu0 %v1656, 64
        %v2176 = vpop.permute.xlu0 %2175
        %2177 = vrot.lane.b32.xlu0 %v1659, 64
        %v2178 = vpop.permute.xlu0 %2177
        %2179 = vrot.lane.b32.xlu0 %v1662, 64
        %v2180 = vpop.permute.xlu0 %2179
        %2181 = vrot.lane.b32.xlu0 %v1665, 64
        %v2182 = vpop.permute.xlu0 %2181
        %v2184 = vsel %vm1684, %v2168, 0
        %v2187 = vsel %vm1684, %v2170, 0
        %v2190 = vsel %vm1684, %v2172, 0
        %v2193 = vsel %vm1684, %v2174, 0
        %v2196 = vsel %vm1684, %v2176, 0
        %v2199 = vsel %vm1684, %v2178, 0
        %v2202 = vsel %vm1684, %v2180, 0
        %v2205 = vsel %vm1684, %v2182, 0
        %v2208 = vsel %vm1684, %v2143, 0
        %v2211 = vsel %vm1684, %v2144, 0
        %v2214 = vsel %vm1684, %v2145, 0
        %v2217 = vsel %vm1684, %v2146, 0
        %v2220 = vsel %vm1684, %v2147, 0
        %v2223 = vsel %vm1684, %v2148, 0
        %v2226 = vsel %vm1684, %v2149, 0
        %v2229 = vsel %vm1684, %v2150, 0
        %v2232 = vsel %vm1684, %v2151, 0
        %v2235 = vsel %vm1684, %v2152, 0
        %v2238 = vsel %vm1684, %v2153, 0
        %v2241 = vsel %vm1684, %v2154, 0
        %v2244 = vsel %vm1684, %v2155, 0
        %v2247 = vsel %vm1684, %v2156, 0
        %v2250 = vsel %vm1684, %v2157, 0
        %v2253 = vsel %vm1684, %v2158, 0
        %2255 = vmatprep.subr.bf16.mxu0 0
        %2256 = vmatpush1.bf16.xpose.msra.mxu0 %v2208
        %2257 = vmatprep.subr.bf16.mxu0 0
        %2258 = vmatpush1.bf16.xpose.msra.mxu0 %v2211
        %2259 = vmatprep.subr.bf16.mxu0 0
        %2260 = vmatpush1.bf16.xpose.msra.mxu0 %v2214
        %2261 = vmatprep.subr.bf16.mxu0 0
        %2262 = vmatpush1.bf16.xpose.msra.mxu0 %v2217
        %2263 = vmatprep.subr.bf16.mxu0 0
        %2264 = vmatpush1.bf16.xpose.msra.mxu0 %v2220
        %2265 = vmatprep.subr.bf16.mxu0 0
        %2266 = vmatpush1.bf16.xpose.msra.mxu0 %v2223
        %2267 = vmatprep.subr.bf16.mxu0 0
        %2268 = vmatpush1.bf16.xpose.msra.mxu0 %v2226
        %2269 = vmatprep.subr.bf16.mxu0 0
        %2270 = vmatpush1.bf16.xpose.msra.mxu0 %v2229
        %2271 = vmatprep.subr.bf16.mxu0 0
        %2272 = vmatpush1.bf16.xpose.msra.mxu0 %v2232
        %2273 = vmatprep.subr.bf16.mxu0 0
        %2274 = vmatpush1.bf16.xpose.msra.mxu0 %v2235
        %2275 = vmatprep.subr.bf16.mxu0 0
        %2276 = vmatpush1.bf16.xpose.msra.mxu0 %v2238
        %2277 = vmatprep.subr.bf16.mxu0 0
        %2278 = vmatpush1.bf16.xpose.msra.mxu0 %v2241
        %2279 = vmatprep.subr.bf16.mxu0 0
        %2280 = vmatpush1.bf16.xpose.msra.mxu0 %v2244
        %2281 = vmatprep.subr.bf16.mxu0 0
        %2282 = vmatpush1.bf16.xpose.msra.mxu0 %v2247
        %2283 = vmatprep.subr.bf16.mxu0 0
        %2284 = vmatpush1.bf16.xpose.msra.mxu0 %v2250
        %2285 = vmatprep.subr.bf16.mxu0 0
        %2286 = vmatpush1.bf16.xpose.msra.mxu0 %v2253
        %2287 = vmatprep.mubr.bf16.mxu0 0
        %2288 = vmatmul.mubr.bf16.gmra.mrb[0].mxu0 %v2184
        %v2289 = vpop.f32.mrb[0].mxu0
        %v2290 = vadd.f32 0.0, %v2289
        %v2291 = vpop.f32.mrb[0].mxu0
        %v2292 = vadd.f32 0.0, %v2291
        %v2293 = vpop.f32.mrb[0].mxu0
        %v2294 = vadd.f32 0.0, %v2293
        %v2295 = vpop.f32.mrb[0].mxu0
        %v2296 = vadd.f32 0.0, %v2295
        %2297 = vmatprep.mubr.bf16.mxu0 0
        %2298 = vmatmul.mubr.bf16.gmra.mrb[0].mxu0 %v2187
        %v2299 = vpop.f32.mrb[0].mxu0
        %v2300 = vadd.f32 0.0, %v2299
        %v2301 = vpop.f32.mrb[0].mxu0
        %v2302 = vadd.f32 0.0, %v2301
        %v2303 = vpop.f32.mrb[0].mxu0
        %v2304 = vadd.f32 0.0, %v2303
        %v2305 = vpop.f32.mrb[0].mxu0
        %v2306 = vadd.f32 0.0, %v2305
        %2307 = vmatprep.mubr.bf16.mxu0 0
        %2308 = vmatmul.mubr.bf16.gmra.mrb[0].mxu0 %v2190
        %v2309 = vpop.f32.mrb[0].mxu0
        %v2310 = vadd.f32 0.0, %v2309
        %v2311 = vpop.f32.mrb[0].mxu0
        %v2312 = vadd.f32 0.0, %v2311
        %v2313 = vpop.f32.mrb[0].mxu0
        %v2314 = vadd.f32 0.0, %v2313
        %v2315 = vpop.f32.mrb[0].mxu0
        %v2316 = vadd.f32 0.0, %v2315
        %2317 = vmatprep.mubr.bf16.mxu0 0
        %2318 = vmatmul.mubr.bf16.gmra.mrb[0].mxu0 %v2193
        %v2319 = vpop.f32.mrb[0].mxu0
        %v2320 = vadd.f32 0.0, %v2319
        %v2321 = vpop.f32.mrb[0].mxu0
        %v2322 = vadd.f32 0.0, %v2321
        %v2323 = vpop.f32.mrb[0].mxu0
        %v2324 = vadd.f32 0.0, %v2323
        %v2325 = vpop.f32.mrb[0].mxu0
        %v2326 = vadd.f32 0.0, %v2325
        %2327 = vmatprep.mubr.bf16.mxu0 0
        %2328 = vmatmul.mubr.bf16.gmra.mrb[0].mxu0 %v2196
        %v2329 = vpop.f32.mrb[0].mxu0
        %v2330 = vadd.f32 0.0, %v2329
        %v2331 = vpop.f32.mrb[0].mxu0
        %v2332 = vadd.f32 0.0, %v2331
        %v2333 = vpop.f32.mrb[0].mxu0
        %v2334 = vadd.f32 0.0, %v2333
        %v2335 = vpop.f32.mrb[0].mxu0
        %v2336 = vadd.f32 0.0, %v2335
        %2337 = vmatprep.mubr.bf16.mxu0 0
        %2338 = vmatmul.mubr.bf16.gmra.mrb[0].mxu0 %v2199
        %v2339 = vpop.f32.mrb[0].mxu0
        %v2340 = vadd.f32 0.0, %v2339
        %v2341 = vpop.f32.mrb[0].mxu0
        %v2342 = vadd.f32 0.0, %v2341
        %v2343 = vpop.f32.mrb[0].mxu0
        %v2344 = vadd.f32 0.0, %v2343
        %v2345 = vpop.f32.mrb[0].mxu0
        %v2346 = vadd.f32 0.0, %v2345
        %2347 = vmatprep.mubr.bf16.mxu0 0
        %2348 = vmatmul.mubr.bf16.gmra.mrb[0].mxu0 %v2202
        %v2349 = vpop.f32.mrb[0].mxu0
        %v2350 = vadd.f32 0.0, %v2349
        %v2351 = vpop.f32.mrb[0].mxu0
        %v2352 = vadd.f32 0.0, %v2351
        %v2353 = vpop.f32.mrb[0].mxu0
        %v2354 = vadd.f32 0.0, %v2353
        %v2355 = vpop.f32.mrb[0].mxu0
        %v2356 = vadd.f32 0.0, %v2355
        %2357 = vmatprep.mubr.bf16.mxu0 0
        %2358 = vmatmul.mubr.bf16.gmra.mrb[0].mxu0 %v2205
        %v2359 = vpop.f32.mrb[0].mxu0
        %v2360 = vadd.f32 0.0, %v2359
        %v2361 = vpop.f32.mrb[0].mxu0
        %v2362 = vadd.f32 0.0, %v2361
        %v2363 = vpop.f32.mrb[0].mxu0
        %v2364 = vadd.f32 0.0, %v2363
        %v2365 = vpop.f32.mrb[0].mxu0
        %v2366 = vadd.f32 0.0, %v2365
        %2367 = vdwg.mxu0
        %v2368 = vmax.f32 %v2290, %v2292
        %2369 = vmax.xlane.f32.xlu0 %v2368
        %v2370 = vpop.xlane.xlu0 %2369
        %v2371 = vmax.f32 %v2294, %v2296
        %2372 = vmax.xlane.f32.xlu0 %v2371
        %v2373 = vpop.xlane.xlu0 %2372
        %v2374 = vmax.f32 %v2300, %v2302
        %2375 = vmax.xlane.f32.xlu0 %v2374
        %v2376 = vpop.xlane.xlu0 %2375
        %v2377 = vmax.f32 %v2304, %v2306
        %2378 = vmax.xlane.f32.xlu0 %v2377
        %v2379 = vpop.xlane.xlu0 %2378
        %v2380 = vmax.f32 %v2310, %v2312
        %2381 = vmax.xlane.f32.xlu0 %v2380
        %v2382 = vpop.xlane.xlu0 %2381
        %v2383 = vmax.f32 %v2314, %v2316
        %2384 = vmax.xlane.f32.xlu0 %v2383
        %v2385 = vpop.xlane.xlu0 %2384
        %v2386 = vmax.f32 %v2320, %v2322
        %2387 = vmax.xlane.f32.xlu0 %v2386
        %v2388 = vpop.xlane.xlu0 %2387
        %v2389 = vmax.f32 %v2324, %v2326
        %2390 = vmax.xlane.f32.xlu0 %v2389
        %v2391 = vpop.xlane.xlu0 %2390
        %v2392 = vmax.f32 %v2330, %v2332
        %2393 = vmax.xlane.f32.xlu0 %v2392
        %v2394 = vpop.xlane.xlu0 %2393
        %v2395 = vmax.f32 %v2334, %v2336
        %2396 = vmax.xlane.f32.xlu0 %v2395
        %v2397 = vpop.xlane.xlu0 %2396
        %v2398 = vmax.f32 %v2340, %v2342
        %2399 = vmax.xlane.f32.xlu0 %v2398
        %v2400 = vpop.xlane.xlu0 %2399
        %v2401 = vmax.f32 %v2344, %v2346
        %2402 = vmax.xlane.f32.xlu0 %v2401
        %v2403 = vpop.xlane.xlu0 %2402
        %v2404 = vmax.f32 %v2350, %v2352
        %2405 = vmax.xlane.f32.xlu0 %v2404
        %v2406 = vpop.xlane.xlu0 %2405
        %v2407 = vmax.f32 %v2354, %v2356
        %2408 = vmax.xlane.f32.xlu0 %v2407
        %v2409 = vpop.xlane.xlu0 %2408
        %v2410 = vmax.f32 %v2360, %v2362
        %2411 = vmax.xlane.f32.xlu0 %v2410
        %v2412 = vpop.xlane.xlu0 %2411
        %v2413 = vmax.f32 %v2364, %v2366
        %2414 = vmax.xlane.f32.xlu0 %v2413
        %v2415 = vpop.xlane.xlu0 %2414
        %v2416 = vsub.f32 %v2290, %v2370
        %v2417 = vsub.f32 %v2292, %v2370
        %v2418 = vsub.f32 %v2294, %v2373
        %v2419 = vsub.f32 %v2296, %v2373
        %v2420 = vsub.f32 %v2300, %v2376
        %v2421 = vsub.f32 %v2302, %v2376
        %v2422 = vsub.f32 %v2304, %v2379
        %v2423 = vsub.f32 %v2306, %v2379
        %v2424 = vsub.f32 %v2310, %v2382
        %v2425 = vsub.f32 %v2312, %v2382
        %v2426 = vsub.f32 %v2314, %v2385
        %v2427 = vsub.f32 %v2316, %v2385
        %v2428 = vsub.f32 %v2320, %v2388
        %v2429 = vsub.f32 %v2322, %v2388
        %v2430 = vsub.f32 %v2324, %v2391
        %v2431 = vsub.f32 %v2326, %v2391
        %v2432 = vsub.f32 %v2330, %v2394
        %v2433 = vsub.f32 %v2332, %v2394
        %v2434 = vsub.f32 %v2334, %v2397
        %v2435 = vsub.f32 %v2336, %v2397
        %v2436 = vsub.f32 %v2340, %v2400
        %v2437 = vsub.f32 %v2342, %v2400
        %v2438 = vsub.f32 %v2344, %v2403
        %v2439 = vsub.f32 %v2346, %v2403
        %v2440 = vsub.f32 %v2350, %v2406
        %v2441 = vsub.f32 %v2352, %v2406
        %v2442 = vsub.f32 %v2354, %v2409
        %v2443 = vsub.f32 %v2356, %v2409
        %v2444 = vsub.f32 %v2360, %v2412
        %v2445 = vsub.f32 %v2362, %v2412
        %v2446 = vsub.f32 %v2364, %v2415
        %v2447 = vsub.f32 %v2366, %v2415
        %v2448 = vmul.f32 %v2416, 1.442695
        %v2449 = vpow.pop %v2448
        %v2450 = vmul.f32 %v2417, 1.442695
        %v2451 = vpow.pop %v2450
        %v2452 = vmul.f32 %v2418, 1.442695
        %v2453 = vpow.pop %v2452
        %v2454 = vmul.f32 %v2419, 1.442695
        %v2455 = vpow.pop %v2454
        %v2456 = vmul.f32 %v2420, 1.442695
        %v2457 = vpow.pop %v2456
        %v2458 = vmul.f32 %v2421, 1.442695
        %v2459 = vpow.pop %v2458
        %v2460 = vmul.f32 %v2422, 1.442695
        %v2461 = vpow.pop %v2460
        %v2462 = vmul.f32 %v2423, 1.442695
        %v2463 = vpow.pop %v2462
        %v2464 = vmul.f32 %v2424, 1.442695
        %v2465 = vpow.pop %v2464
        %v2466 = vmul.f32 %v2425, 1.442695
        %v2467 = vpow.pop %v2466
        %v2468 = vmul.f32 %v2426, 1.442695
        %v2469 = vpow.pop %v2468
        %v2470 = vmul.f32 %v2427, 1.442695
        %v2471 = vpow.pop %v2470
        %v2472 = vmul.f32 %v2428, 1.442695
        %v2473 = vpow.pop %v2472
        %v2474 = vmul.f32 %v2429, 1.442695
        %v2475 = vpow.pop %v2474
        %v2476 = vmul.f32 %v2430, 1.442695
        %v2477 = vpow.pop %v2476
        %v2478 = vmul.f32 %v2431, 1.442695
        %v2479 = vpow.pop %v2478
        %v2480 = vmul.f32 %v2432, 1.442695
        %v2481 = vpow.pop %v2480
        %v2482 = vmul.f32 %v2433, 1.442695
        %v2483 = vpow.pop %v2482
        %v2484 = vmul.f32 %v2434, 1.442695
        %v2485 = vpow.pop %v2484
        %v2486 = vmul.f32 %v2435, 1.442695
        %v2487 = vpow.pop %v2486
        %v2488 = vmul.f32 %v2436, 1.442695
        %v2489 = vpow.pop %v2488
        %v2490 = vmul.f32 %v2437, 1.442695
        %v2491 = vpow.pop %v2490
        %v2492 = vmul.f32 %v2438, 1.442695
        %v2493 = vpow.pop %v2492
        %v2494 = vmul.f32 %v2439, 1.442695
        %v2495 = vpow.pop %v2494
        %v2496 = vmul.f32 %v2440, 1.442695
        %v2497 = vpow.pop %v2496
        %v2498 = vmul.f32 %v2441, 1.442695
        %v2499 = vpow.pop %v2498
        %v2500 = vmul.f32 %v2442, 1.442695
        %v2501 = vpow.pop %v2500
        %v2502 = vmul.f32 %v2443, 1.442695
        %v2503 = vpow.pop %v2502
        %v2504 = vmul.f32 %v2444, 1.442695
        %v2505 = vpow.pop %v2504
        %v2506 = vmul.f32 %v2445, 1.442695
        %v2507 = vpow.pop %v2506
        %v2508 = vmul.f32 %v2446, 1.442695
        %v2509 = vpow.pop %v2508
        %v2510 = vmul.f32 %v2447, 1.442695
        %v2511 = vpow.pop %v2510
        %v2512 = vadd.f32 %v2449, %v2451
        %2513 = vadd.xlane.f32.xlu0 %v2512
        %v2514 = vpop.xlane.xlu0 %2513
        %v2515 = vadd.f32 %v2453, %v2455
        %2516 = vadd.xlane.f32.xlu0 %v2515
        %v2517 = vpop.xlane.xlu0 %2516
        %v2518 = vadd.f32 %v2457, %v2459
        %2519 = vadd.xlane.f32.xlu0 %v2518
        %v2520 = vpop.xlane.xlu0 %2519
        %v2521 = vadd.f32 %v2461, %v2463
        %2522 = vadd.xlane.f32.xlu0 %v2521
        %v2523 = vpop.xlane.xlu0 %2522
        %v2524 = vadd.f32 %v2465, %v2467
        %2525 = vadd.xlane.f32.xlu0 %v2524
        %v2526 = vpop.xlane.xlu0 %2525
        %v2527 = vadd.f32 %v2469, %v2471
        %2528 = vadd.xlane.f32.xlu0 %v2527
        %v2529 = vpop.xlane.xlu0 %2528
        %v2530 = vadd.f32 %v2473, %v2475
        %2531 = vadd.xlane.f32.xlu0 %v2530
        %v2532 = vpop.xlane.xlu0 %2531
        %v2533 = vadd.f32 %v2477, %v2479
        %2534 = vadd.xlane.f32.xlu0 %v2533
        %v2535 = vpop.xlane.xlu0 %2534
        %v2536 = vadd.f32 %v2481, %v2483
        %2537 = vadd.xlane.f32.xlu0 %v2536
        %v2538 = vpop.xlane.xlu0 %2537
        %v2539 = vadd.f32 %v2485, %v2487
        %2540 = vadd.xlane.f32.xlu0 %v2539
        %v2541 = vpop.xlane.xlu0 %2540
        %v2542 = vadd.f32 %v2489, %v2491
        %2543 = vadd.xlane.f32.xlu0 %v2542
        %v2544 = vpop.xlane.xlu0 %2543
        %v2545 = vadd.f32 %v2493, %v2495
        %2546 = vadd.xlane.f32.xlu0 %v2545
        %v2547 = vpop.xlane.xlu0 %2546
        %v2548 = vadd.f32 %v2497, %v2499
        %2549 = vadd.xlane.f32.xlu0 %v2548
        %v2550 = vpop.xlane.xlu0 %2549
        %v2551 = vadd.f32 %v2501, %v2503
        %2552 = vadd.xlane.f32.xlu0 %v2551
        %v2553 = vpop.xlane.xlu0 %2552
        %v2554 = vadd.f32 %v2505, %v2507
        %2555 = vadd.xlane.f32.xlu0 %v2554
        %v2556 = vpop.xlane.xlu0 %2555
        %v2557 = vadd.f32 %v2509, %v2511
        %2558 = vadd.xlane.f32.xlu0 %v2557
        %v2559 = vpop.xlane.xlu0 %2558
        %v2560 = vrcp.pop %v2514
        %v2561 = vrcp.pop %v2517
        %v2562 = vrcp.pop %v2520
        %v2563 = vrcp.pop %v2523
        %v2564 = vrcp.pop %v2526
        %v2565 = vrcp.pop %v2529
        %v2566 = vrcp.pop %v2532
        %v2567 = vrcp.pop %v2535
        %v2568 = vrcp.pop %v2538
        %v2569 = vrcp.pop %v2541
        %v2570 = vrcp.pop %v2544
        %v2571 = vrcp.pop %v2547
        %v2572 = vrcp.pop %v2550
        %v2573 = vrcp.pop %v2553
        %v2574 = vrcp.pop %v2556
        %v2575 = vrcp.pop %v2559
        %v2576 = vmul.f32 %v2449, %v2560
        %v2577 = vmul.f32 %v2451, %v2560
        %v2578 = vmul.f32 %v2453, %v2561
        %v2579 = vmul.f32 %v2455, %v2561
        %v2580 = vmul.f32 %v2457, %v2562
        %v2581 = vmul.f32 %v2459, %v2562
        %v2582 = vmul.f32 %v2461, %v2563
        %v2583 = vmul.f32 %v2463, %v2563
        %v2584 = vmul.f32 %v2465, %v2564
        %v2585 = vmul.f32 %v2467, %v2564
        %v2586 = vmul.f32 %v2469, %v2565
        %v2587 = vmul.f32 %v2471, %v2565
        %v2588 = vmul.f32 %v2473, %v2566
        %v2589 = vmul.f32 %v2475, %v2566
        %v2590 = vmul.f32 %v2477, %v2567
        %v2591 = vmul.f32 %v2479, %v2567
        %v2592 = vmul.f32 %v2481, %v2568
        %v2593 = vmul.f32 %v2483, %v2568
        %v2594 = vmul.f32 %v2485, %v2569
        %v2595 = vmul.f32 %v2487, %v2569
        %v2596 = vmul.f32 %v2489, %v2570
        %v2597 = vmul.f32 %v2491, %v2570
        %v2598 = vmul.f32 %v2493, %v2571
        %v2599 = vmul.f32 %v2495, %v2571
        %v2600 = vmul.f32 %v2497, %v2572
        %v2601 = vmul.f32 %v2499, %v2572
        %v2602 = vmul.f32 %v2501, %v2573
        %v2603 = vmul.f32 %v2503, %v2573
        %v2604 = vmul.f32 %v2505, %v2574
        %v2605 = vmul.f32 %v2507, %v2574
        %v2606 = vmul.f32 %v2509, %v2575
        %v2607 = vmul.f32 %v2511, %v2575
        %s2608 = scalar_lea.vmem %s369, 256 [#allocation11]
        %2609 = vst [vmem:[%s2608] sm:$0xff] %v2576
        %2610 = vst [vmem:[%s2608 + $0x8] sm:$0xff] %v2577
        %2611 = vst [vmem:[%s2608 + $0x10] sm:$0xff] %v2578
        %2612 = vst [vmem:[%s2608 + $0x18] sm:$0xff] %v2579
        %2613 = vst [vmem:[%s2608 + $0x20] sm:$0xff] %v2580
        %2614 = vst [vmem:[%s2608 + $0x28] sm:$0xff] %v2581
        %2615 = vst [vmem:[%s2608 + $0x30] sm:$0xff] %v2582
        %2616 = vst [vmem:[%s2608 + $0x38] sm:$0xff] %v2583
        %2617 = vst [vmem:[%s2608 + $0x40] sm:$0xff] %v2584
        %2618 = vst [vmem:[%s2608 + $0x48] sm:$0xff] %v2585
        %2619 = vst [vmem:[%s2608 + $0x50] sm:$0xff] %v2586
        %2620 = vst [vmem:[%s2608 + $0x58] sm:$0xff] %v2587
        %2621 = vst [vmem:[%s2608 + $0x60] sm:$0xff] %v2588
        %2622 = vst [vmem:[%s2608 + $0x68] sm:$0xff] %v2589
        %2623 = vst [vmem:[%s2608 + $0x70] sm:$0xff] %v2590
        %2624 = vst [vmem:[%s2608 + $0x78] sm:$0xff] %v2591
        %2625 = vst [vmem:[%s2608 + $0x80] sm:$0xff] %v2592
        %2626 = vst [vmem:[%s2608 + $0x88] sm:$0xff] %v2593
        %2627 = vst [vmem:[%s2608 + $0x90] sm:$0xff] %v2594
        %2628 = vst [vmem:[%s2608 + $0x98] sm:$0xff] %v2595
        %2629 = vst [vmem:[%s2608 + $0xa0] sm:$0xff] %v2596
        %2630 = vst [vmem:[%s2608 + $0xa8] sm:$0xff] %v2597
        %2631 = vst [vmem:[%s2608 + $0xb0] sm:$0xff] %v2598
        %2632 = vst [vmem:[%s2608 + $0xb8] sm:$0xff] %v2599
        %2633 = vst [vmem:[%s2608 + $0xc0] sm:$0xff] %v2600
        %2634 = vst [vmem:[%s2608 + $0xc8] sm:$0xff] %v2601
        %2635 = vst [vmem:[%s2608 + $0xd0] sm:$0xff] %v2602
        %2636 = vst [vmem:[%s2608 + $0xd8] sm:$0xff] %v2603
        %2637 = vst [vmem:[%s2608 + $0xe0] sm:$0xff] %v2604
        %2638 = vst [vmem:[%s2608 + $0xe8] sm:$0xff] %v2605
        %2639 = vst [vmem:[%s2608 + $0xf0] sm:$0xff] %v2606
        %2640 = vst [vmem:[%s2608 + $0xf8] sm:$0xff] %v2607
        %s2641 = scalar_lea.vmem [#allocation2], 256
        %v2642 = vld [vmem:[%s2641] sm:$0xff]
        %v2643 = vld [vmem:[%s2641 + $0x8] sm:$0xff]
        %v2644 = vld [vmem:[%s2641 + $0x10] sm:$0xff]
        %v2645 = vld [vmem:[%s2641 + $0x18] sm:$0xff]
        %v2646 = vld [vmem:[%s2641 + $0x20] sm:$0xff]
        %v2647 = vld [vmem:[%s2641 + $0x28] sm:$0xff]
        %v2648 = vld [vmem:[%s2641 + $0x30] sm:$0xff]
        %v2649 = vld [vmem:[%s2641 + $0x38] sm:$0xff]
        %v2650 = vld [vmem:[%s2641 + $0x40] sm:$0xff]
        %v2651 = vld [vmem:[%s2641 + $0x48] sm:$0xff]
        %v2652 = vld [vmem:[%s2641 + $0x50] sm:$0xff]
        %v2653 = vld [vmem:[%s2641 + $0x58] sm:$0xff]
        %v2654 = vld [vmem:[%s2641 + $0x60] sm:$0xff]
        %v2655 = vld [vmem:[%s2641 + $0x68] sm:$0xff]
        %v2656 = vld [vmem:[%s2641 + $0x70] sm:$0xff]
        %v2657 = vld [vmem:[%s2641 + $0x78] sm:$0xff]
        %v2659 = vsel %vm1684, %v1645, 0
        %v2662 = vsel %vm1684, %v1648, 0
        %v2665 = vsel %vm1684, %v1651, 0
        %v2668 = vsel %vm1684, %v1654, 0
        %v2671 = vsel %vm1684, %v1657, 0
        %v2674 = vsel %vm1684, %v1660, 0
        %v2677 = vsel %vm1684, %v1663, 0
        %v2680 = vsel %vm1684, %v1666, 0
        %v2683 = vsel %vm1684, %v2642, 0
        %v2686 = vsel %vm1684, %v2643, 0
        %v2689 = vsel %vm1684, %v2644, 0
        %v2692 = vsel %vm1684, %v2645, 0
        %v2695 = vsel %vm1684, %v2646, 0
        %v2698 = vsel %vm1684, %v2647, 0
        %v2701 = vsel %vm1684, %v2648, 0
        %v2704 = vsel %vm1684, %v2649, 0
        %v2707 = vsel %vm1684, %v2650, 0
        %v2710 = vsel %vm1684, %v2651, 0
        %v2713 = vsel %vm1684, %v2652, 0
        %v2716 = vsel %vm1684, %v2653, 0
        %v2719 = vsel %vm1684, %v2654, 0
        %v2722 = vsel %vm1684, %v2655, 0
        %v2725 = vsel %vm1684, %v2656, 0
        %v2728 = vsel %vm1684, %v2657, 0
        %2730 = vmatprep.subr.bf16.mxu0 0
        %2731 = vmatpush1.bf16.xpose.msra.mxu0 %v2683
        %2732 = vmatprep.subr.bf16.mxu0 0
        %2733 = vmatpush1.bf16.xpose.msra.mxu0 %v2686
        %2734 = vmatprep.subr.bf16.mxu0 0
        %2735 = vmatpush1.bf16.xpose.msra.mxu0 %v2689
        %2736 = vmatprep.subr.bf16.mxu0 0
        %2737 = vmatpush1.bf16.xpose.msra.mxu0 %v2692
        %2738 = vmatprep.subr.bf16.mxu0 0
        %2739 = vmatpush1.bf16.xpose.msra.mxu0 %v2695
        %2740 = vmatprep.subr.bf16.mxu0 0
        %2741 = vmatpush1.bf16.xpose.msra.mxu0 %v2698
        %2742 = vmatprep.subr.bf16.mxu0 0
        %2743 = vmatpush1.bf16.xpose.msra.mxu0 %v2701
        %2744 = vmatprep.subr.bf16.mxu0 0
        %2745 = vmatpush1.bf16.xpose.msra.mxu0 %v2704
        %2746 = vmatprep.subr.bf16.mxu0 0
        %2747 = vmatpush1.bf16.xpose.msra.mxu0 %v2707
        %2748 = vmatprep.subr.bf16.mxu0 0
        %2749 = vmatpush1.bf16.xpose.msra.mxu0 %v2710
        %2750 = vmatprep.subr.bf16.mxu0 0
        %2751 = vmatpush1.bf16.xpose.msra.mxu0 %v2713
        %2752 = vmatprep.subr.bf16.mxu0 0
        %2753 = vmatpush1.bf16.xpose.msra.mxu0 %v2716
        %2754 = vmatprep.subr.bf16.mxu0 0
        %2755 = vmatpush1.bf16.xpose.msra.mxu0 %v2719
        %2756 = vmatprep.subr.bf16.mxu0 0
        %2757 = vmatpush1.bf16.xpose.msra.mxu0 %v2722
        %2758 = vmatprep.subr.bf16.mxu0 0
        %2759 = vmatpush1.bf16.xpose.msra.mxu0 %v2725
        %2760 = vmatprep.subr.bf16.mxu0 0
        %2761 = vmatpush1.bf16.xpose.msra.mxu0 %v2728
        %2762 = vmatprep.mubr.bf16.mxu0 0
        %2763 = vmatmul.mubr.bf16.gmra.mrb[0].mxu0 %v2659
        %v2764 = vpop.f32.mrb[0].mxu0
        %v2765 = vadd.f32 0.0, %v2764
        %v2766 = vpop.f32.mrb[0].mxu0
        %v2767 = vadd.f32 0.0, %v2766
        %v2768 = vpop.f32.mrb[0].mxu0
        %v2769 = vadd.f32 0.0, %v2768
        %v2770 = vpop.f32.mrb[0].mxu0
        %v2771 = vadd.f32 0.0, %v2770
        %2772 = vmatprep.mubr.bf16.mxu0 0
        %2773 = vmatmul.mubr.bf16.gmra.mrb[0].mxu0 %v2662
        %v2774 = vpop.f32.mrb[0].mxu0
        %v2775 = vadd.f32 0.0, %v2774
        %v2776 = vpop.f32.mrb[0].mxu0
        %v2777 = vadd.f32 0.0, %v2776
        %v2778 = vpop.f32.mrb[0].mxu0
        %v2779 = vadd.f32 0.0, %v2778
        %v2780 = vpop.f32.mrb[0].mxu0
        %v2781 = vadd.f32 0.0, %v2780
        %2782 = vmatprep.mubr.bf16.mxu0 0
        %2783 = vmatmul.mubr.bf16.gmra.mrb[0].mxu0 %v2665
        %v2784 = vpop.f32.mrb[0].mxu0
        %v2785 = vadd.f32 0.0, %v2784
        %v2786 = vpop.f32.mrb[0].mxu0
        %v2787 = vadd.f32 0.0, %v2786
        %v2788 = vpop.f32.mrb[0].mxu0
        %v2789 = vadd.f32 0.0, %v2788
        %v2790 = vpop.f32.mrb[0].mxu0
        %v2791 = vadd.f32 0.0, %v2790
        %2792 = vmatprep.mubr.bf16.mxu0 0
        %2793 = vmatmul.mubr.bf16.gmra.mrb[0].mxu0 %v2668
        %v2794 = vpop.f32.mrb[0].mxu0
        %v2795 = vadd.f32 0.0, %v2794
        %v2796 = vpop.f32.mrb[0].mxu0
        %v2797 = vadd.f32 0.0, %v2796
        %v2798 = vpop.f32.mrb[0].mxu0
        %v2799 = vadd.f32 0.0, %v2798
        %v2800 = vpop.f32.mrb[0].mxu0
        %v2801 = vadd.f32 0.0, %v2800
        %2802 = vmatprep.mubr.bf16.mxu0 0
        %2803 = vmatmul.mubr.bf16.gmra.mrb[0].mxu0 %v2671
        %v2804 = vpop.f32.mrb[0].mxu0
        %v2805 = vadd.f32 0.0, %v2804
        %v2806 = vpop.f32.mrb[0].mxu0
        %v2807 = vadd.f32 0.0, %v2806
        %v2808 = vpop.f32.mrb[0].mxu0
        %v2809 = vadd.f32 0.0, %v2808
        %v2810 = vpop.f32.mrb[0].mxu0
        %v2811 = vadd.f32 0.0, %v2810
        %2812 = vmatprep.mubr.bf16.mxu0 0
        %2813 = vmatmul.mubr.bf16.gmra.mrb[0].mxu0 %v2674
        %v2814 = vpop.f32.mrb[0].mxu0
        %v2815 = vadd.f32 0.0, %v2814
        %v2816 = vpop.f32.mrb[0].mxu0
        %v2817 = vadd.f32 0.0, %v2816
        %v2818 = vpop.f32.mrb[0].mxu0
        %v2819 = vadd.f32 0.0, %v2818
        %v2820 = vpop.f32.mrb[0].mxu0
        %v2821 = vadd.f32 0.0, %v2820
        %2822 = vmatprep.mubr.bf16.mxu0 0
        %2823 = vmatmul.mubr.bf16.gmra.mrb[0].mxu0 %v2677
        %v2824 = vpop.f32.mrb[0].mxu0
        %v2825 = vadd.f32 0.0, %v2824
        %v2826 = vpop.f32.mrb[0].mxu0
        %v2827 = vadd.f32 0.0, %v2826
        %v2828 = vpop.f32.mrb[0].mxu0
        %v2829 = vadd.f32 0.0, %v2828
        %v2830 = vpop.f32.mrb[0].mxu0
        %v2831 = vadd.f32 0.0, %v2830
        %2832 = vmatprep.mubr.bf16.mxu0 0
        %2833 = vmatmul.mubr.bf16.gmra.mrb[0].mxu0 %v2680
        %v2834 = vpop.f32.mrb[0].mxu0
        %v2835 = vadd.f32 0.0, %v2834
        %v2836 = vpop.f32.mrb[0].mxu0
        %v2837 = vadd.f32 0.0, %v2836
        %v2838 = vpop.f32.mrb[0].mxu0
        %v2839 = vadd.f32 0.0, %v2838
        %v2840 = vpop.f32.mrb[0].mxu0
        %v2841 = vadd.f32 0.0, %v2840
        %2842 = vdwg.mxu0
        %v2843 = vmax.f32 %v2765, %v2767
        %2844 = vmax.xlane.f32.xlu0 %v2843
        %v2845 = vpop.xlane.xlu0 %2844
        %v2846 = vmax.f32 %v2769, %v2771
        %2847 = vmax.xlane.f32.xlu0 %v2846
        %v2848 = vpop.xlane.xlu0 %2847
        %v2849 = vmax.f32 %v2775, %v2777
        %2850 = vmax.xlane.f32.xlu0 %v2849
        %v2851 = vpop.xlane.xlu0 %2850
        %v2852 = vmax.f32 %v2779, %v2781
        %2853 = vmax.xlane.f32.xlu0 %v2852
        %v2854 = vpop.xlane.xlu0 %2853
        %v2855 = vmax.f32 %v2785, %v2787
        %2856 = vmax.xlane.f32.xlu0 %v2855
        %v2857 = vpop.xlane.xlu0 %2856
        %v2858 = vmax.f32 %v2789, %v2791
        %2859 = vmax.xlane.f32.xlu0 %v2858
        %v2860 = vpop.xlane.xlu0 %2859
        %v2861 = vmax.f32 %v2795, %v2797
        %2862 = vmax.xlane.f32.xlu0 %v2861
        %v2863 = vpop.xlane.xlu0 %2862
        %v2864 = vmax.f32 %v2799, %v2801
        %2865 = vmax.xlane.f32.xlu0 %v2864
        %v2866 = vpop.xlane.xlu0 %2865
        %v2867 = vmax.f32 %v2805, %v2807
        %2868 = vmax.xlane.f32.xlu0 %v2867
        %v2869 = vpop.xlane.xlu0 %2868
        %v2870 = vmax.f32 %v2809, %v2811
        %2871 = vmax.xlane.f32.xlu0 %v2870
        %v2872 = vpop.xlane.xlu0 %2871
        %v2873 = vmax.f32 %v2815, %v2817
        %2874 = vmax.xlane.f32.xlu0 %v2873
        %v2875 = vpop.xlane.xlu0 %2874
        %v2876 = vmax.f32 %v2819, %v2821
        %2877 = vmax.xlane.f32.xlu0 %v2876
        %v2878 = vpop.xlane.xlu0 %2877
        %v2879 = vmax.f32 %v2825, %v2827
        %2880 = vmax.xlane.f32.xlu0 %v2879
        %v2881 = vpop.xlane.xlu0 %2880
        %v2882 = vmax.f32 %v2829, %v2831
        %2883 = vmax.xlane.f32.xlu0 %v2882
        %v2884 = vpop.xlane.xlu0 %2883
        %v2885 = vmax.f32 %v2835, %v2837
        %2886 = vmax.xlane.f32.xlu0 %v2885
        %v2887 = vpop.xlane.xlu0 %2886
        %v2888 = vmax.f32 %v2839, %v2841
        %2889 = vmax.xlane.f32.xlu0 %v2888
        %v2890 = vpop.xlane.xlu0 %2889
        %v2891 = vsub.f32 %v2765, %v2845
        %v2892 = vsub.f32 %v2767, %v2845
        %v2893 = vsub.f32 %v2769, %v2848
        %v2894 = vsub.f32 %v2771, %v2848
        %v2895 = vsub.f32 %v2775, %v2851
        %v2896 = vsub.f32 %v2777, %v2851
        %v2897 = vsub.f32 %v2779, %v2854
        %v2898 = vsub.f32 %v2781, %v2854
        %v2899 = vsub.f32 %v2785, %v2857
        %v2900 = vsub.f32 %v2787, %v2857
        %v2901 = vsub.f32 %v2789, %v2860
        %v2902 = vsub.f32 %v2791, %v2860
        %v2903 = vsub.f32 %v2795, %v2863
        %v2904 = vsub.f32 %v2797, %v2863
        %v2905 = vsub.f32 %v2799, %v2866
        %v2906 = vsub.f32 %v2801, %v2866
        %v2907 = vsub.f32 %v2805, %v2869
        %v2908 = vsub.f32 %v2807, %v2869
        %v2909 = vsub.f32 %v2809, %v2872
        %v2910 = vsub.f32 %v2811, %v2872
        %v2911 = vsub.f32 %v2815, %v2875
        %v2912 = vsub.f32 %v2817, %v2875
        %v2913 = vsub.f32 %v2819, %v2878
        %v2914 = vsub.f32 %v2821, %v2878
        %v2915 = vsub.f32 %v2825, %v2881
        %v2916 = vsub.f32 %v2827, %v2881
        %v2917 = vsub.f32 %v2829, %v2884
        %v2918 = vsub.f32 %v2831, %v2884
        %v2919 = vsub.f32 %v2835, %v2887
        %v2920 = vsub.f32 %v2837, %v2887
        %v2921 = vsub.f32 %v2839, %v2890
        %v2922 = vsub.f32 %v2841, %v2890
        %v2923 = vmul.f32 %v2891, 1.442695
        %v2924 = vpow.pop %v2923
        %v2925 = vmul.f32 %v2892, 1.442695
        %v2926 = vpow.pop %v2925
        %v2927 = vmul.f32 %v2893, 1.442695
        %v2928 = vpow.pop %v2927
        %v2929 = vmul.f32 %v2894, 1.442695
        %v2930 = vpow.pop %v2929
        %v2931 = vmul.f32 %v2895, 1.442695
        %v2932 = vpow.pop %v2931
        %v2933 = vmul.f32 %v2896, 1.442695
        %v2934 = vpow.pop %v2933
        %v2935 = vmul.f32 %v2897, 1.442695
        %v2936 = vpow.pop %v2935
        %v2937 = vmul.f32 %v2898, 1.442695
        %v2938 = vpow.pop %v2937
        %v2939 = vmul.f32 %v2899, 1.442695
        %v2940 = vpow.pop %v2939
        %v2941 = vmul.f32 %v2900, 1.442695
        %v2942 = vpow.pop %v2941
        %v2943 = vmul.f32 %v2901, 1.442695
        %v2944 = vpow.pop %v2943
        %v2945 = vmul.f32 %v2902, 1.442695
        %v2946 = vpow.pop %v2945
        %v2947 = vmul.f32 %v2903, 1.442695
        %v2948 = vpow.pop %v2947
        %v2949 = vmul.f32 %v2904, 1.442695
        %v2950 = vpow.pop %v2949
        %v2951 = vmul.f32 %v2905, 1.442695
        %v2952 = vpow.pop %v2951
        %v2953 = vmul.f32 %v2906, 1.442695
        %v2954 = vpow.pop %v2953
        %v2955 = vmul.f32 %v2907, 1.442695
        %v2956 = vpow.pop %v2955
        %v2957 = vmul.f32 %v2908, 1.442695
        %v2958 = vpow.pop %v2957
        %v2959 = vmul.f32 %v2909, 1.442695
        %v2960 = vpow.pop %v2959
        %v2961 = vmul.f32 %v2910, 1.442695
        %v2962 = vpow.pop %v2961
        %v2963 = vmul.f32 %v2911, 1.442695
        %v2964 = vpow.pop %v2963
        %v2965 = vmul.f32 %v2912, 1.442695
        %v2966 = vpow.pop %v2965
        %v2967 = vmul.f32 %v2913, 1.442695
        %v2968 = vpow.pop %v2967
        %v2969 = vmul.f32 %v2914, 1.442695
        %v2970 = vpow.pop %v2969
        %v2971 = vmul.f32 %v2915, 1.442695
        %v2972 = vpow.pop %v2971
        %v2973 = vmul.f32 %v2916, 1.442695
        %v2974 = vpow.pop %v2973
        %v2975 = vmul.f32 %v2917, 1.442695
        %v2976 = vpow.pop %v2975
        %v2977 = vmul.f32 %v2918, 1.442695
        %v2978 = vpow.pop %v2977
        %v2979 = vmul.f32 %v2919, 1.442695
        %v2980 = vpow.pop %v2979
        %v2981 = vmul.f32 %v2920, 1.442695
        %v2982 = vpow.pop %v2981
        %v2983 = vmul.f32 %v2921, 1.442695
        %v2984 = vpow.pop %v2983
        %v2985 = vmul.f32 %v2922, 1.442695
        %v2986 = vpow.pop %v2985
        %v2987 = vadd.f32 %v2924, %v2926
        %2988 = vadd.xlane.f32.xlu0 %v2987
        %v2989 = vpop.xlane.xlu0 %2988
        %v2990 = vadd.f32 %v2928, %v2930
        %2991 = vadd.xlane.f32.xlu0 %v2990
        %v2992 = vpop.xlane.xlu0 %2991
        %v2993 = vadd.f32 %v2932, %v2934
        %2994 = vadd.xlane.f32.xlu0 %v2993
        %v2995 = vpop.xlane.xlu0 %2994
        %v2996 = vadd.f32 %v2936, %v2938
        %2997 = vadd.xlane.f32.xlu0 %v2996
        %v2998 = vpop.xlane.xlu0 %2997
        %v2999 = vadd.f32 %v2940, %v2942
        %3000 = vadd.xlane.f32.xlu0 %v2999
        %v3001 = vpop.xlane.xlu0 %3000
        %v3002 = vadd.f32 %v2944, %v2946
        %3003 = vadd.xlane.f32.xlu0 %v3002
        %v3004 = vpop.xlane.xlu0 %3003
        %v3005 = vadd.f32 %v2948, %v2950
        %3006 = vadd.xlane.f32.xlu0 %v3005
        %v3007 = vpop.xlane.xlu0 %3006
        %v3008 = vadd.f32 %v2952, %v2954
        %3009 = vadd.xlane.f32.xlu0 %v3008
        %v3010 = vpop.xlane.xlu0 %3009
        %v3011 = vadd.f32 %v2956, %v2958
        %3012 = vadd.xlane.f32.xlu0 %v3011
        %v3013 = vpop.xlane.xlu0 %3012
        %v3014 = vadd.f32 %v2960, %v2962
        %3015 = vadd.xlane.f32.xlu0 %v3014
        %v3016 = vpop.xlane.xlu0 %3015
        %v3017 = vadd.f32 %v2964, %v2966
        %3018 = vadd.xlane.f32.xlu0 %v3017
        %v3019 = vpop.xlane.xlu0 %3018
        %v3020 = vadd.f32 %v2968, %v2970
        %3021 = vadd.xlane.f32.xlu0 %v3020
        %v3022 = vpop.xlane.xlu0 %3021
        %v3023 = vadd.f32 %v2972, %v2974
        %3024 = vadd.xlane.f32.xlu0 %v3023
        %v3025 = vpop.xlane.xlu0 %3024
        %v3026 = vadd.f32 %v2976, %v2978
        %3027 = vadd.xlane.f32.xlu0 %v3026
        %v3028 = vpop.xlane.xlu0 %3027
        %v3029 = vadd.f32 %v2980, %v2982
        %3030 = vadd.xlane.f32.xlu0 %v3029
        %v3031 = vpop.xlane.xlu0 %3030
        %v3032 = vadd.f32 %v2984, %v2986
        %3033 = vadd.xlane.f32.xlu0 %v3032
        %v3034 = vpop.xlane.xlu0 %3033
        %v3035 = vrcp.pop %v2989
        %v3036 = vrcp.pop %v2992
        %v3037 = vrcp.pop %v2995
        %v3038 = vrcp.pop %v2998
        %v3039 = vrcp.pop %v3001
        %v3040 = vrcp.pop %v3004
        %v3041 = vrcp.pop %v3007
        %v3042 = vrcp.pop %v3010
        %v3043 = vrcp.pop %v3013
        %v3044 = vrcp.pop %v3016
        %v3045 = vrcp.pop %v3019
        %v3046 = vrcp.pop %v3022
        %v3047 = vrcp.pop %v3025
        %v3048 = vrcp.pop %v3028
        %v3049 = vrcp.pop %v3031
        %v3050 = vrcp.pop %v3034
        %v3051 = vmul.f32 %v2924, %v3035
        %v3052 = vmul.f32 %v2926, %v3035
        %v3053 = vmul.f32 %v2928, %v3036
        %v3054 = vmul.f32 %v2930, %v3036
        %v3055 = vmul.f32 %v2932, %v3037
        %v3056 = vmul.f32 %v2934, %v3037
        %v3057 = vmul.f32 %v2936, %v3038
        %v3058 = vmul.f32 %v2938, %v3038
        %v3059 = vmul.f32 %v2940, %v3039
        %v3060 = vmul.f32 %v2942, %v3039
        %v3061 = vmul.f32 %v2944, %v3040
        %v3062 = vmul.f32 %v2946, %v3040
        %v3063 = vmul.f32 %v2948, %v3041
        %v3064 = vmul.f32 %v2950, %v3041
        %v3065 = vmul.f32 %v2952, %v3042
        %v3066 = vmul.f32 %v2954, %v3042
        %v3067 = vmul.f32 %v2956, %v3043
        %v3068 = vmul.f32 %v2958, %v3043
        %v3069 = vmul.f32 %v2960, %v3044
        %v3070 = vmul.f32 %v2962, %v3044
        %v3071 = vmul.f32 %v2964, %v3045
        %v3072 = vmul.f32 %v2966, %v3045
        %v3073 = vmul.f32 %v2968, %v3046
        %v3074 = vmul.f32 %v2970, %v3046
        %v3075 = vmul.f32 %v2972, %v3047
        %v3076 = vmul.f32 %v2974, %v3047
        %v3077 = vmul.f32 %v2976, %v3048
        %v3078 = vmul.f32 %v2978, %v3048
        %v3079 = vmul.f32 %v2980, %v3049
        %v3080 = vmul.f32 %v2982, %v3049
        %v3081 = vmul.f32 %v2984, %v3050
        %v3082 = vmul.f32 %v2986, %v3050
        %s3083 = scalar_lea.vmem %s369, 512 [#allocation11]
        %3084 = vst [vmem:[%s3083] sm:$0xff] %v3051
        %3085 = vst [vmem:[%s3083 + $0x8] sm:$0xff] %v3052
        %3086 = vst [vmem:[%s3083 + $0x10] sm:$0xff] %v3053
        %3087 = vst [vmem:[%s3083 + $0x18] sm:$0xff] %v3054
        %3088 = vst [vmem:[%s3083 + $0x20] sm:$0xff] %v3055
        %3089 = vst [vmem:[%s3083 + $0x28] sm:$0xff] %v3056
        %3090 = vst [vmem:[%s3083 + $0x30] sm:$0xff] %v3057
        %3091 = vst [vmem:[%s3083 + $0x38] sm:$0xff] %v3058
        %3092 = vst [vmem:[%s3083 + $0x40] sm:$0xff] %v3059
        %3093 = vst [vmem:[%s3083 + $0x48] sm:$0xff] %v3060
        %3094 = vst [vmem:[%s3083 + $0x50] sm:$0xff] %v3061
        %3095 = vst [vmem:[%s3083 + $0x58] sm:$0xff] %v3062
        %3096 = vst [vmem:[%s3083 + $0x60] sm:$0xff] %v3063
        %3097 = vst [vmem:[%s3083 + $0x68] sm:$0xff] %v3064
        %3098 = vst [vmem:[%s3083 + $0x70] sm:$0xff] %v3065
        %3099 = vst [vmem:[%s3083 + $0x78] sm:$0xff] %v3066
        %3100 = vst [vmem:[%s3083 + $0x80] sm:$0xff] %v3067
        %3101 = vst [vmem:[%s3083 + $0x88] sm:$0xff] %v3068
        %3102 = vst [vmem:[%s3083 + $0x90] sm:$0xff] %v3069
        %3103 = vst [vmem:[%s3083 + $0x98] sm:$0xff] %v3070
        %3104 = vst [vmem:[%s3083 + $0xa0] sm:$0xff] %v3071
        %3105 = vst [vmem:[%s3083 + $0xa8] sm:$0xff] %v3072
        %3106 = vst [vmem:[%s3083 + $0xb0] sm:$0xff] %v3073
        %3107 = vst [vmem:[%s3083 + $0xb8] sm:$0xff] %v3074
        %3108 = vst [vmem:[%s3083 + $0xc0] sm:$0xff] %v3075
        %3109 = vst [vmem:[%s3083 + $0xc8] sm:$0xff] %v3076
        %3110 = vst [vmem:[%s3083 + $0xd0] sm:$0xff] %v3077
        %3111 = vst [vmem:[%s3083 + $0xd8] sm:$0xff] %v3078
        %3112 = vst [vmem:[%s3083 + $0xe0] sm:$0xff] %v3079
        %3113 = vst [vmem:[%s3083 + $0xe8] sm:$0xff] %v3080
        %3114 = vst [vmem:[%s3083 + $0xf0] sm:$0xff] %v3081
        %3115 = vst [vmem:[%s3083 + $0xf8] sm:$0xff] %v3082
        %s3116 = scalar_lea.vmem [#allocation2], 384
        %v3117 = vld [vmem:[%s3116] sm:$0xff]
        %v3118 = vld [vmem:[%s3116 + $0x8] sm:$0xff]
        %v3119 = vld [vmem:[%s3116 + $0x10] sm:$0xff]
        %v3120 = vld [vmem:[%s3116 + $0x18] sm:$0xff]
        %v3121 = vld [vmem:[%s3116 + $0x20] sm:$0xff]
        %v3122 = vld [vmem:[%s3116 + $0x28] sm:$0xff]
        %v3123 = vld [vmem:[%s3116 + $0x30] sm:$0xff]
        %v3124 = vld [vmem:[%s3116 + $0x38] sm:$0xff]
        %v3125 = vld [vmem:[%s3116 + $0x40] sm:$0xff]
        %v3126 = vld [vmem:[%s3116 + $0x48] sm:$0xff]
        %v3127 = vld [vmem:[%s3116 + $0x50] sm:$0xff]
        %v3128 = vld [vmem:[%s3116 + $0x58] sm:$0xff]
        %v3129 = vld [vmem:[%s3116 + $0x60] sm:$0xff]
        %v3130 = vld [vmem:[%s3116 + $0x68] sm:$0xff]
        %v3131 = vld [vmem:[%s3116 + $0x70] sm:$0xff]
        %v3132 = vld [vmem:[%s3116 + $0x78] sm:$0xff]
        %3141 = vrot.lane.b32.xlu0 %v1645, 64
        %v3142 = vpop.permute.xlu0 %3141
        %3143 = vrot.lane.b32.xlu0 %v1648, 64
        %v3144 = vpop.permute.xlu0 %3143
        %3145 = vrot.lane.b32.xlu0 %v1651, 64
        %v3146 = vpop.permute.xlu0 %3145
        %3147 = vrot.lane.b32.xlu0 %v1654, 64
        %v3148 = vpop.permute.xlu0 %3147
        %3149 = vrot.lane.b32.xlu0 %v1657, 64
        %v3150 = vpop.permute.xlu0 %3149
        %3151 = vrot.lane.b32.xlu0 %v1660, 64
        %v3152 = vpop.permute.xlu0 %3151
        %3153 = vrot.lane.b32.xlu0 %v1663, 64
        %v3154 = vpop.permute.xlu0 %3153
        %3155 = vrot.lane.b32.xlu0 %v1666, 64
        %v3156 = vpop.permute.xlu0 %3155
        %v3158 = vsel %vm1684, %v3142, 0
        %v3161 = vsel %vm1684, %v3144, 0
        %v3164 = vsel %vm1684, %v3146, 0
        %v3167 = vsel %vm1684, %v3148, 0
        %v3170 = vsel %vm1684, %v3150, 0
        %v3173 = vsel %vm1684, %v3152, 0
        %v3176 = vsel %vm1684, %v3154, 0
        %v3179 = vsel %vm1684, %v3156, 0
        %v3182 = vsel %vm1684, %v3117, 0
        %v3185 = vsel %vm1684, %v3118, 0
        %v3188 = vsel %vm1684, %v3119, 0
        %v3191 = vsel %vm1684, %v3120, 0
        %v3194 = vsel %vm1684, %v3121, 0
        %v3197 = vsel %vm1684, %v3122, 0
        %v3200 = vsel %vm1684, %v3123, 0
        %v3203 = vsel %vm1684, %v3124, 0
        %v3206 = vsel %vm1684, %v3125, 0
        %v3209 = vsel %vm1684, %v3126, 0
        %v3212 = vsel %vm1684, %v3127, 0
        %v3215 = vsel %vm1684, %v3128, 0
        %v3218 = vsel %vm1684, %v3129, 0
        %v3221 = vsel %vm1684, %v3130, 0
        %v3224 = vsel %vm1684, %v3131, 0
        %v3227 = vsel %vm1684, %v3132, 0
        %3229 = vmatprep.subr.bf16.mxu0 0
        %3230 = vmatpush1.bf16.xpose.msra.mxu0 %v3182
        %3231 = vmatprep.subr.bf16.mxu0 0
        %3232 = vmatpush1.bf16.xpose.msra.mxu0 %v3185
        %3233 = vmatprep.subr.bf16.mxu0 0
        %3234 = vmatpush1.bf16.xpose.msra.mxu0 %v3188
        %3235 = vmatprep.subr.bf16.mxu0 0
        %3236 = vmatpush1.bf16.xpose.msra.mxu0 %v3191
        %3237 = vmatprep.subr.bf16.mxu0 0
        %3238 = vmatpush1.bf16.xpose.msra.mxu0 %v3194
        %3239 = vmatprep.subr.bf16.mxu0 0
        %3240 = vmatpush1.bf16.xpose.msra.mxu0 %v3197
        %3241 = vmatprep.subr.bf16.mxu0 0
        %3242 = vmatpush1.bf16.xpose.msra.mxu0 %v3200
        %3243 = vmatprep.subr.bf16.mxu0 0
        %3244 = vmatpush1.bf16.xpose.msra.mxu0 %v3203
        %3245 = vmatprep.subr.bf16.mxu0 0
        %3246 = vmatpush1.bf16.xpose.msra.mxu0 %v3206
        %3247 = vmatprep.subr.bf16.mxu0 0
        %3248 = vmatpush1.bf16.xpose.msra.mxu0 %v3209
        %3249 = vmatprep.subr.bf16.mxu0 0
        %3250 = vmatpush1.bf16.xpose.msra.mxu0 %v3212
        %3251 = vmatprep.subr.bf16.mxu0 0
        %3252 = vmatpush1.bf16.xpose.msra.mxu0 %v3215
        %3253 = vmatprep.subr.bf16.mxu0 0
        %3254 = vmatpush1.bf16.xpose.msra.mxu0 %v3218
        %3255 = vmatprep.subr.bf16.mxu0 0
        %3256 = vmatpush1.bf16.xpose.msra.mxu0 %v3221
        %3257 = vmatprep.subr.bf16.mxu0 0
        %3258 = vmatpush1.bf16.xpose.msra.mxu0 %v3224
        %3259 = vmatprep.subr.bf16.mxu0 0
        %3260 = vmatpush1.bf16.xpose.msra.mxu0 %v3227
        %3261 = vmatprep.mubr.bf16.mxu0 0
        %3262 = vmatmul.mubr.bf16.gmra.mrb[0].mxu0 %v3158
        %v3263 = vpop.f32.mrb[0].mxu0
        %v3264 = vadd.f32 0.0, %v3263
        %v3265 = vpop.f32.mrb[0].mxu0
        %v3266 = vadd.f32 0.0, %v3265
        %v3267 = vpop.f32.mrb[0].mxu0
        %v3268 = vadd.f32 0.0, %v3267
        %v3269 = vpop.f32.mrb[0].mxu0
        %v3270 = vadd.f32 0.0, %v3269
        %3271 = vmatprep.mubr.bf16.mxu0 0
        %3272 = vmatmul.mubr.bf16.gmra.mrb[0].mxu0 %v3161
        %v3273 = vpop.f32.mrb[0].mxu0
        %v3274 = vadd.f32 0.0, %v3273
        %v3275 = vpop.f32.mrb[0].mxu0
        %v3276 = vadd.f32 0.0, %v3275
        %v3277 = vpop.f32.mrb[0].mxu0
        %v3278 = vadd.f32 0.0, %v3277
        %v3279 = vpop.f32.mrb[0].mxu0
        %v3280 = vadd.f32 0.0, %v3279
        %3281 = vmatprep.mubr.bf16.mxu0 0
        %3282 = vmatmul.mubr.bf16.gmra.mrb[0].mxu0 %v3164
        %v3283 = vpop.f32.mrb[0].mxu0
        %v3284 = vadd.f32 0.0, %v3283
        %v3285 = vpop.f32.mrb[0].mxu0
        %v3286 = vadd.f32 0.0, %v3285
        %v3287 = vpop.f32.mrb[0].mxu0
        %v3288 = vadd.f32 0.0, %v3287
        %v3289 = vpop.f32.mrb[0].mxu0
        %v3290 = vadd.f32 0.0, %v3289
        %3291 = vmatprep.mubr.bf16.mxu0 0
        %3292 = vmatmul.mubr.bf16.gmra.mrb[0].mxu0 %v3167
        %v3293 = vpop.f32.mrb[0].mxu0
        %v3294 = vadd.f32 0.0, %v3293
        %v3295 = vpop.f32.mrb[0].mxu0
        %v3296 = vadd.f32 0.0, %v3295
        %v3297 = vpop.f32.mrb[0].mxu0
        %v3298 = vadd.f32 0.0, %v3297
        %v3299 = vpop.f32.mrb[0].mxu0
        %v3300 = vadd.f32 0.0, %v3299
        %3301 = vmatprep.mubr.bf16.mxu0 0
        %3302 = vmatmul.mubr.bf16.gmra.mrb[0].mxu0 %v3170
        %v3303 = vpop.f32.mrb[0].mxu0
        %v3304 = vadd.f32 0.0, %v3303
        %v3305 = vpop.f32.mrb[0].mxu0
        %v3306 = vadd.f32 0.0, %v3305
        %v3307 = vpop.f32.mrb[0].mxu0
        %v3308 = vadd.f32 0.0, %v3307
        %v3309 = vpop.f32.mrb[0].mxu0
        %v3310 = vadd.f32 0.0, %v3309
        %3311 = vmatprep.mubr.bf16.mxu0 0
        %3312 = vmatmul.mubr.bf16.gmra.mrb[0].mxu0 %v3173
        %v3313 = vpop.f32.mrb[0].mxu0
        %v3314 = vadd.f32 0.0, %v3313
        %v3315 = vpop.f32.mrb[0].mxu0
        %v3316 = vadd.f32 0.0, %v3315
        %v3317 = vpop.f32.mrb[0].mxu0
        %v3318 = vadd.f32 0.0, %v3317
        %v3319 = vpop.f32.mrb[0].mxu0
        %v3320 = vadd.f32 0.0, %v3319
        %3321 = vmatprep.mubr.bf16.mxu0 0
        %3322 = vmatmul.mubr.bf16.gmra.mrb[0].mxu0 %v3176
        %v3323 = vpop.f32.mrb[0].mxu0
        %v3324 = vadd.f32 0.0, %v3323
        %v3325 = vpop.f32.mrb[0].mxu0
        %v3326 = vadd.f32 0.0, %v3325
        %v3327 = vpop.f32.mrb[0].mxu0
        %v3328 = vadd.f32 0.0, %v3327
        %v3329 = vpop.f32.mrb[0].mxu0
        %v3330 = vadd.f32 0.0, %v3329
        %3331 = vmatprep.mubr.bf16.mxu0 0
        %3332 = vmatmul.mubr.bf16.gmra.mrb[0].mxu0 %v3179
        %v3333 = vpop.f32.mrb[0].mxu0
        %v3334 = vadd.f32 0.0, %v3333
        %v3335 = vpop.f32.mrb[0].mxu0
        %v3336 = vadd.f32 0.0, %v3335
        %v3337 = vpop.f32.mrb[0].mxu0
        %v3338 = vadd.f32 0.0, %v3337
        %v3339 = vpop.f32.mrb[0].mxu0
        %v3340 = vadd.f32 0.0, %v3339
        %3341 = vdwg.mxu0
        %v3342 = vmax.f32 %v3264, %v3266
        %3343 = vmax.xlane.f32.xlu0 %v3342
        %v3344 = vpop.xlane.xlu0 %3343
        %v3345 = vmax.f32 %v3268, %v3270
        %3346 = vmax.xlane.f32.xlu0 %v3345
        %v3347 = vpop.xlane.xlu0 %3346
        %v3348 = vmax.f32 %v3274, %v3276
        %3349 = vmax.xlane.f32.xlu0 %v3348
        %v3350 = vpop.xlane.xlu0 %3349
        %v3351 = vmax.f32 %v3278, %v3280
        %3352 = vmax.xlane.f32.xlu0 %v3351
        %v3353 = vpop.xlane.xlu0 %3352
        %v3354 = vmax.f32 %v3284, %v3286
        %3355 = vmax.xlane.f32.xlu0 %v3354
        %v3356 = vpop.xlane.xlu0 %3355
        %v3357 = vmax.f32 %v3288, %v3290
        %3358 = vmax.xlane.f32.xlu0 %v3357
        %v3359 = vpop.xlane.xlu0 %3358
        %v3360 = vmax.f32 %v3294, %v3296
        %3361 = vmax.xlane.f32.xlu0 %v3360
        %v3362 = vpop.xlane.xlu0 %3361
        %v3363 = vmax.f32 %v3298, %v3300
        %3364 = vmax.xlane.f32.xlu0 %v3363
        %v3365 = vpop.xlane.xlu0 %3364
        %v3366 = vmax.f32 %v3304, %v3306
        %3367 = vmax.xlane.f32.xlu0 %v3366
        %v3368 = vpop.xlane.xlu0 %3367
        %v3369 = vmax.f32 %v3308, %v3310
        %3370 = vmax.xlane.f32.xlu0 %v3369
        %v3371 = vpop.xlane.xlu0 %3370
        %v3372 = vmax.f32 %v3314, %v3316
        %3373 = vmax.xlane.f32.xlu0 %v3372
        %v3374 = vpop.xlane.xlu0 %3373
        %v3375 = vmax.f32 %v3318, %v3320
        %3376 = vmax.xlane.f32.xlu0 %v3375
        %v3377 = vpop.xlane.xlu0 %3376
        %v3378 = vmax.f32 %v3324, %v3326
        %3379 = vmax.xlane.f32.xlu0 %v3378
        %v3380 = vpop.xlane.xlu0 %3379
        %v3381 = vmax.f32 %v3328, %v3330
        %3382 = vmax.xlane.f32.xlu0 %v3381
        %v3383 = vpop.xlane.xlu0 %3382
        %v3384 = vmax.f32 %v3334, %v3336
        %3385 = vmax.xlane.f32.xlu0 %v3384
        %v3386 = vpop.xlane.xlu0 %3385
        %v3387 = vmax.f32 %v3338, %v3340
        %3388 = vmax.xlane.f32.xlu0 %v3387
        %v3389 = vpop.xlane.xlu0 %3388
        %v3390 = vsub.f32 %v3264, %v3344
        %v3391 = vsub.f32 %v3266, %v3344
        %v3392 = vsub.f32 %v3268, %v3347
        %v3393 = vsub.f32 %v3270, %v3347
        %v3394 = vsub.f32 %v3274, %v3350
        %v3395 = vsub.f32 %v3276, %v3350
        %v3396 = vsub.f32 %v3278, %v3353
        %v3397 = vsub.f32 %v3280, %v3353
        %v3398 = vsub.f32 %v3284, %v3356
        %v3399 = vsub.f32 %v3286, %v3356
        %v3400 = vsub.f32 %v3288, %v3359
        %v3401 = vsub.f32 %v3290, %v3359
        %v3402 = vsub.f32 %v3294, %v3362
        %v3403 = vsub.f32 %v3296, %v3362
        %v3404 = vsub.f32 %v3298, %v3365
        %v3405 = vsub.f32 %v3300, %v3365
        %v3406 = vsub.f32 %v3304, %v3368
        %v3407 = vsub.f32 %v3306, %v3368
        %v3408 = vsub.f32 %v3308, %v3371
        %v3409 = vsub.f32 %v3310, %v3371
        %v3410 = vsub.f32 %v3314, %v3374
        %v3411 = vsub.f32 %v3316, %v3374
        %v3412 = vsub.f32 %v3318, %v3377
        %v3413 = vsub.f32 %v3320, %v3377
        %v3414 = vsub.f32 %v3324, %v3380
        %v3415 = vsub.f32 %v3326, %v3380
        %v3416 = vsub.f32 %v3328, %v3383
        %v3417 = vsub.f32 %v3330, %v3383
        %v3418 = vsub.f32 %v3334, %v3386
        %v3419 = vsub.f32 %v3336, %v3386
        %v3420 = vsub.f32 %v3338, %v3389
        %v3421 = vsub.f32 %v3340, %v3389
        %v3422 = vmul.f32 %v3390, 1.442695
        %v3423 = vpow.pop %v3422
        %v3424 = vmul.f32 %v3391, 1.442695
        %v3425 = vpow.pop %v3424
        %v3426 = vmul.f32 %v3392, 1.442695
        %v3427 = vpow.pop %v3426
        %v3428 = vmul.f32 %v3393, 1.442695
        %v3429 = vpow.pop %v3428
        %v3430 = vmul.f32 %v3394, 1.442695
        %v3431 = vpow.pop %v3430
        %v3432 = vmul.f32 %v3395, 1.442695
        %v3433 = vpow.pop %v3432
        %v3434 = vmul.f32 %v3396, 1.442695
        %v3435 = vpow.pop %v3434
        %v3436 = vmul.f32 %v3397, 1.442695
        %v3437 = vpow.pop %v3436
        %v3438 = vmul.f32 %v3398, 1.442695
        %v3439 = vpow.pop %v3438
        %v3440 = vmul.f32 %v3399, 1.442695
        %v3441 = vpow.pop %v3440
        %v3442 = vmul.f32 %v3400, 1.442695
        %v3443 = vpow.pop %v3442
        %v3444 = vmul.f32 %v3401, 1.442695
        %v3445 = vpow.pop %v3444
        %v3446 = vmul.f32 %v3402, 1.442695
        %v3447 = vpow.pop %v3446
        %v3448 = vmul.f32 %v3403, 1.442695
        %v3449 = vpow.pop %v3448
        %v3450 = vmul.f32 %v3404, 1.442695
        %v3451 = vpow.pop %v3450
        %v3452 = vmul.f32 %v3405, 1.442695
        %v3453 = vpow.pop %v3452
        %v3454 = vmul.f32 %v3406, 1.442695
        %v3455 = vpow.pop %v3454
        %v3456 = vmul.f32 %v3407, 1.442695
        %v3457 = vpow.pop %v3456
        %v3458 = vmul.f32 %v3408, 1.442695
        %v3459 = vpow.pop %v3458
        %v3460 = vmul.f32 %v3409, 1.442695
        %v3461 = vpow.pop %v3460
        %v3462 = vmul.f32 %v3410, 1.442695
        %v3463 = vpow.pop %v3462
        %v3464 = vmul.f32 %v3411, 1.442695
        %v3465 = vpow.pop %v3464
        %v3466 = vmul.f32 %v3412, 1.442695
        %v3467 = vpow.pop %v3466
        %v3468 = vmul.f32 %v3413, 1.442695
        %v3469 = vpow.pop %v3468
        %v3470 = vmul.f32 %v3414, 1.442695
        %v3471 = vpow.pop %v3470
        %v3472 = vmul.f32 %v3415, 1.442695
        %v3473 = vpow.pop %v3472
        %v3474 = vmul.f32 %v3416, 1.442695
        %v3475 = vpow.pop %v3474
        %v3476 = vmul.f32 %v3417, 1.442695
        %v3477 = vpow.pop %v3476
        %v3478 = vmul.f32 %v3418, 1.442695
        %v3479 = vpow.pop %v3478
        %v3480 = vmul.f32 %v3419, 1.442695
        %v3481 = vpow.pop %v3480
        %v3482 = vmul.f32 %v3420, 1.442695
        %v3483 = vpow.pop %v3482
        %v3484 = vmul.f32 %v3421, 1.442695
        %v3485 = vpow.pop %v3484
        %v3486 = vadd.f32 %v3423, %v3425
        %3487 = vadd.xlane.f32.xlu0 %v3486
        %v3488 = vpop.xlane.xlu0 %3487
        %v3489 = vadd.f32 %v3427, %v3429
        %3490 = vadd.xlane.f32.xlu0 %v3489
        %v3491 = vpop.xlane.xlu0 %3490
        %v3492 = vadd.f32 %v3431, %v3433
        %3493 = vadd.xlane.f32.xlu0 %v3492
        %v3494 = vpop.xlane.xlu0 %3493
        %v3495 = vadd.f32 %v3435, %v3437
        %3496 = vadd.xlane.f32.xlu0 %v3495
        %v3497 = vpop.xlane.xlu0 %3496
        %v3498 = vadd.f32 %v3439, %v3441
        %3499 = vadd.xlane.f32.xlu0 %v3498
        %v3500 = vpop.xlane.xlu0 %3499
        %v3501 = vadd.f32 %v3443, %v3445
        %3502 = vadd.xlane.f32.xlu0 %v3501
        %v3503 = vpop.xlane.xlu0 %3502
        %v3504 = vadd.f32 %v3447, %v3449
        %3505 = vadd.xlane.f32.xlu0 %v3504
        %v3506 = vpop.xlane.xlu0 %3505
        %v3507 = vadd.f32 %v3451, %v3453
        %3508 = vadd.xlane.f32.xlu0 %v3507
        %v3509 = vpop.xlane.xlu0 %3508
        %v3510 = vadd.f32 %v3455, %v3457
        %3511 = vadd.xlane.f32.xlu0 %v3510
        %v3512 = vpop.xlane.xlu0 %3511
        %v3513 = vadd.f32 %v3459, %v3461
        %3514 = vadd.xlane.f32.xlu0 %v3513
        %v3515 = vpop.xlane.xlu0 %3514
        %v3516 = vadd.f32 %v3463, %v3465
        %3517 = vadd.xlane.f32.xlu0 %v3516
        %v3518 = vpop.xlane.xlu0 %3517
        %v3519 = vadd.f32 %v3467, %v3469
        %3520 = vadd.xlane.f32.xlu0 %v3519
        %v3521 = vpop.xlane.xlu0 %3520
        %v3522 = vadd.f32 %v3471, %v3473
        %3523 = vadd.xlane.f32.xlu0 %v3522
        %v3524 = vpop.xlane.xlu0 %3523
        %v3525 = vadd.f32 %v3475, %v3477
        %3526 = vadd.xlane.f32.xlu0 %v3525
        %v3527 = vpop.xlane.xlu0 %3526
        %v3528 = vadd.f32 %v3479, %v3481
        %3529 = vadd.xlane.f32.xlu0 %v3528
        %v3530 = vpop.xlane.xlu0 %3529
        %v3531 = vadd.f32 %v3483, %v3485
        %3532 = vadd.xlane.f32.xlu0 %v3531
        %v3533 = vpop.xlane.xlu0 %3532
        %v3534 = vrcp.pop %v3488
        %v3535 = vrcp.pop %v3491
        %v3536 = vrcp.pop %v3494
        %v3537 = vrcp.pop %v3497
        %v3538 = vrcp.pop %v3500
        %v3539 = vrcp.pop %v3503
        %v3540 = vrcp.pop %v3506
        %v3541 = vrcp.pop %v3509
        %v3542 = vrcp.pop %v3512
        %v3543 = vrcp.pop %v3515
        %v3544 = vrcp.pop %v3518
        %v3545 = vrcp.pop %v3521
        %v3546 = vrcp.pop %v3524
        %v3547 = vrcp.pop %v3527
        %v3548 = vrcp.pop %v3530
        %v3549 = vrcp.pop %v3533
        %v3550 = vmul.f32 %v3423, %v3534
        %v3551 = vmul.f32 %v3425, %v3534
        %v3552 = vmul.f32 %v3427, %v3535
        %v3553 = vmul.f32 %v3429, %v3535
        %v3554 = vmul.f32 %v3431, %v3536
        %v3555 = vmul.f32 %v3433, %v3536
        %v3556 = vmul.f32 %v3435, %v3537
        %v3557 = vmul.f32 %v3437, %v3537
        %v3558 = vmul.f32 %v3439, %v3538
        %v3559 = vmul.f32 %v3441, %v3538
        %v3560 = vmul.f32 %v3443, %v3539
        %v3561 = vmul.f32 %v3445, %v3539
        %v3562 = vmul.f32 %v3447, %v3540
        %v3563 = vmul.f32 %v3449, %v3540
        %v3564 = vmul.f32 %v3451, %v3541
        %v3565 = vmul.f32 %v3453, %v3541
        %v3566 = vmul.f32 %v3455, %v3542
        %v3567 = vmul.f32 %v3457, %v3542
        %v3568 = vmul.f32 %v3459, %v3543
        %v3569 = vmul.f32 %v3461, %v3543
        %v3570 = vmul.f32 %v3463, %v3544
        %v3571 = vmul.f32 %v3465, %v3544
        %v3572 = vmul.f32 %v3467, %v3545
        %v3573 = vmul.f32 %v3469, %v3545
        %v3574 = vmul.f32 %v3471, %v3546
        %v3575 = vmul.f32 %v3473, %v3546
        %v3576 = vmul.f32 %v3475, %v3547
        %v3577 = vmul.f32 %v3477, %v3547
        %v3578 = vmul.f32 %v3479, %v3548
        %v3579 = vmul.f32 %v3481, %v3548
        %v3580 = vmul.f32 %v3483, %v3549
        %v3581 = vmul.f32 %v3485, %v3549
        %s3582 = scalar_lea.vmem %s369, 768 [#allocation11]
        %3583 = vst [vmem:[%s3582] sm:$0xff] %v3550
        %3584 = vst [vmem:[%s3582 + $0x8] sm:$0xff] %v3551
        %3585 = vst [vmem:[%s3582 + $0x10] sm:$0xff] %v3552
        %3586 = vst [vmem:[%s3582 + $0x18] sm:$0xff] %v3553
        %3587 = vst [vmem:[%s3582 + $0x20] sm:$0xff] %v3554
        %3588 = vst [vmem:[%s3582 + $0x28] sm:$0xff] %v3555
        %3589 = vst [vmem:[%s3582 + $0x30] sm:$0xff] %v3556
        %3590 = vst [vmem:[%s3582 + $0x38] sm:$0xff] %v3557
        %3591 = vst [vmem:[%s3582 + $0x40] sm:$0xff] %v3558
        %3592 = vst [vmem:[%s3582 + $0x48] sm:$0xff] %v3559
        %3593 = vst [vmem:[%s3582 + $0x50] sm:$0xff] %v3560
        %3594 = vst [vmem:[%s3582 + $0x58] sm:$0xff] %v3561
        %3595 = vst [vmem:[%s3582 + $0x60] sm:$0xff] %v3562
        %3596 = vst [vmem:[%s3582 + $0x68] sm:$0xff] %v3563
        %3597 = vst [vmem:[%s3582 + $0x70] sm:$0xff] %v3564
        %3598 = vst [vmem:[%s3582 + $0x78] sm:$0xff] %v3565
        %3599 = vst [vmem:[%s3582 + $0x80] sm:$0xff] %v3566
        %3600 = vst [vmem:[%s3582 + $0x88] sm:$0xff] %v3567
        %3601 = vst [vmem:[%s3582 + $0x90] sm:$0xff] %v3568
        %3602 = vst [vmem:[%s3582 + $0x98] sm:$0xff] %v3569
        %3603 = vst [vmem:[%s3582 + $0xa0] sm:$0xff] %v3570
        %3604 = vst [vmem:[%s3582 + $0xa8] sm:$0xff] %v3571
        %3605 = vst [vmem:[%s3582 + $0xb0] sm:$0xff] %v3572
        %3606 = vst [vmem:[%s3582 + $0xb8] sm:$0xff] %v3573
        %3607 = vst [vmem:[%s3582 + $0xc0] sm:$0xff] %v3574
        %3608 = vst [vmem:[%s3582 + $0xc8] sm:$0xff] %v3575
        %3609 = vst [vmem:[%s3582 + $0xd0] sm:$0xff] %v3576
        %3610 = vst [vmem:[%s3582 + $0xd8] sm:$0xff] %v3577
        %3611 = vst [vmem:[%s3582 + $0xe0] sm:$0xff] %v3578
        %3612 = vst [vmem:[%s3582 + $0xe8] sm:$0xff] %v3579
        %3613 = vst [vmem:[%s3582 + $0xf0] sm:$0xff] %v3580
        %3614 = vst [vmem:[%s3582 + $0xf8] sm:$0xff] %v3581
        %s3615 = scalar_lea.vmem [#allocation2], 512
        %v3616 = vld [vmem:[%s3615] sm:$0xff]
        %v3617 = vld [vmem:[%s3615 + $0x8] sm:$0xff]
        %v3618 = vld [vmem:[%s3615 + $0x10] sm:$0xff]
        %v3619 = vld [vmem:[%s3615 + $0x18] sm:$0xff]
        %v3620 = vld [vmem:[%s3615 + $0x20] sm:$0xff]
        %v3621 = vld [vmem:[%s3615 + $0x28] sm:$0xff]
        %v3622 = vld [vmem:[%s3615 + $0x30] sm:$0xff]
        %v3623 = vld [vmem:[%s3615 + $0x38] sm:$0xff]
        %v3624 = vld [vmem:[%s3615 + $0x40] sm:$0xff]
        %v3625 = vld [vmem:[%s3615 + $0x48] sm:$0xff]
        %v3626 = vld [vmem:[%s3615 + $0x50] sm:$0xff]
        %v3627 = vld [vmem:[%s3615 + $0x58] sm:$0xff]
        %v3628 = vld [vmem:[%s3615 + $0x60] sm:$0xff]
        %v3629 = vld [vmem:[%s3615 + $0x68] sm:$0xff]
        %v3630 = vld [vmem:[%s3615 + $0x70] sm:$0xff]
        %v3631 = vld [vmem:[%s3615 + $0x78] sm:$0xff]
        %v3633 = vsel %vm1684, %v1646, 0
        %v3636 = vsel %vm1684, %v1649, 0
        %v3639 = vsel %vm1684, %v1652, 0
        %v3642 = vsel %vm1684, %v1655, 0
        %v3645 = vsel %vm1684, %v1658, 0
        %v3648 = vsel %vm1684, %v1661, 0
        %v3651 = vsel %vm1684, %v1664, 0
        %v3654 = vsel %vm1684, %v1667, 0
        %v3657 = vsel %vm1684, %v3616, 0
        %v3660 = vsel %vm1684, %v3617, 0
        %v3663 = vsel %vm1684, %v3618, 0
        %v3666 = vsel %vm1684, %v3619, 0
        %v3669 = vsel %vm1684, %v3620, 0
        %v3672 = vsel %vm1684, %v3621, 0
        %v3675 = vsel %vm1684, %v3622, 0
        %v3678 = vsel %vm1684, %v3623, 0
        %v3681 = vsel %vm1684, %v3624, 0
        %v3684 = vsel %vm1684, %v3625, 0
        %v3687 = vsel %vm1684, %v3626, 0
        %v3690 = vsel %vm1684, %v3627, 0
        %v3693 = vsel %vm1684, %v3628, 0
        %v3696 = vsel %vm1684, %v3629, 0
        %v3699 = vsel %vm1684, %v3630, 0
        %v3702 = vsel %vm1684, %v3631, 0
        %3704 = vmatprep.subr.bf16.mxu0 0
        %3705 = vmatpush1.bf16.xpose.msra.mxu0 %v3657
        %3706 = vmatprep.subr.bf16.mxu0 0
        %3707 = vmatpush1.bf16.xpose.msra.mxu0 %v3660
        %3708 = vmatprep.subr.bf16.mxu0 0
        %3709 = vmatpush1.bf16.xpose.msra.mxu0 %v3663
        %3710 = vmatprep.subr.bf16.mxu0 0
        %3711 = vmatpush1.bf16.xpose.msra.mxu0 %v3666
        %3712 = vmatprep.subr.bf16.mxu0 0
        %3713 = vmatpush1.bf16.xpose.msra.mxu0 %v3669
        %3714 = vmatprep.subr.bf16.mxu0 0
        %3715 = vmatpush1.bf16.xpose.msra.mxu0 %v3672
        %3716 = vmatprep.subr.bf16.mxu0 0
        %3717 = vmatpush1.bf16.xpose.msra.mxu0 %v3675
        %3718 = vmatprep.subr.bf16.mxu0 0
        %3719 = vmatpush1.bf16.xpose.msra.mxu0 %v3678
        %3720 = vmatprep.subr.bf16.mxu0 0
        %3721 = vmatpush1.bf16.xpose.msra.mxu0 %v3681
        %3722 = vmatprep.subr.bf16.mxu0 0
        %3723 = vmatpush1.bf16.xpose.msra.mxu0 %v3684
        %3724 = vmatprep.subr.bf16.mxu0 0
        %3725 = vmatpush1.bf16.xpose.msra.mxu0 %v3687
        %3726 = vmatprep.subr.bf16.mxu0 0
        %3727 = vmatpush1.bf16.xpose.msra.mxu0 %v3690
        %3728 = vmatprep.subr.bf16.mxu0 0
        %3729 = vmatpush1.bf16.xpose.msra.mxu0 %v3693
        %3730 = vmatprep.subr.bf16.mxu0 0
        %3731 = vmatpush1.bf16.xpose.msra.mxu0 %v3696
        %3732 = vmatprep.subr.bf16.mxu0 0
        %3733 = vmatpush1.bf16.xpose.msra.mxu0 %v3699
        %3734 = vmatprep.subr.bf16.mxu0 0
        %3735 = vmatpush1.bf16.xpose.msra.mxu0 %v3702
        %3736 = vmatprep.mubr.bf16.mxu0 0
        %3737 = vmatmul.mubr.bf16.gmra.mrb[0].mxu0 %v3633
        %v3738 = vpop.f32.mrb[0].mxu0
        %v3739 = vadd.f32 0.0, %v3738
        %v3740 = vpop.f32.mrb[0].mxu0
        %v3741 = vadd.f32 0.0, %v3740
        %v3742 = vpop.f32.mrb[0].mxu0
        %v3743 = vadd.f32 0.0, %v3742
        %v3744 = vpop.f32.mrb[0].mxu0
        %v3745 = vadd.f32 0.0, %v3744
        %3746 = vmatprep.mubr.bf16.mxu0 0
        %3747 = vmatmul.mubr.bf16.gmra.mrb[0].mxu0 %v3636
        %v3748 = vpop.f32.mrb[0].mxu0
        %v3749 = vadd.f32 0.0, %v3748
        %v3750 = vpop.f32.mrb[0].mxu0
        %v3751 = vadd.f32 0.0, %v3750
        %v3752 = vpop.f32.mrb[0].mxu0
        %v3753 = vadd.f32 0.0, %v3752
        %v3754 = vpop.f32.mrb[0].mxu0
        %v3755 = vadd.f32 0.0, %v3754
        %3756 = vmatprep.mubr.bf16.mxu0 0
        %3757 = vmatmul.mubr.bf16.gmra.mrb[0].mxu0 %v3639
        %v3758 = vpop.f32.mrb[0].mxu0
        %v3759 = vadd.f32 0.0, %v3758
        %v3760 = vpop.f32.mrb[0].mxu0
        %v3761 = vadd.f32 0.0, %v3760
        %v3762 = vpop.f32.mrb[0].mxu0
        %v3763 = vadd.f32 0.0, %v3762
        %v3764 = vpop.f32.mrb[0].mxu0
        %v3765 = vadd.f32 0.0, %v3764
        %3766 = vmatprep.mubr.bf16.mxu0 0
        %3767 = vmatmul.mubr.bf16.gmra.mrb[0].mxu0 %v3642
        %v3768 = vpop.f32.mrb[0].mxu0
        %v3769 = vadd.f32 0.0, %v3768
        %v3770 = vpop.f32.mrb[0].mxu0
        %v3771 = vadd.f32 0.0, %v3770
        %v3772 = vpop.f32.mrb[0].mxu0
        %v3773 = vadd.f32 0.0, %v3772
        %v3774 = vpop.f32.mrb[0].mxu0
        %v3775 = vadd.f32 0.0, %v3774
        %3776 = vmatprep.mubr.bf16.mxu0 0
        %3777 = vmatmul.mubr.bf16.gmra.mrb[0].mxu0 %v3645
        %v3778 = vpop.f32.mrb[0].mxu0
        %v3779 = vadd.f32 0.0, %v3778
        %v3780 = vpop.f32.mrb[0].mxu0
        %v3781 = vadd.f32 0.0, %v3780
        %v3782 = vpop.f32.mrb[0].mxu0
        %v3783 = vadd.f32 0.0, %v3782
        %v3784 = vpop.f32.mrb[0].mxu0
        %v3785 = vadd.f32 0.0, %v3784
        %3786 = vmatprep.mubr.bf16.mxu0 0
        %3787 = vmatmul.mubr.bf16.gmra.mrb[0].mxu0 %v3648
        %v3788 = vpop.f32.mrb[0].mxu0
        %v3789 = vadd.f32 0.0, %v3788
        %v3790 = vpop.f32.mrb[0].mxu0
        %v3791 = vadd.f32 0.0, %v3790
        %v3792 = vpop.f32.mrb[0].mxu0
        %v3793 = vadd.f32 0.0, %v3792
        %v3794 = vpop.f32.mrb[0].mxu0
        %v3795 = vadd.f32 0.0, %v3794
        %3796 = vmatprep.mubr.bf16.mxu0 0
        %3797 = vmatmul.mubr.bf16.gmra.mrb[0].mxu0 %v3651
        %v3798 = vpop.f32.mrb[0].mxu0
        %v3799 = vadd.f32 0.0, %v3798
        %v3800 = vpop.f32.mrb[0].mxu0
        %v3801 = vadd.f32 0.0, %v3800
        %v3802 = vpop.f32.mrb[0].mxu0
        %v3803 = vadd.f32 0.0, %v3802
        %v3804 = vpop.f32.mrb[0].mxu0
        %v3805 = vadd.f32 0.0, %v3804
        %3806 = vmatprep.mubr.bf16.mxu0 0
        %3807 = vmatmul.mubr.bf16.gmra.mrb[0].mxu0 %v3654
        %v3808 = vpop.f32.mrb[0].mxu0
        %v3809 = vadd.f32 0.0, %v3808
        %v3810 = vpop.f32.mrb[0].mxu0
        %v3811 = vadd.f32 0.0, %v3810
        %v3812 = vpop.f32.mrb[0].mxu0
        %v3813 = vadd.f32 0.0, %v3812
        %v3814 = vpop.f32.mrb[0].mxu0
        %v3815 = vadd.f32 0.0, %v3814
        %3816 = vdwg.mxu0
        %v3817 = vmax.f32 %v3739, %v3741
        %3818 = vmax.xlane.f32.xlu0 %v3817
        %v3819 = vpop.xlane.xlu0 %3818
        %v3820 = vmax.f32 %v3743, %v3745
        %3821 = vmax.xlane.f32.xlu0 %v3820
        %v3822 = vpop.xlane.xlu0 %3821
        %v3823 = vmax.f32 %v3749, %v3751
        %3824 = vmax.xlane.f32.xlu0 %v3823
        %v3825 = vpop.xlane.xlu0 %3824
        %v3826 = vmax.f32 %v3753, %v3755
        %3827 = vmax.xlane.f32.xlu0 %v3826
        %v3828 = vpop.xlane.xlu0 %3827
        %v3829 = vmax.f32 %v3759, %v3761
        %3830 = vmax.xlane.f32.xlu0 %v3829
        %v3831 = vpop.xlane.xlu0 %3830
        %v3832 = vmax.f32 %v3763, %v3765
        %3833 = vmax.xlane.f32.xlu0 %v3832
        %v3834 = vpop.xlane.xlu0 %3833
        %v3835 = vmax.f32 %v3769, %v3771
        %3836 = vmax.xlane.f32.xlu0 %v3835
        %v3837 = vpop.xlane.xlu0 %3836
        %v3838 = vmax.f32 %v3773, %v3775
        %3839 = vmax.xlane.f32.xlu0 %v3838
        %v3840 = vpop.xlane.xlu0 %3839
        %v3841 = vmax.f32 %v3779, %v3781
        %3842 = vmax.xlane.f32.xlu0 %v3841
        %v3843 = vpop.xlane.xlu0 %3842
        %v3844 = vmax.f32 %v3783, %v3785
        %3845 = vmax.xlane.f32.xlu0 %v3844
        %v3846 = vpop.xlane.xlu0 %3845
        %v3847 = vmax.f32 %v3789, %v3791
        %3848 = vmax.xlane.f32.xlu0 %v3847
        %v3849 = vpop.xlane.xlu0 %3848
        %v3850 = vmax.f32 %v3793, %v3795
        %3851 = vmax.xlane.f32.xlu0 %v3850
        %v3852 = vpop.xlane.xlu0 %3851
        %v3853 = vmax.f32 %v3799, %v3801
        %3854 = vmax.xlane.f32.xlu0 %v3853
        %v3855 = vpop.xlane.xlu0 %3854
        %v3856 = vmax.f32 %v3803, %v3805
        %3857 = vmax.xlane.f32.xlu0 %v3856
        %v3858 = vpop.xlane.xlu0 %3857
        %v3859 = vmax.f32 %v3809, %v3811
        %3860 = vmax.xlane.f32.xlu0 %v3859
        %v3861 = vpop.xlane.xlu0 %3860
        %v3862 = vmax.f32 %v3813, %v3815
        %3863 = vmax.xlane.f32.xlu0 %v3862
        %v3864 = vpop.xlane.xlu0 %3863
        %v3865 = vsub.f32 %v3739, %v3819
        %v3866 = vsub.f32 %v3741, %v3819
        %v3867 = vsub.f32 %v3743, %v3822
        %v3868 = vsub.f32 %v3745, %v3822
        %v3869 = vsub.f32 %v3749, %v3825
        %v3870 = vsub.f32 %v3751, %v3825
        %v3871 = vsub.f32 %v3753, %v3828
        %v3872 = vsub.f32 %v3755, %v3828
        %v3873 = vsub.f32 %v3759, %v3831
        %v3874 = vsub.f32 %v3761, %v3831
        %v3875 = vsub.f32 %v3763, %v3834
        %v3876 = vsub.f32 %v3765, %v3834
        %v3877 = vsub.f32 %v3769, %v3837
        %v3878 = vsub.f32 %v3771, %v3837
        %v3879 = vsub.f32 %v3773, %v3840
        %v3880 = vsub.f32 %v3775, %v3840
        %v3881 = vsub.f32 %v3779, %v3843
        %v3882 = vsub.f32 %v3781, %v3843
        %v3883 = vsub.f32 %v3783, %v3846
        %v3884 = vsub.f32 %v3785, %v3846
        %v3885 = vsub.f32 %v3789, %v3849
        %v3886 = vsub.f32 %v3791, %v3849
        %v3887 = vsub.f32 %v3793, %v3852
        %v3888 = vsub.f32 %v3795, %v3852
        %v3889 = vsub.f32 %v3799, %v3855
        %v3890 = vsub.f32 %v3801, %v3855
        %v3891 = vsub.f32 %v3803, %v3858
        %v3892 = vsub.f32 %v3805, %v3858
        %v3893 = vsub.f32 %v3809, %v3861
        %v3894 = vsub.f32 %v3811, %v3861
        %v3895 = vsub.f32 %v3813, %v3864
        %v3896 = vsub.f32 %v3815, %v3864
        %v3897 = vmul.f32 %v3865, 1.442695
        %v3898 = vpow.pop %v3897
        %v3899 = vmul.f32 %v3866, 1.442695
        %v3900 = vpow.pop %v3899
        %v3901 = vmul.f32 %v3867, 1.442695
        %v3902 = vpow.pop %v3901
        %v3903 = vmul.f32 %v3868, 1.442695
        %v3904 = vpow.pop %v3903
        %v3905 = vmul.f32 %v3869, 1.442695
        %v3906 = vpow.pop %v3905
        %v3907 = vmul.f32 %v3870, 1.442695
        %v3908 = vpow.pop %v3907
        %v3909 = vmul.f32 %v3871, 1.442695
        %v3910 = vpow.pop %v3909
        %v3911 = vmul.f32 %v3872, 1.442695
        %v3912 = vpow.pop %v3911
        %v3913 = vmul.f32 %v3873, 1.442695
        %v3914 = vpow.pop %v3913
        %v3915 = vmul.f32 %v3874, 1.442695
        %v3916 = vpow.pop %v3915
        %v3917 = vmul.f32 %v3875, 1.442695
        %v3918 = vpow.pop %v3917
        %v3919 = vmul.f32 %v3876, 1.442695
        %v3920 = vpow.pop %v3919
        %v3921 = vmul.f32 %v3877, 1.442695
        %v3922 = vpow.pop %v3921
        %v3923 = vmul.f32 %v3878, 1.442695
        %v3924 = vpow.pop %v3923
        %v3925 = vmul.f32 %v3879, 1.442695
        %v3926 = vpow.pop %v3925
        %v3927 = vmul.f32 %v3880, 1.442695
        %v3928 = vpow.pop %v3927
        %v3929 = vmul.f32 %v3881, 1.442695
        %v3930 = vpow.pop %v3929
        %v3931 = vmul.f32 %v3882, 1.442695
        %v3932 = vpow.pop %v3931
        %v3933 = vmul.f32 %v3883, 1.442695
        %v3934 = vpow.pop %v3933
        %v3935 = vmul.f32 %v3884, 1.442695
        %v3936 = vpow.pop %v3935
        %v3937 = vmul.f32 %v3885, 1.442695
        %v3938 = vpow.pop %v3937
        %v3939 = vmul.f32 %v3886, 1.442695
        %v3940 = vpow.pop %v3939
        %v3941 = vmul.f32 %v3887, 1.442695
        %v3942 = vpow.pop %v3941
        %v3943 = vmul.f32 %v3888, 1.442695
        %v3944 = vpow.pop %v3943
        %v3945 = vmul.f32 %v3889, 1.442695
        %v3946 = vpow.pop %v3945
        %v3947 = vmul.f32 %v3890, 1.442695
        %v3948 = vpow.pop %v3947
        %v3949 = vmul.f32 %v3891, 1.442695
        %v3950 = vpow.pop %v3949
        %v3951 = vmul.f32 %v3892, 1.442695
        %v3952 = vpow.pop %v3951
        %v3953 = vmul.f32 %v3893, 1.442695
        %v3954 = vpow.pop %v3953
        %v3955 = vmul.f32 %v3894, 1.442695
        %v3956 = vpow.pop %v3955
        %v3957 = vmul.f32 %v3895, 1.442695
        %v3958 = vpow.pop %v3957
        %v3959 = vmul.f32 %v3896, 1.442695
        %v3960 = vpow.pop %v3959
        %v3961 = vadd.f32 %v3898, %v3900
        %3962 = vadd.xlane.f32.xlu0 %v3961
        %v3963 = vpop.xlane.xlu0 %3962
        %v3964 = vadd.f32 %v3902, %v3904
        %3965 = vadd.xlane.f32.xlu0 %v3964
        %v3966 = vpop.xlane.xlu0 %3965
        %v3967 = vadd.f32 %v3906, %v3908
        %3968 = vadd.xlane.f32.xlu0 %v3967
        %v3969 = vpop.xlane.xlu0 %3968
        %v3970 = vadd.f32 %v3910, %v3912
        %3971 = vadd.xlane.f32.xlu0 %v3970
        %v3972 = vpop.xlane.xlu0 %3971
        %v3973 = vadd.f32 %v3914, %v3916
        %3974 = vadd.xlane.f32.xlu0 %v3973
        %v3975 = vpop.xlane.xlu0 %3974
        %v3976 = vadd.f32 %v3918, %v3920
        %3977 = vadd.xlane.f32.xlu0 %v3976
        %v3978 = vpop.xlane.xlu0 %3977
        %v3979 = vadd.f32 %v3922, %v3924
        %3980 = vadd.xlane.f32.xlu0 %v3979
        %v3981 = vpop.xlane.xlu0 %3980
        %v3982 = vadd.f32 %v3926, %v3928
        %3983 = vadd.xlane.f32.xlu0 %v3982
        %v3984 = vpop.xlane.xlu0 %3983
        %v3985 = vadd.f32 %v3930, %v3932
        %3986 = vadd.xlane.f32.xlu0 %v3985
        %v3987 = vpop.xlane.xlu0 %3986
        %v3988 = vadd.f32 %v3934, %v3936
        %3989 = vadd.xlane.f32.xlu0 %v3988
        %v3990 = vpop.xlane.xlu0 %3989
        %v3991 = vadd.f32 %v3938, %v3940
        %3992 = vadd.xlane.f32.xlu0 %v3991
        %v3993 = vpop.xlane.xlu0 %3992
        %v3994 = vadd.f32 %v3942, %v3944
        %3995 = vadd.xlane.f32.xlu0 %v3994
        %v3996 = vpop.xlane.xlu0 %3995
        %v3997 = vadd.f32 %v3946, %v3948
        %3998 = vadd.xlane.f32.xlu0 %v3997
        %v3999 = vpop.xlane.xlu0 %3998
        %v4000 = vadd.f32 %v3950, %v3952
        %4001 = vadd.xlane.f32.xlu0 %v4000
        %v4002 = vpop.xlane.xlu0 %4001
        %v4003 = vadd.f32 %v3954, %v3956
        %4004 = vadd.xlane.f32.xlu0 %v4003
        %v4005 = vpop.xlane.xlu0 %4004
        %v4006 = vadd.f32 %v3958, %v3960
        %4007 = vadd.xlane.f32.xlu0 %v4006
        %v4008 = vpop.xlane.xlu0 %4007
        %v4009 = vrcp.pop %v3963
        %v4010 = vrcp.pop %v3966
        %v4011 = vrcp.pop %v3969
        %v4012 = vrcp.pop %v3972
        %v4013 = vrcp.pop %v3975
        %v4014 = vrcp.pop %v3978
        %v4015 = vrcp.pop %v3981
        %v4016 = vrcp.pop %v3984
        %v4017 = vrcp.pop %v3987
        %v4018 = vrcp.pop %v3990
        %v4019 = vrcp.pop %v3993
        %v4020 = vrcp.pop %v3996
        %v4021 = vrcp.pop %v3999
        %v4022 = vrcp.pop %v4002
        %v4023 = vrcp.pop %v4005
        %v4024 = vrcp.pop %v4008
        %v4025 = vmul.f32 %v3898, %v4009
        %v4026 = vmul.f32 %v3900, %v4009
        %v4027 = vmul.f32 %v3902, %v4010
        %v4028 = vmul.f32 %v3904, %v4010
        %v4029 = vmul.f32 %v3906, %v4011
        %v4030 = vmul.f32 %v3908, %v4011
        %v4031 = vmul.f32 %v3910, %v4012
        %v4032 = vmul.f32 %v3912, %v4012
        %v4033 = vmul.f32 %v3914, %v4013
        %v4034 = vmul.f32 %v3916, %v4013
        %v4035 = vmul.f32 %v3918, %v4014
        %v4036 = vmul.f32 %v3920, %v4014
        %v4037 = vmul.f32 %v3922, %v4015
        %v4038 = vmul.f32 %v3924, %v4015
        %v4039 = vmul.f32 %v3926, %v4016
        %v4040 = vmul.f32 %v3928, %v4016
        %v4041 = vmul.f32 %v3930, %v4017
        %v4042 = vmul.f32 %v3932, %v4017
        %v4043 = vmul.f32 %v3934, %v4018
        %v4044 = vmul.f32 %v3936, %v4018
        %v4045 = vmul.f32 %v3938, %v4019
        %v4046 = vmul.f32 %v3940, %v4019
        %v4047 = vmul.f32 %v3942, %v4020
        %v4048 = vmul.f32 %v3944, %v4020
        %v4049 = vmul.f32 %v3946, %v4021
        %v4050 = vmul.f32 %v3948, %v4021
        %v4051 = vmul.f32 %v3950, %v4022
        %v4052 = vmul.f32 %v3952, %v4022
        %v4053 = vmul.f32 %v3954, %v4023
        %v4054 = vmul.f32 %v3956, %v4023
        %v4055 = vmul.f32 %v3958, %v4024
        %v4056 = vmul.f32 %v3960, %v4024
        %s4057 = scalar_lea.vmem %s369, 1024 [#allocation11]
        %4058 = vst [vmem:[%s4057] sm:$0xff] %v4025
        %4059 = vst [vmem:[%s4057 + $0x8] sm:$0xff] %v4026
        %4060 = vst [vmem:[%s4057 + $0x10] sm:$0xff] %v4027
        %4061 = vst [vmem:[%s4057 + $0x18] sm:$0xff] %v4028
        %4062 = vst [vmem:[%s4057 + $0x20] sm:$0xff] %v4029
        %4063 = vst [vmem:[%s4057 + $0x28] sm:$0xff] %v4030
        %4064 = vst [vmem:[%s4057 + $0x30] sm:$0xff] %v4031
        %4065 = vst [vmem:[%s4057 + $0x38] sm:$0xff] %v4032
        %4066 = vst [vmem:[%s4057 + $0x40] sm:$0xff] %v4033
        %4067 = vst [vmem:[%s4057 + $0x48] sm:$0xff] %v4034
        %4068 = vst [vmem:[%s4057 + $0x50] sm:$0xff] %v4035
        %4069 = vst [vmem:[%s4057 + $0x58] sm:$0xff] %v4036
        %4070 = vst [vmem:[%s4057 + $0x60] sm:$0xff] %v4037
        %4071 = vst [vmem:[%s4057 + $0x68] sm:$0xff] %v4038
        %4072 = vst [vmem:[%s4057 + $0x70] sm:$0xff] %v4039
        %4073 = vst [vmem:[%s4057 + $0x78] sm:$0xff] %v4040
        %4074 = vst [vmem:[%s4057 + $0x80] sm:$0xff] %v4041
        %4075 = vst [vmem:[%s4057 + $0x88] sm:$0xff] %v4042
        %4076 = vst [vmem:[%s4057 + $0x90] sm:$0xff] %v4043
        %4077 = vst [vmem:[%s4057 + $0x98] sm:$0xff] %v4044
        %4078 = vst [vmem:[%s4057 + $0xa0] sm:$0xff] %v4045
        %4079 = vst [vmem:[%s4057 + $0xa8] sm:$0xff] %v4046
        %4080 = vst [vmem:[%s4057 + $0xb0] sm:$0xff] %v4047
        %4081 = vst [vmem:[%s4057 + $0xb8] sm:$0xff] %v4048
        %4082 = vst [vmem:[%s4057 + $0xc0] sm:$0xff] %v4049
        %4083 = vst [vmem:[%s4057 + $0xc8] sm:$0xff] %v4050
        %4084 = vst [vmem:[%s4057 + $0xd0] sm:$0xff] %v4051
        %4085 = vst [vmem:[%s4057 + $0xd8] sm:$0xff] %v4052
        %4086 = vst [vmem:[%s4057 + $0xe0] sm:$0xff] %v4053
        %4087 = vst [vmem:[%s4057 + $0xe8] sm:$0xff] %v4054
        %4088 = vst [vmem:[%s4057 + $0xf0] sm:$0xff] %v4055
        %4089 = vst [vmem:[%s4057 + $0xf8] sm:$0xff] %v4056
        %s4090 = scalar_lea.vmem [#allocation2], 640
        %v4091 = vld [vmem:[%s4090] sm:$0xff]
        %v4092 = vld [vmem:[%s4090 + $0x8] sm:$0xff]
        %v4093 = vld [vmem:[%s4090 + $0x10] sm:$0xff]
        %v4094 = vld [vmem:[%s4090 + $0x18] sm:$0xff]
        %v4095 = vld [vmem:[%s4090 + $0x20] sm:$0xff]
        %v4096 = vld [vmem:[%s4090 + $0x28] sm:$0xff]
        %v4097 = vld [vmem:[%s4090 + $0x30] sm:$0xff]
        %v4098 = vld [vmem:[%s4090 + $0x38] sm:$0xff]
        %v4099 = vld [vmem:[%s4090 + $0x40] sm:$0xff]
        %v4100 = vld [vmem:[%s4090 + $0x48] sm:$0xff]
        %v4101 = vld [vmem:[%s4090 + $0x50] sm:$0xff]
        %v4102 = vld [vmem:[%s4090 + $0x58] sm:$0xff]
        %v4103 = vld [vmem:[%s4090 + $0x60] sm:$0xff]
        %v4104 = vld [vmem:[%s4090 + $0x68] sm:$0xff]
        %v4105 = vld [vmem:[%s4090 + $0x70] sm:$0xff]
        %v4106 = vld [vmem:[%s4090 + $0x78] sm:$0xff]
        %4115 = vrot.lane.b32.xlu0 %v1646, 64
        %v4116 = vpop.permute.xlu0 %4115
        %4117 = vrot.lane.b32.xlu0 %v1649, 64
        %v4118 = vpop.permute.xlu0 %4117
        %4119 = vrot.lane.b32.xlu0 %v1652, 64
        %v4120 = vpop.permute.xlu0 %4119
        %4121 = vrot.lane.b32.xlu0 %v1655, 64
        %v4122 = vpop.permute.xlu0 %4121
        %4123 = vrot.lane.b32.xlu0 %v1658, 64
        %v4124 = vpop.permute.xlu0 %4123
        %4125 = vrot.lane.b32.xlu0 %v1661, 64
        %v4126 = vpop.permute.xlu0 %4125
        %4127 = vrot.lane.b32.xlu0 %v1664, 64
        %v4128 = vpop.permute.xlu0 %4127
        %4129 = vrot.lane.b32.xlu0 %v1667, 64
        %v4130 = vpop.permute.xlu0 %4129
        %v4132 = vsel %vm1684, %v4116, 0
        %v4135 = vsel %vm1684, %v4118, 0
        %v4138 = vsel %vm1684, %v4120, 0
        %v4141 = vsel %vm1684, %v4122, 0
        %v4144 = vsel %vm1684, %v4124, 0
        %v4147 = vsel %vm1684, %v4126, 0
        %v4150 = vsel %vm1684, %v4128, 0
        %v4153 = vsel %vm1684, %v4130, 0
        %v4156 = vsel %vm1684, %v4091, 0
        %v4159 = vsel %vm1684, %v4092, 0
        %v4162 = vsel %vm1684, %v4093, 0
        %v4165 = vsel %vm1684, %v4094, 0
        %v4168 = vsel %vm1684, %v4095, 0
        %v4171 = vsel %vm1684, %v4096, 0
        %v4174 = vsel %vm1684, %v4097, 0
        %v4177 = vsel %vm1684, %v4098, 0
        %v4180 = vsel %vm1684, %v4099, 0
        %v4183 = vsel %vm1684, %v4100, 0
        %v4186 = vsel %vm1684, %v4101, 0
        %v4189 = vsel %vm1684, %v4102, 0
        %v4192 = vsel %vm1684, %v4103, 0
        %v4195 = vsel %vm1684, %v4104, 0
        %v4198 = vsel %vm1684, %v4105, 0
        %v4201 = vsel %vm1684, %v4106, 0
        %4203 = vmatprep.subr.bf16.mxu0 0
        %4204 = vmatpush1.bf16.xpose.msra.mxu0 %v4156
        %4205 = vmatprep.subr.bf16.mxu0 0
        %4206 = vmatpush1.bf16.xpose.msra.mxu0 %v4159
        %4207 = vmatprep.subr.bf16.mxu0 0
        %4208 = vmatpush1.bf16.xpose.msra.mxu0 %v4162
        %4209 = vmatprep.subr.bf16.mxu0 0
        %4210 = vmatpush1.bf16.xpose.msra.mxu0 %v4165
        %4211 = vmatprep.subr.bf16.mxu0 0
        %4212 = vmatpush1.bf16.xpose.msra.mxu0 %v4168
        %4213 = vmatprep.subr.bf16.mxu0 0
        %4214 = vmatpush1.bf16.xpose.msra.mxu0 %v4171
        %4215 = vmatprep.subr.bf16.mxu0 0
        %4216 = vmatpush1.bf16.xpose.msra.mxu0 %v4174
        %4217 = vmatprep.subr.bf16.mxu0 0
        %4218 = vmatpush1.bf16.xpose.msra.mxu0 %v4177
        %4219 = vmatprep.subr.bf16.mxu0 0
        %4220 = vmatpush1.bf16.xpose.msra.mxu0 %v4180
        %4221 = vmatprep.subr.bf16.mxu0 0
        %4222 = vmatpush1.bf16.xpose.msra.mxu0 %v4183
        %4223 = vmatprep.subr.bf16.mxu0 0
        %4224 = vmatpush1.bf16.xpose.msra.mxu0 %v4186
        %4225 = vmatprep.subr.bf16.mxu0 0
        %4226 = vmatpush1.bf16.xpose.msra.mxu0 %v4189
        %4227 = vmatprep.subr.bf16.mxu0 0
        %4228 = vmatpush1.bf16.xpose.msra.mxu0 %v4192
        %4229 = vmatprep.subr.bf16.mxu0 0
        %4230 = vmatpush1.bf16.xpose.msra.mxu0 %v4195
        %4231 = vmatprep.subr.bf16.mxu0 0
        %4232 = vmatpush1.bf16.xpose.msra.mxu0 %v4198
        %4233 = vmatprep.subr.bf16.mxu0 0
        %4234 = vmatpush1.bf16.xpose.msra.mxu0 %v4201
        %4235 = vmatprep.mubr.bf16.mxu0 0
        %4236 = vmatmul.mubr.bf16.gmra.mrb[0].mxu0 %v4132
        %v4237 = vpop.f32.mrb[0].mxu0
        %v4238 = vadd.f32 0.0, %v4237
        %v4239 = vpop.f32.mrb[0].mxu0
        %v4240 = vadd.f32 0.0, %v4239
        %v4241 = vpop.f32.mrb[0].mxu0
        %v4242 = vadd.f32 0.0, %v4241
        %v4243 = vpop.f32.mrb[0].mxu0
        %v4244 = vadd.f32 0.0, %v4243
        %4245 = vmatprep.mubr.bf16.mxu0 0
        %4246 = vmatmul.mubr.bf16.gmra.mrb[0].mxu0 %v4135
        %v4247 = vpop.f32.mrb[0].mxu0
        %v4248 = vadd.f32 0.0, %v4247
        %v4249 = vpop.f32.mrb[0].mxu0
        %v4250 = vadd.f32 0.0, %v4249
        %v4251 = vpop.f32.mrb[0].mxu0
        %v4252 = vadd.f32 0.0, %v4251
        %v4253 = vpop.f32.mrb[0].mxu0
        %v4254 = vadd.f32 0.0, %v4253
        %4255 = vmatprep.mubr.bf16.mxu0 0
        %4256 = vmatmul.mubr.bf16.gmra.mrb[0].mxu0 %v4138
        %v4257 = vpop.f32.mrb[0].mxu0
        %v4258 = vadd.f32 0.0, %v4257
        %v4259 = vpop.f32.mrb[0].mxu0
        %v4260 = vadd.f32 0.0, %v4259
        %v4261 = vpop.f32.mrb[0].mxu0
        %v4262 = vadd.f32 0.0, %v4261
        %v4263 = vpop.f32.mrb[0].mxu0
        %v4264 = vadd.f32 0.0, %v4263
        %4265 = vmatprep.mubr.bf16.mxu0 0
        %4266 = vmatmul.mubr.bf16.gmra.mrb[0].mxu0 %v4141
        %v4267 = vpop.f32.mrb[0].mxu0
        %v4268 = vadd.f32 0.0, %v4267
        %v4269 = vpop.f32.mrb[0].mxu0
        %v4270 = vadd.f32 0.0, %v4269
        %v4271 = vpop.f32.mrb[0].mxu0
        %v4272 = vadd.f32 0.0, %v4271
        %v4273 = vpop.f32.mrb[0].mxu0
        %v4274 = vadd.f32 0.0, %v4273
        %4275 = vmatprep.mubr.bf16.mxu0 0
        %4276 = vmatmul.mubr.bf16.gmra.mrb[0].mxu0 %v4144
        %v4277 = vpop.f32.mrb[0].mxu0
        %v4278 = vadd.f32 0.0, %v4277
        %v4279 = vpop.f32.mrb[0].mxu0
        %v4280 = vadd.f32 0.0, %v4279
        %v4281 = vpop.f32.mrb[0].mxu0
        %v4282 = vadd.f32 0.0, %v4281
        %v4283 = vpop.f32.mrb[0].mxu0
        %v4284 = vadd.f32 0.0, %v4283
        %4285 = vmatprep.mubr.bf16.mxu0 0
        %4286 = vmatmul.mubr.bf16.gmra.mrb[0].mxu0 %v4147
        %v4287 = vpop.f32.mrb[0].mxu0
        %v4288 = vadd.f32 0.0, %v4287
        %v4289 = vpop.f32.mrb[0].mxu0
        %v4290 = vadd.f32 0.0, %v4289
        %v4291 = vpop.f32.mrb[0].mxu0
        %v4292 = vadd.f32 0.0, %v4291
        %v4293 = vpop.f32.mrb[0].mxu0
        %v4294 = vadd.f32 0.0, %v4293
        %4295 = vmatprep.mubr.bf16.mxu0 0
        %4296 = vmatmul.mubr.bf16.gmra.mrb[0].mxu0 %v4150
        %v4297 = vpop.f32.mrb[0].mxu0
        %v4298 = vadd.f32 0.0, %v4297
        %v4299 = vpop.f32.mrb[0].mxu0
        %v4300 = vadd.f32 0.0, %v4299
        %v4301 = vpop.f32.mrb[0].mxu0
        %v4302 = vadd.f32 0.0, %v4301
        %v4303 = vpop.f32.mrb[0].mxu0
        %v4304 = vadd.f32 0.0, %v4303
        %4305 = vmatprep.mubr.bf16.mxu0 0
        %4306 = vmatmul.mubr.bf16.gmra.mrb[0].mxu0 %v4153
        %v4307 = vpop.f32.mrb[0].mxu0
        %v4308 = vadd.f32 0.0, %v4307
        %v4309 = vpop.f32.mrb[0].mxu0
        %v4310 = vadd.f32 0.0, %v4309
        %v4311 = vpop.f32.mrb[0].mxu0
        %v4312 = vadd.f32 0.0, %v4311
        %v4313 = vpop.f32.mrb[0].mxu0
        %v4314 = vadd.f32 0.0, %v4313
        %4315 = vdwg.mxu0
        %v4316 = vmax.f32 %v4238, %v4240
        %4317 = vmax.xlane.f32.xlu0 %v4316
        %v4318 = vpop.xlane.xlu0 %4317
        %v4319 = vmax.f32 %v4242, %v4244
        %4320 = vmax.xlane.f32.xlu0 %v4319
        %v4321 = vpop.xlane.xlu0 %4320
        %v4322 = vmax.f32 %v4248, %v4250
        %4323 = vmax.xlane.f32.xlu0 %v4322
        %v4324 = vpop.xlane.xlu0 %4323
        %v4325 = vmax.f32 %v4252, %v4254
        %4326 = vmax.xlane.f32.xlu0 %v4325
        %v4327 = vpop.xlane.xlu0 %4326
        %v4328 = vmax.f32 %v4258, %v4260
        %4329 = vmax.xlane.f32.xlu0 %v4328
        %v4330 = vpop.xlane.xlu0 %4329
        %v4331 = vmax.f32 %v4262, %v4264
        %4332 = vmax.xlane.f32.xlu0 %v4331
        %v4333 = vpop.xlane.xlu0 %4332
        %v4334 = vmax.f32 %v4268, %v4270
        %4335 = vmax.xlane.f32.xlu0 %v4334
        %v4336 = vpop.xlane.xlu0 %4335
        %v4337 = vmax.f32 %v4272, %v4274
        %4338 = vmax.xlane.f32.xlu0 %v4337
        %v4339 = vpop.xlane.xlu0 %4338
        %v4340 = vmax.f32 %v4278, %v4280
        %4341 = vmax.xlane.f32.xlu0 %v4340
        %v4342 = vpop.xlane.xlu0 %4341
        %v4343 = vmax.f32 %v4282, %v4284
        %4344 = vmax.xlane.f32.xlu0 %v4343
        %v4345 = vpop.xlane.xlu0 %4344
        %v4346 = vmax.f32 %v4288, %v4290
        %4347 = vmax.xlane.f32.xlu0 %v4346
        %v4348 = vpop.xlane.xlu0 %4347
        %v4349 = vmax.f32 %v4292, %v4294
        %4350 = vmax.xlane.f32.xlu0 %v4349
        %v4351 = vpop.xlane.xlu0 %4350
        %v4352 = vmax.f32 %v4298, %v4300
        %4353 = vmax.xlane.f32.xlu0 %v4352
        %v4354 = vpop.xlane.xlu0 %4353
        %v4355 = vmax.f32 %v4302, %v4304
        %4356 = vmax.xlane.f32.xlu0 %v4355
        %v4357 = vpop.xlane.xlu0 %4356
        %v4358 = vmax.f32 %v4308, %v4310
        %4359 = vmax.xlane.f32.xlu0 %v4358
        %v4360 = vpop.xlane.xlu0 %4359
        %v4361 = vmax.f32 %v4312, %v4314
        %4362 = vmax.xlane.f32.xlu0 %v4361
        %v4363 = vpop.xlane.xlu0 %4362
        %v4364 = vsub.f32 %v4238, %v4318
        %v4365 = vsub.f32 %v4240, %v4318
        %v4366 = vsub.f32 %v4242, %v4321
        %v4367 = vsub.f32 %v4244, %v4321
        %v4368 = vsub.f32 %v4248, %v4324
        %v4369 = vsub.f32 %v4250, %v4324
        %v4370 = vsub.f32 %v4252, %v4327
        %v4371 = vsub.f32 %v4254, %v4327
        %v4372 = vsub.f32 %v4258, %v4330
        %v4373 = vsub.f32 %v4260, %v4330
        %v4374 = vsub.f32 %v4262, %v4333
        %v4375 = vsub.f32 %v4264, %v4333
        %v4376 = vsub.f32 %v4268, %v4336
        %v4377 = vsub.f32 %v4270, %v4336
        %v4378 = vsub.f32 %v4272, %v4339
        %v4379 = vsub.f32 %v4274, %v4339
        %v4380 = vsub.f32 %v4278, %v4342
        %v4381 = vsub.f32 %v4280, %v4342
        %v4382 = vsub.f32 %v4282, %v4345
        %v4383 = vsub.f32 %v4284, %v4345
        %v4384 = vsub.f32 %v4288, %v4348
        %v4385 = vsub.f32 %v4290, %v4348
        %v4386 = vsub.f32 %v4292, %v4351
        %v4387 = vsub.f32 %v4294, %v4351
        %v4388 = vsub.f32 %v4298, %v4354
        %v4389 = vsub.f32 %v4300, %v4354
        %v4390 = vsub.f32 %v4302, %v4357
        %v4391 = vsub.f32 %v4304, %v4357
        %v4392 = vsub.f32 %v4308, %v4360
        %v4393 = vsub.f32 %v4310, %v4360
        %v4394 = vsub.f32 %v4312, %v4363
        %v4395 = vsub.f32 %v4314, %v4363
        %v4396 = vmul.f32 %v4364, 1.442695
        %v4397 = vpow.pop %v4396
        %v4398 = vmul.f32 %v4365, 1.442695
        %v4399 = vpow.pop %v4398
        %v4400 = vmul.f32 %v4366, 1.442695
        %v4401 = vpow.pop %v4400
        %v4402 = vmul.f32 %v4367, 1.442695
        %v4403 = vpow.pop %v4402
        %v4404 = vmul.f32 %v4368, 1.442695
        %v4405 = vpow.pop %v4404
        %v4406 = vmul.f32 %v4369, 1.442695
        %v4407 = vpow.pop %v4406
        %v4408 = vmul.f32 %v4370, 1.442695
        %v4409 = vpow.pop %v4408
        %v4410 = vmul.f32 %v4371, 1.442695
        %v4411 = vpow.pop %v4410
        %v4412 = vmul.f32 %v4372, 1.442695
        %v4413 = vpow.pop %v4412
        %v4414 = vmul.f32 %v4373, 1.442695
        %v4415 = vpow.pop %v4414
        %v4416 = vmul.f32 %v4374, 1.442695
        %v4417 = vpow.pop %v4416
        %v4418 = vmul.f32 %v4375, 1.442695
        %v4419 = vpow.pop %v4418
        %v4420 = vmul.f32 %v4376, 1.442695
        %v4421 = vpow.pop %v4420
        %v4422 = vmul.f32 %v4377, 1.442695
        %v4423 = vpow.pop %v4422
        %v4424 = vmul.f32 %v4378, 1.442695
        %v4425 = vpow.pop %v4424
        %v4426 = vmul.f32 %v4379, 1.442695
        %v4427 = vpow.pop %v4426
        %v4428 = vmul.f32 %v4380, 1.442695
        %v4429 = vpow.pop %v4428
        %v4430 = vmul.f32 %v4381, 1.442695
        %v4431 = vpow.pop %v4430
        %v4432 = vmul.f32 %v4382, 1.442695
        %v4433 = vpow.pop %v4432
        %v4434 = vmul.f32 %v4383, 1.442695
        %v4435 = vpow.pop %v4434
        %v4436 = vmul.f32 %v4384, 1.442695
        %v4437 = vpow.pop %v4436
        %v4438 = vmul.f32 %v4385, 1.442695
        %v4439 = vpow.pop %v4438
        %v4440 = vmul.f32 %v4386, 1.442695
        %v4441 = vpow.pop %v4440
        %v4442 = vmul.f32 %v4387, 1.442695
        %v4443 = vpow.pop %v4442
        %v4444 = vmul.f32 %v4388, 1.442695
        %v4445 = vpow.pop %v4444
        %v4446 = vmul.f32 %v4389, 1.442695
        %v4447 = vpow.pop %v4446
        %v4448 = vmul.f32 %v4390, 1.442695
        %v4449 = vpow.pop %v4448
        %v4450 = vmul.f32 %v4391, 1.442695
        %v4451 = vpow.pop %v4450
        %v4452 = vmul.f32 %v4392, 1.442695
        %v4453 = vpow.pop %v4452
        %v4454 = vmul.f32 %v4393, 1.442695
        %v4455 = vpow.pop %v4454
        %v4456 = vmul.f32 %v4394, 1.442695
        %v4457 = vpow.pop %v4456
        %v4458 = vmul.f32 %v4395, 1.442695
        %v4459 = vpow.pop %v4458
        %v4460 = vadd.f32 %v4397, %v4399
        %4461 = vadd.xlane.f32.xlu0 %v4460
        %v4462 = vpop.xlane.xlu0 %4461
        %v4463 = vadd.f32 %v4401, %v4403
        %4464 = vadd.xlane.f32.xlu0 %v4463
        %v4465 = vpop.xlane.xlu0 %4464
        %v4466 = vadd.f32 %v4405, %v4407
        %4467 = vadd.xlane.f32.xlu0 %v4466
        %v4468 = vpop.xlane.xlu0 %4467
        %v4469 = vadd.f32 %v4409, %v4411
        %4470 = vadd.xlane.f32.xlu0 %v4469
        %v4471 = vpop.xlane.xlu0 %4470
        %v4472 = vadd.f32 %v4413, %v4415
        %4473 = vadd.xlane.f32.xlu0 %v4472
        %v4474 = vpop.xlane.xlu0 %4473
        %v4475 = vadd.f32 %v4417, %v4419
        %4476 = vadd.xlane.f32.xlu0 %v4475
        %v4477 = vpop.xlane.xlu0 %4476
        %v4478 = vadd.f32 %v4421, %v4423
        %4479 = vadd.xlane.f32.xlu0 %v4478
        %v4480 = vpop.xlane.xlu0 %4479
        %v4481 = vadd.f32 %v4425, %v4427
        %4482 = vadd.xlane.f32.xlu0 %v4481
        %v4483 = vpop.xlane.xlu0 %4482
        %v4484 = vadd.f32 %v4429, %v4431
        %4485 = vadd.xlane.f32.xlu0 %v4484
        %v4486 = vpop.xlane.xlu0 %4485
        %v4487 = vadd.f32 %v4433, %v4435
        %4488 = vadd.xlane.f32.xlu0 %v4487
        %v4489 = vpop.xlane.xlu0 %4488
        %v4490 = vadd.f32 %v4437, %v4439
        %4491 = vadd.xlane.f32.xlu0 %v4490
        %v4492 = vpop.xlane.xlu0 %4491
        %v4493 = vadd.f32 %v4441, %v4443
        %4494 = vadd.xlane.f32.xlu0 %v4493
        %v4495 = vpop.xlane.xlu0 %4494
        %v4496 = vadd.f32 %v4445, %v4447
        %4497 = vadd.xlane.f32.xlu0 %v4496
        %v4498 = vpop.xlane.xlu0 %4497
        %v4499 = vadd.f32 %v4449, %v4451
        %4500 = vadd.xlane.f32.xlu0 %v4499
        %v4501 = vpop.xlane.xlu0 %4500
        %v4502 = vadd.f32 %v4453, %v4455
        %4503 = vadd.xlane.f32.xlu0 %v4502
        %v4504 = vpop.xlane.xlu0 %4503
        %v4505 = vadd.f32 %v4457, %v4459
        %4506 = vadd.xlane.f32.xlu0 %v4505
        %v4507 = vpop.xlane.xlu0 %4506
        %v4508 = vrcp.pop %v4462
        %v4509 = vrcp.pop %v4465
        %v4510 = vrcp.pop %v4468
        %v4511 = vrcp.pop %v4471
        %v4512 = vrcp.pop %v4474
        %v4513 = vrcp.pop %v4477
        %v4514 = vrcp.pop %v4480
        %v4515 = vrcp.pop %v4483
        %v4516 = vrcp.pop %v4486
        %v4517 = vrcp.pop %v4489
        %v4518 = vrcp.pop %v4492
        %v4519 = vrcp.pop %v4495
        %v4520 = vrcp.pop %v4498
        %v4521 = vrcp.pop %v4501
        %v4522 = vrcp.pop %v4504
        %v4523 = vrcp.pop %v4507
        %v4524 = vmul.f32 %v4397, %v4508
        %v4525 = vmul.f32 %v4399, %v4508
        %v4526 = vmul.f32 %v4401, %v4509
        %v4527 = vmul.f32 %v4403, %v4509
        %v4528 = vmul.f32 %v4405, %v4510
        %v4529 = vmul.f32 %v4407, %v4510
        %v4530 = vmul.f32 %v4409, %v4511
        %v4531 = vmul.f32 %v4411, %v4511
        %v4532 = vmul.f32 %v4413, %v4512
        %v4533 = vmul.f32 %v4415, %v4512
        %v4534 = vmul.f32 %v4417, %v4513
        %v4535 = vmul.f32 %v4419, %v4513
        %v4536 = vmul.f32 %v4421, %v4514
        %v4537 = vmul.f32 %v4423, %v4514
        %v4538 = vmul.f32 %v4425, %v4515
        %v4539 = vmul.f32 %v4427, %v4515
        %v4540 = vmul.f32 %v4429, %v4516
        %v4541 = vmul.f32 %v4431, %v4516
        %v4542 = vmul.f32 %v4433, %v4517
        %v4543 = vmul.f32 %v4435, %v4517
        %v4544 = vmul.f32 %v4437, %v4518
        %v4545 = vmul.f32 %v4439, %v4518
        %v4546 = vmul.f32 %v4441, %v4519
        %v4547 = vmul.f32 %v4443, %v4519
        %v4548 = vmul.f32 %v4445, %v4520
        %v4549 = vmul.f32 %v4447, %v4520
        %v4550 = vmul.f32 %v4449, %v4521
        %v4551 = vmul.f32 %v4451, %v4521
        %v4552 = vmul.f32 %v4453, %v4522
        %v4553 = vmul.f32 %v4455, %v4522
        %v4554 = vmul.f32 %v4457, %v4523
        %v4555 = vmul.f32 %v4459, %v4523
        %s4556 = scalar_lea.vmem %s369, 1280 [#allocation11]
        %4557 = vst [vmem:[%s4556] sm:$0xff] %v4524
        %4558 = vst [vmem:[%s4556 + $0x8] sm:$0xff] %v4525
        %4559 = vst [vmem:[%s4556 + $0x10] sm:$0xff] %v4526
        %4560 = vst [vmem:[%s4556 + $0x18] sm:$0xff] %v4527
        %4561 = vst [vmem:[%s4556 + $0x20] sm:$0xff] %v4528
        %4562 = vst [vmem:[%s4556 + $0x28] sm:$0xff] %v4529
        %4563 = vst [vmem:[%s4556 + $0x30] sm:$0xff] %v4530
        %4564 = vst [vmem:[%s4556 + $0x38] sm:$0xff] %v4531
        %4565 = vst [vmem:[%s4556 + $0x40] sm:$0xff] %v4532
        %4566 = vst [vmem:[%s4556 + $0x48] sm:$0xff] %v4533
        %4567 = vst [vmem:[%s4556 + $0x50] sm:$0xff] %v4534
        %4568 = vst [vmem:[%s4556 + $0x58] sm:$0xff] %v4535
        %4569 = vst [vmem:[%s4556 + $0x60] sm:$0xff] %v4536
        %4570 = vst [vmem:[%s4556 + $0x68] sm:$0xff] %v4537
        %4571 = vst [vmem:[%s4556 + $0x70] sm:$0xff] %v4538
        %4572 = vst [vmem:[%s4556 + $0x78] sm:$0xff] %v4539
        %4573 = vst [vmem:[%s4556 + $0x80] sm:$0xff] %v4540
        %4574 = vst [vmem:[%s4556 + $0x88] sm:$0xff] %v4541
        %4575 = vst [vmem:[%s4556 + $0x90] sm:$0xff] %v4542
        %4576 = vst [vmem:[%s4556 + $0x98] sm:$0xff] %v4543
        %4577 = vst [vmem:[%s4556 + $0xa0] sm:$0xff] %v4544
        %4578 = vst [vmem:[%s4556 + $0xa8] sm:$0xff] %v4545
        %4579 = vst [vmem:[%s4556 + $0xb0] sm:$0xff] %v4546
        %4580 = vst [vmem:[%s4556 + $0xb8] sm:$0xff] %v4547
        %4581 = vst [vmem:[%s4556 + $0xc0] sm:$0xff] %v4548
        %4582 = vst [vmem:[%s4556 + $0xc8] sm:$0xff] %v4549
        %4583 = vst [vmem:[%s4556 + $0xd0] sm:$0xff] %v4550
        %4584 = vst [vmem:[%s4556 + $0xd8] sm:$0xff] %v4551
        %4585 = vst [vmem:[%s4556 + $0xe0] sm:$0xff] %v4552
        %4586 = vst [vmem:[%s4556 + $0xe8] sm:$0xff] %v4553
        %4587 = vst [vmem:[%s4556 + $0xf0] sm:$0xff] %v4554
        %4588 = vst [vmem:[%s4556 + $0xf8] sm:$0xff] %v4555
        %s4589 = sand.u32 %s175, 1
        %s4590 = scalar_lea.sflag [#allocation5], %s4589
        %s4591 = sand.u32 %s175, 1
        %s4592 = smul.addr %s4591, 1536
        %s4593 = scalar_lea.vmem [#allocation11], %s4592
        // Predicated region
        $region61: #{tpu_custom_call.1} parent=39 // pred_check
          %p4594 = pneg %p185
        $region62: #{tpu_custom_call.1} parent=39 // pred_check_branch
          %4596 = sbr.rel (%p4594) target = $region64
        $region63: #{tpu_custom_call.1} parent=39 // pred_region
          #allocation13 [shape = 'u32[6]{0}', space=smem, size = 0x18, scoped, tag = 'DMA stride descriptor']
          %s4597 = smul.u32 6, %s32
          %s4598 = smul.u32 16, %s33
          %s4600 = ssub.s32 24576, 24576
          %4601 = vsyncadd %s4590, %s4600
          %s4602 = smul.addr %s4598, 2
          %s4603 = smul.addr %s4597, 64
          %s4604 = sadd.s32 %s4602, %s4603
          %s4605 = smul.addr %s4604, 128
          %s4606 = scalar_lea.hbm %s5, %s4605
          %s4608 = sshll.u32 1, 14
          %s4609 = sxor.u32 4294967295, %s4608
          %s4612 = sshll.u32 7, 18
          %s4613 = sxor.u32 4294967295, %s4612
          %s4614 = sand.u32 0, %s4613
          %s4616 = sor.u32 %s4614, 0
          %s4618 = sshll.u32 3, 24
          %s4619 = sxor.u32 4294967295, %s4618
          %s4620 = sand.u32 %s4616, %s4619
          %s4622 = sor.u32 %s4620, 0
          %s4623 = sshll.u32 %s4593, 4
          %s4624 = int_to_ptr.vmem [resolvable:$true] %s4623
          %4630 = sst [smem:[#allocation13]] 4096
          %s4631 = scalar_lea.smem [#allocation13], 1
          %4632 = sst [smem:[%s4631]] 8192
          %s4633 = scalar_lea.smem [#allocation13], 2
          %4634 = sst [smem:[%s4633]] 16
          %s4635 = scalar_lea.smem [#allocation13], 3
          %4636 = sst [smem:[%s4635]] 256
          %s4637 = scalar_lea.smem [#allocation13], 4
          %4638 = sst [smem:[%s4637]] 256
          %s4639 = scalar_lea.smem [#allocation13], 5
          %4640 = sst [smem:[%s4639]] 16
          %4642 = dma.general %s4624, 24576, %s4606, %s4590, [#allocation12], [#allocation13], %s4622, 0
        $region64: #{tpu_custom_call.1} parent=39 // pred_fallthru
          _
      $region40: #{tpu_custom_call.1} parent=5 // pred_fallthru
        _
      %p4643 = scmp.le.s32.totalorder 2, %s23
      // Predicated region
      $region65: #{tpu_custom_call.1} parent=5 // pred_check
        %p4644 = pneg %p4643
      $region66: #{tpu_custom_call.1} parent=5 // pred_check_branch
        %4646 = sbr.rel (%p4644) target = $region68
      $region67: #{tpu_custom_call.1} parent=5 // pred_region
        %s4647 = ssub.s32 %s23, 2
        // Predicated region
        $region69: #{tpu_custom_call.1} parent=67 // pred_check
          %p4648 = pneg %p191
        $region70: #{tpu_custom_call.1} parent=67 // pred_check_branch
          %4650 = sbr.rel (%p4648) target = $region72
        $region71: #{tpu_custom_call.1} parent=67 // pred_region
          %s4651 = sand.u32 %s176, 1
          %s4652 = scalar_lea.sflag [#allocation5], %s4651
          %s4653 = sand.u32 %s176, 1
          %s4654 = smul.addr %s4653, 1536
          %s4655 = scalar_lea.vmem [#allocation11], %s4654
          %4656 = dma.done %s4652, 24576
        $region72: #{tpu_custom_call.1} parent=67 // pred_fallthru
          _
      $region68: #{tpu_custom_call.1} parent=5 // pred_fallthru
        _
    $region6: #{tpu_custom_call.1} parent=1 // loop_footer
      %s27 = sadd.s32 1, %s23
    $region7: #{tpu_custom_call.1} parent=1 // loop_footer_branch
      %22 = sbr.rel target = $region3
    $region8: #{tpu_custom_call.1} parent=1 // loop_exit
      _
    %4657 = vsyncpa [#allocation4], 1
    %s4658 = scalar_lea.sflag [#allocation4], 1
    %4659 = vsyncpa %s4658, 1
    %4660 = vsyncpa [#allocation7], 1
    %s4661 = scalar_lea.sflag [#allocation7], 1
    %4662 = vsyncpa %s4661, 1
    %4663 = vsyncpa [#allocation10], 1
    %s4664 = scalar_lea.sflag [#allocation10], 1
    %4665 = vsyncpa %s4664, 1
    %4666 = vsyncpa [#allocation5], 1
    %s4667 = scalar_lea.sflag [#allocation5], 1
    %4668 = vsyncpa %s4667, 1

</llo_original>
